<compile_context>
chip_gen: v6e
topology: v6e:2x2x1
jax: 0.10.0
libtpu: 0.0.40
codegen_flags: <defaults>
</compile_context>

<pallas_src>
import jax
import jax.numpy as jnp
from jax.experimental import pallas as pl
from jax.experimental.pallas import tpu as pltpu


def _tf_kernel(x_ref,
               wqkv1_ref, bqkv1_ref, w11_ref, b11_ref, w21_ref, b21_ref,
               wqkv2_ref, bqkv2_ref, w12_ref, b12_ref, w22_ref, b22_ref,
               out_ref):
    """Both `kaggle` blocks fused; intermediates stay in vregs/VMEM."""

    def block(x, wqkv_ref, bqkv_ref, w1_ref, b1_ref, w2_ref, b2_ref,
              residual_out):
        f = x.shape[1]
        stride = wqkv_ref.shape[1] // 3          # lane-padded projection width

        # Fused q|k|v projection: one MXU matmul (bf16 operands, f32 accum).
        qkv = jnp.dot(x.astype(jnp.bfloat16), wqkv_ref[...],
                      preferred_element_type=jnp.float32) + bqkv_ref[...]
        # Tile-aligned slices (offsets 0 / 128 / 256): no lane rotates.
        q = qkv[:, 0:f]
        k = qkv[:, stride:stride + f]
        v = qkv[:, 2 * stride:2 * stride + f]

        # s[b,i,j] = q[b,i] * k[b,j].  Its row-max over j is exactly
        # q*max(k) (q >= 0) or q*min(k) (q < 0) -> avoid the (B,F,F) reduce.
        k_max = jnp.max(k, axis=-1, keepdims=True)         # (B, 1)
        k_min = jnp.min(k, axis=-1, keepdims=True)         # (B, 1)
        s_max = jnp.maximum(q * k_max, q * k_min)          # (B, F) == rowmax(s)

        s = q[:, :, None] * k[:, None, :]                  # (B, F, F)
        p = jnp.exp(s - s_max[:, :, None])                 # EUP, f32

        # Un-normalized attention output and softmax denominator from ONE
        # batched f32 MXU contraction against [v | 1]  (review #2).
        vv = jnp.concatenate(
            [v[:, :, None], jnp.ones_like(v)[:, :, None]], axis=-1)  # (B,F,2)
        nd = jnp.einsum("bij,bjc->bic", p, vv,
                        preferred_element_type=jnp.float32)          # (B,F,2)
        y = nd[..., 0] / nd[..., 1]       # exact divide on B*F elems (cheap)
        xa = y + x                                          # residual 1 (f32)

        h = jnp.dot(xa.astype(jnp.bfloat16), w1_ref[...],
                    preferred_element_type=jnp.float32) + b1_ref[...]
        h = jnp.maximum(h, 0.0)                             # ReLU (TF act_layer)
        o = jnp.dot(h.astype(jnp.bfloat16), w2_ref[...],
                    preferred_element_type=jnp.float32) + b2_ref[...]
        o = jnp.maximum(o, 0.0)
        if residual_out:                                    # pred == False branch
            o = o + xa
        return o

    x = x_ref[...]                                          # (TB, F) f32
    y1 = block(x, wqkv1_ref, bqkv1_ref, w11_ref, b11_ref, w21_ref, b21_ref,
               residual_out=True)       # Block1: pred=False
    y2 = block(y1, wqkv2_ref, bqkv2_ref, w12_ref, b12_ref, w22_ref, b22_ref,
               residual_out=False)      # Block2: pred=True
    out_ref[...] = y2                   # (TB, 256): lane-dense, unmasked stores


def _block_cost(b, f, h, out, qkv_cols):
    flops = 2 * b * f * qkv_cols            # fused qkv matmul (padded cols)
    flops += 8 * b * f * f                  # outer product, sub, nd contraction
    flops += 2 * b * f * h + b * h          # fc1 + bias
    flops += 2 * b * h * out + b * out      # fc2 + bias
    transcendentals = b * f * f             # exp
    return flops, transcendentals


def tf_forward(x, p1, p2):
    b, f = x.shape
    out_dim = p2["w2"].shape[1]

    # Batch grid: amortizes the (dominant) weight DMA over many row blocks per
    # call and shards across TensorCores when b is large; grid=(1,) at small b.
    row_block = min(b, 128)
    nb = pl.cdiv(b, row_block)
    b_pad = nb * row_block
    x_in = jnp.pad(x, ((0, b_pad - b), (0, 0))) if b_pad != b else x

    weights = (p1["wqkv"], p1["bqkv"], p1["w1"], p1["b1"], p1["w2"], p1["b2"],
               p2["wqkv"], p2["bqkv"], p2["w1"], p2["b1"], p2["w2"], p2["b2"])

    x_spec = pl.BlockSpec((row_block, f), lambda i: (i, 0))
    out_spec = pl.BlockSpec((row_block, out_dim), lambda i: (i, 0))
    w_specs = [pl.BlockSpec(w.shape, lambda i: (0, 0)) for w in weights]

    fl1, t1 = _block_cost(b_pad, f, p1["w1"].shape[1], p1["w2"].shape[1],
                          p1["wqkv"].shape[1])
    fl2, t2 = _block_cost(b_pad, f, p2["w1"].shape[1], out_dim,
                          p2["wqkv"].shape[1])
    bytes_accessed = int(x_in.size) * 4 + b_pad * out_dim * 4
    bytes_accessed += sum(int(w.size) * w.dtype.itemsize for w in weights)

    out = pl.pallas_call(
        _tf_kernel,
        out_shape=jax.ShapeDtypeStruct((b_pad, out_dim), jnp.float32),
        grid=(nb,),
        in_specs=[x_spec] + w_specs,
        out_specs=out_spec,
        compiler_params=pltpu.CompilerParams(
            dimension_semantics=("parallel",)),
        cost_estimate=pl.CostEstimate(flops=fl1 + fl2,
                                      transcendentals=t1 + t2,
                                      bytes_accessed=bytes_accessed),
    )(x_in, *weights)
    return out[:b] if b_pad != b else out


tf_forward_jit = jax.jit(tf_forward)


def init_block_params(key, in_features, hidden_features, out_features):
    """torch.nn.Linear-style init; weights stored pre-transposed (in, out).

    q|k|v weights are concatenated into one (F, 3*ceil128(F)) matrix with each
    projection padded to a 128-lane boundary (zero columns) so in-kernel q/k/v
    slices are lane-tile aligned.  Matmul weights are stored as bf16 (halves
    DMA bytes, native MXU path); biases stay f32.
    """
    ks = jax.random.split(key, 10)

    def lin(kw, kb, fan_in, fan_out):
        s = fan_in ** -0.5
        w = jax.random.uniform(kw, (fan_in, fan_out), jnp.float32, -s, s)
        b = jax.random.uniform(kb, (1, fan_out), jnp.float32, -s, s)
        return w, b

    wq, bq = lin(ks[0], ks[1], in_features, in_features)
    wk, bk = lin(ks[2], ks[3], in_features, in_features)
    wv, bv = lin(ks[4], ks[5], in_features, in_features)
    w1, b1 = lin(ks[6], ks[7], in_features, hidden_features)
    w2, b2 = lin(ks[8], ks[9], hidden_features, out_features)

    stride = ((in_features + 127) // 128) * 128      # lane-tile aligned width

    def pad_cols(a):
        return jnp.pad(a, ((0, 0), (0, stride - in_features)))

    wqkv = jnp.concatenate([pad_cols(wq), pad_cols(wk), pad_cols(wv)], axis=1)
    bqkv = jnp.concatenate([pad_cols(bq), pad_cols(bk), pad_cols(bv)], axis=1)

    return dict(
        wqkv=wqkv.astype(jnp.bfloat16),
        bqkv=bqkv,
        w1=w1.astype(jnp.bfloat16), b1=b1,
        w2=w2.astype(jnp.bfloat16), b2=b2)


# --- pure-JAX reference (mirrors the torch forward; same bf16-operand /
#     f32-accumulate matmul numerics as the kernel) ---
def _mm(a, w):
    return jnp.dot(a.astype(jnp.bfloat16), w, preferred_element_type=jnp.float32)


def _ref_block(x, p, residual_out):
    f = x.shape[1]
    stride = p["wqkv"].shape[1] // 3
    qkv = _mm(x, p["wqkv"]) + p["bqkv"][0]
    q = qkv[:, 0:f]
    k = qkv[:, stride:stride + f]
    v = qkv[:, 2 * stride:2 * stride + f]
    s = q[:, :, None] * k[:, None, :]
    attn = jax.nn.softmax(s, axis=-1)
    y = jnp.einsum("bij,bj->bi", attn, v)
    xa = y + x
    h = jnp.maximum(_mm(xa, p["w1"]) + p["b1"][0], 0.0)
    o = jnp.maximum(_mm(h, p["w2"]) + p["b2"][0], 0.0)
    if residual_out:
        o = o + xa
    return o


def _ref_tf(x, p1, p2):
    return _ref_block(_ref_block(x, p1, True), p2, False)


if __name__ == "__main__":
    B, F, H = 8, 32, 512      # batch, in_features, hidden_features (TF default)
    key = jax.random.PRNGKey(0)
    kx, k1, k2 = jax.random.split(key, 3)

    x = jax.random.normal(kx, (B, F), jnp.float32)
    params1 = init_block_params(k1, F, H, F)      # Block1 (pred=False)
    params2 = init_block_params(k2, F, H, 256)    # Block2 (pred=True)

    out = tf_forward_jit(x, params1, params2)
    out = jax.block_until_ready(out)

    ref = _ref_tf(x, params1, params2)
    assert out.shape == (B, 256), out.shape
    max_err = float(jnp.max(jnp.abs(out - ref)))
    assert jnp.allclose(out, ref, atol=1e-3, rtol=1e-3), max_err

    print("KERNEL_OK")
</pallas_src>

<mosaic_0001>
module attributes {stable_mosaic.version = 11 : i64} {
  func.func @_tf_kernel(%arg0: i32, %arg1: memref<8x32xf32, #tpu.memory_space<vmem>>, %arg2: memref<32x384xbf16, #tpu.memory_space<vmem>>, %arg3: memref<1x384xf32, #tpu.memory_space<vmem>>, %arg4: memref<32x512xbf16, #tpu.memory_space<vmem>>, %arg5: memref<1x512xf32, #tpu.memory_space<vmem>>, %arg6: memref<512x32xbf16, #tpu.memory_space<vmem>>, %arg7: memref<1x32xf32, #tpu.memory_space<vmem>>, %arg8: memref<32x384xbf16, #tpu.memory_space<vmem>>, %arg9: memref<1x384xf32, #tpu.memory_space<vmem>>, %arg10: memref<32x512xbf16, #tpu.memory_space<vmem>>, %arg11: memref<1x512xf32, #tpu.memory_space<vmem>>, %arg12: memref<512x256xbf16, #tpu.memory_space<vmem>>, %arg13: memref<1x256xf32, #tpu.memory_space<vmem>>, %arg14: memref<8x256xf32, #tpu.memory_space<vmem>>) attributes {dimension_semantics = [#tpu.dimension_semantics<parallel>], iteration_bounds = array<i64: 1>, scalar_prefetch = 0 : i64, scratch_operands = 0 : i64, tpu.core_type = #tpu.core_type<tc>, window_params = [{transform_indices = @transform_0, window_bounds = array<i64: 8, 32>}, {pipeline_mode = #tpu.pipeline_mode<synchronous>, transform_indices = @transform_1, window_bounds = array<i64: 32, 384>}, {pipeline_mode = #tpu.pipeline_mode<synchronous>, transform_indices = @transform_2, window_bounds = array<i64: 1, 384>}, {pipeline_mode = #tpu.pipeline_mode<synchronous>, transform_indices = @transform_3, window_bounds = array<i64: 32, 512>}, {pipeline_mode = #tpu.pipeline_mode<synchronous>, transform_indices = @transform_4, window_bounds = array<i64: 1, 512>}, {pipeline_mode = #tpu.pipeline_mode<synchronous>, transform_indices = @transform_5, window_bounds = array<i64: 512, 32>}, {pipeline_mode = #tpu.pipeline_mode<synchronous>, transform_indices = @transform_6, window_bounds = array<i64: 1, 32>}, {pipeline_mode = #tpu.pipeline_mode<synchronous>, transform_indices = @transform_7, window_bounds = array<i64: 32, 384>}, {pipeline_mode = #tpu.pipeline_mode<synchronous>, transform_indices = @transform_8, window_bounds = array<i64: 1, 384>}, {pipeline_mode = #tpu.pipeline_mode<synchronous>, transform_indices = @transform_9, window_bounds = array<i64: 32, 512>}, {pipeline_mode = #tpu.pipeline_mode<synchronous>, transform_indices = @transform_10, window_bounds = array<i64: 1, 512>}, {pipeline_mode = #tpu.pipeline_mode<synchronous>, transform_indices = @transform_11, window_bounds = array<i64: 512, 256>}, {pipeline_mode = #tpu.pipeline_mode<synchronous>, transform_indices = @transform_12, window_bounds = array<i64: 1, 256>}, {transform_indices = @transform_13, window_bounds = array<i64: 8, 256>}]} {
    %c0 = arith.constant 0 : index
    %c0_0 = arith.constant 0 : index
    %0 = vector.load %arg1[%c0, %c0_0] : memref<8x32xf32, #tpu.memory_space<vmem>>, vector<8x32xf32>
    %1 = arith.truncf %0 : vector<8x32xf32> to vector<8x32xbf16>
    %c0_1 = arith.constant 0 : index
    %c0_2 = arith.constant 0 : index
    %2 = vector.load %arg2[%c0_1, %c0_2] : memref<32x384xbf16, #tpu.memory_space<vmem>>, vector<32x384xbf16>
    %cst = arith.constant dense<0.000000e+00> : vector<8x384xf32>
    %3 = tpu.matmul %1, %2, %cst {dimension_numbers = #tpu.dot_dimension_numbers<[1], [0], [0], [1], [0, 0, 1, 1], [], []>} : vector<8x32xbf16>, vector<32x384xbf16>, vector<8x384xf32> -> vector<8x384xf32>
    %c0_3 = arith.constant 0 : index
    %c0_4 = arith.constant 0 : index
    %4 = vector.load %arg3[%c0_3, %c0_4] : memref<1x384xf32, #tpu.memory_space<vmem>>, vector<1x384xf32>
    %5 = vector.broadcast %4 : vector<1x384xf32> to vector<8x384xf32>
    %6 = arith.addf %3, %5 : vector<8x384xf32>
    %7 = vector.extract_strided_slice %6 {offsets = [0, 0], sizes = [8, 32], strides = [1, 1]} : vector<8x384xf32> to vector<8x32xf32>
    %8 = vector.extract_strided_slice %6 {offsets = [0, 128], sizes = [8, 32], strides = [1, 1]} : vector<8x384xf32> to vector<8x32xf32>
    %9 = vector.extract_strided_slice %6 {offsets = [0, 256], sizes = [8, 32], strides = [1, 1]} : vector<8x384xf32> to vector<8x32xf32>
    %cst_5 = arith.constant dense<0xFF800000> : vector<8xf32>
    %10 = vector.multi_reduction <maximumf>, %8, %cst_5 [1] : vector<8x32xf32> to vector<8xf32>
    %11 = vector.shape_cast %10 : vector<8xf32> to vector<8x1xf32>
    %cst_6 = arith.constant dense<0x7F800000> : vector<8xf32>
    %12 = vector.multi_reduction <minimumf>, %8, %cst_6 [1] : vector<8x32xf32> to vector<8xf32>
    %13 = vector.shape_cast %12 : vector<8xf32> to vector<8x1xf32>
    %14 = vector.broadcast %11 : vector<8x1xf32> to vector<8x32xf32>
    %15 = arith.mulf %7, %14 : vector<8x32xf32>
    %16 = vector.broadcast %13 : vector<8x1xf32> to vector<8x32xf32>
    %17 = arith.mulf %7, %16 : vector<8x32xf32>
    %18 = arith.maximumf %15, %17 : vector<8x32xf32>
    %19 = vector.shape_cast %7 : vector<8x32xf32> to vector<8x32x1xf32>
    %20 = vector.shape_cast %8 : vector<8x32xf32> to vector<8x1x32xf32>
    %21 = vector.broadcast %19 : vector<8x32x1xf32> to vector<8x32x32xf32>
    %22 = vector.broadcast %20 : vector<8x1x32xf32> to vector<8x32x32xf32>
    %23 = arith.mulf %21, %22 : vector<8x32x32xf32>
    %24 = vector.shape_cast %18 : vector<8x32xf32> to vector<8x32x1xf32>
    %25 = vector.broadcast %24 : vector<8x32x1xf32> to vector<8x32x32xf32>
    %26 = arith.subf %23, %25 : vector<8x32x32xf32>
    %27 = math.exp %26 : vector<8x32x32xf32>
    %28 = vector.shape_cast %9 : vector<8x32xf32> to vector<8x32x1xf32>
    %cst_7 = arith.constant 1.000000e+00 : f32
    %29 = vector.broadcast %cst_7 : f32 to vector<8x32xf32>
    %30 = vector.shape_cast %29 : vector<8x32xf32> to vector<8x32x1xf32>
    %31 = tpu.concatenate %28, %30 in 2 : vector<8x32x1xf32>, vector<8x32x1xf32> -> vector<8x32x2xf32>
    "tpu.trace_start"() <{level = 10 : i32, message = "bij,bjc->bic"}> : () -> ()
    %cst_8 = arith.constant dense<0.000000e+00> : vector<8x32x2xf32>
    %32 = tpu.matmul %27, %31, %cst_8 {dimension_numbers = #tpu.dot_dimension_numbers<[2], [1], [1], [2], [0, 0, 0, 1, 1, 2], [0], [0]>} : vector<8x32x32xf32>, vector<8x32x2xf32>, vector<8x32x2xf32> -> vector<8x32x2xf32>
    "tpu.trace_stop"() : () -> ()
    %33 = vector.extract_strided_slice %32 {offsets = [0, 0, 0], sizes = [8, 32, 1], strides = [1, 1, 1]} : vector<8x32x2xf32> to vector<8x32x1xf32>
    %34 = vector.shape_cast %33 : vector<8x32x1xf32> to vector<8x32xf32>
    %35 = vector.extract_strided_slice %32 {offsets = [0, 0, 1], sizes = [8, 32, 1], strides = [1, 1, 1]} : vector<8x32x2xf32> to vector<8x32x1xf32>
    %36 = vector.shape_cast %35 : vector<8x32x1xf32> to vector<8x32xf32>
    %37 = arith.divf %34, %36 : vector<8x32xf32>
    %38 = arith.addf %37, %0 : vector<8x32xf32>
    %39 = arith.truncf %38 : vector<8x32xf32> to vector<8x32xbf16>
    %c0_9 = arith.constant 0 : index
    %c0_10 = arith.constant 0 : index
    %40 = vector.load %arg4[%c0_9, %c0_10] : memref<32x512xbf16, #tpu.memory_space<vmem>>, vector<32x512xbf16>
    %cst_11 = arith.constant dense<0.000000e+00> : vector<8x512xf32>
    %41 = tpu.matmul %39, %40, %cst_11 {dimension_numbers = #tpu.dot_dimension_numbers<[1], [0], [0], [1], [0, 0, 1, 1], [], []>} : vector<8x32xbf16>, vector<32x512xbf16>, vector<8x512xf32> -> vector<8x512xf32>
    %c0_12 = arith.constant 0 : index
    %c0_13 = arith.constant 0 : index
    %42 = vector.load %arg5[%c0_12, %c0_13] : memref<1x512xf32, #tpu.memory_space<vmem>>, vector<1x512xf32>
    %43 = vector.broadcast %42 : vector<1x512xf32> to vector<8x512xf32>
    %44 = arith.addf %41, %43 : vector<8x512xf32>
    %cst_14 = arith.constant 0.000000e+00 : f32
    %45 = vector.broadcast %cst_14 : f32 to vector<8x512xf32>
    %46 = arith.maximumf %44, %45 : vector<8x512xf32>
    %47 = arith.truncf %46 : vector<8x512xf32> to vector<8x512xbf16>
    %c0_15 = arith.constant 0 : index
    %c0_16 = arith.constant 0 : index
    %48 = vector.load %arg6[%c0_15, %c0_16] : memref<512x32xbf16, #tpu.memory_space<vmem>>, vector<512x32xbf16>
    %cst_17 = arith.constant dense<0.000000e+00> : vector<8x32xf32>
    %49 = tpu.matmul %47, %48, %cst_17 {dimension_numbers = #tpu.dot_dimension_numbers<[1], [0], [0], [1], [0, 0, 1, 1], [], []>} : vector<8x512xbf16>, vector<512x32xbf16>, vector<8x32xf32> -> vector<8x32xf32>
    %c0_18 = arith.constant 0 : index
    %c0_19 = arith.constant 0 : index
    %50 = vector.load %arg7[%c0_18, %c0_19] : memref<1x32xf32, #tpu.memory_space<vmem>>, vector<1x32xf32>
    %51 = vector.broadcast %50 : vector<1x32xf32> to vector<8x32xf32>
    %52 = arith.addf %49, %51 : vector<8x32xf32>
    %cst_20 = arith.constant 0.000000e+00 : f32
    %53 = vector.broadcast %cst_20 : f32 to vector<8x32xf32>
    %54 = arith.maximumf %52, %53 : vector<8x32xf32>
    %55 = arith.addf %54, %38 : vector<8x32xf32>
    %56 = arith.truncf %55 : vector<8x32xf32> to vector<8x32xbf16>
    %c0_21 = arith.constant 0 : index
    %c0_22 = arith.constant 0 : index
    %57 = vector.load %arg8[%c0_21, %c0_22] : memref<32x384xbf16, #tpu.memory_space<vmem>>, vector<32x384xbf16>
    %cst_23 = arith.constant dense<0.000000e+00> : vector<8x384xf32>
    %58 = tpu.matmul %56, %57, %cst_23 {dimension_numbers = #tpu.dot_dimension_numbers<[1], [0], [0], [1], [0, 0, 1, 1], [], []>} : vector<8x32xbf16>, vector<32x384xbf16>, vector<8x384xf32> -> vector<8x384xf32>
    %c0_24 = arith.constant 0 : index
    %c0_25 = arith.constant 0 : index
    %59 = vector.load %arg9[%c0_24, %c0_25] : memref<1x384xf32, #tpu.memory_space<vmem>>, vector<1x384xf32>
    %60 = vector.broadcast %59 : vector<1x384xf32> to vector<8x384xf32>
    %61 = arith.addf %58, %60 : vector<8x384xf32>
    %62 = vector.extract_strided_slice %61 {offsets = [0, 0], sizes = [8, 32], strides = [1, 1]} : vector<8x384xf32> to vector<8x32xf32>
    %63 = vector.extract_strided_slice %61 {offsets = [0, 128], sizes = [8, 32], strides = [1, 1]} : vector<8x384xf32> to vector<8x32xf32>
    %64 = vector.extract_strided_slice %61 {offsets = [0, 256], sizes = [8, 32], strides = [1, 1]} : vector<8x384xf32> to vector<8x32xf32>
    %cst_26 = arith.constant dense<0xFF800000> : vector<8xf32>
    %65 = vector.multi_reduction <maximumf>, %63, %cst_26 [1] : vector<8x32xf32> to vector<8xf32>
    %66 = vector.shape_cast %65 : vector<8xf32> to vector<8x1xf32>
    %cst_27 = arith.constant dense<0x7F800000> : vector<8xf32>
    %67 = vector.multi_reduction <minimumf>, %63, %cst_27 [1] : vector<8x32xf32> to vector<8xf32>
    %68 = vector.shape_cast %67 : vector<8xf32> to vector<8x1xf32>
    %69 = vector.broadcast %66 : vector<8x1xf32> to vector<8x32xf32>
    %70 = arith.mulf %62, %69 : vector<8x32xf32>
    %71 = vector.broadcast %68 : vector<8x1xf32> to vector<8x32xf32>
    %72 = arith.mulf %62, %71 : vector<8x32xf32>
    %73 = arith.maximumf %70, %72 : vector<8x32xf32>
    %74 = vector.shape_cast %62 : vector<8x32xf32> to vector<8x32x1xf32>
    %75 = vector.shape_cast %63 : vector<8x32xf32> to vector<8x1x32xf32>
    %76 = vector.broadcast %74 : vector<8x32x1xf32> to vector<8x32x32xf32>
    %77 = vector.broadcast %75 : vector<8x1x32xf32> to vector<8x32x32xf32>
    %78 = arith.mulf %76, %77 : vector<8x32x32xf32>
    %79 = vector.shape_cast %73 : vector<8x32xf32> to vector<8x32x1xf32>
    %80 = vector.broadcast %79 : vector<8x32x1xf32> to vector<8x32x32xf32>
    %81 = arith.subf %78, %80 : vector<8x32x32xf32>
    %82 = math.exp %81 : vector<8x32x32xf32>
    %83 = vector.shape_cast %64 : vector<8x32xf32> to vector<8x32x1xf32>
    %cst_28 = arith.constant 1.000000e+00 : f32
    %84 = vector.broadcast %cst_28 : f32 to vector<8x32xf32>
    %85 = vector.shape_cast %84 : vector<8x32xf32> to vector<8x32x1xf32>
    %86 = tpu.concatenate %83, %85 in 2 : vector<8x32x1xf32>, vector<8x32x1xf32> -> vector<8x32x2xf32>
    "tpu.trace_start"() <{level = 10 : i32, message = "bij,bjc->bic"}> : () -> ()
    %cst_29 = arith.constant dense<0.000000e+00> : vector<8x32x2xf32>
    %87 = tpu.matmul %82, %86, %cst_29 {dimension_numbers = #tpu.dot_dimension_numbers<[2], [1], [1], [2], [0, 0, 0, 1, 1, 2], [0], [0]>} : vector<8x32x32xf32>, vector<8x32x2xf32>, vector<8x32x2xf32> -> vector<8x32x2xf32>
    "tpu.trace_stop"() : () -> ()
    %88 = vector.extract_strided_slice %87 {offsets = [0, 0, 0], sizes = [8, 32, 1], strides = [1, 1, 1]} : vector<8x32x2xf32> to vector<8x32x1xf32>
    %89 = vector.shape_cast %88 : vector<8x32x1xf32> to vector<8x32xf32>
    %90 = vector.extract_strided_slice %87 {offsets = [0, 0, 1], sizes = [8, 32, 1], strides = [1, 1, 1]} : vector<8x32x2xf32> to vector<8x32x1xf32>
    %91 = vector.shape_cast %90 : vector<8x32x1xf32> to vector<8x32xf32>
    %92 = arith.divf %89, %91 : vector<8x32xf32>
    %93 = arith.addf %92, %55 : vector<8x32xf32>
    %94 = arith.truncf %93 : vector<8x32xf32> to vector<8x32xbf16>
    %c0_30 = arith.constant 0 : index
    %c0_31 = arith.constant 0 : index
    %95 = vector.load %arg10[%c0_30, %c0_31] : memref<32x512xbf16, #tpu.memory_space<vmem>>, vector<32x512xbf16>
    %cst_32 = arith.constant dense<0.000000e+00> : vector<8x512xf32>
    %96 = tpu.matmul %94, %95, %cst_32 {dimension_numbers = #tpu.dot_dimension_numbers<[1], [0], [0], [1], [0, 0, 1, 1], [], []>} : vector<8x32xbf16>, vector<32x512xbf16>, vector<8x512xf32> -> vector<8x512xf32>
    %c0_33 = arith.constant 0 : index
    %c0_34 = arith.constant 0 : index
    %97 = vector.load %arg11[%c0_33, %c0_34] : memref<1x512xf32, #tpu.memory_space<vmem>>, vector<1x512xf32>
    %98 = vector.broadcast %97 : vector<1x512xf32> to vector<8x512xf32>
    %99 = arith.addf %96, %98 : vector<8x512xf32>
    %cst_35 = arith.constant 0.000000e+00 : f32
    %100 = vector.broadcast %cst_35 : f32 to vector<8x512xf32>
    %101 = arith.maximumf %99, %100 : vector<8x512xf32>
    %102 = arith.truncf %101 : vector<8x512xf32> to vector<8x512xbf16>
    %c0_36 = arith.constant 0 : index
    %c0_37 = arith.constant 0 : index
    %103 = vector.load %arg12[%c0_36, %c0_37] : memref<512x256xbf16, #tpu.memory_space<vmem>>, vector<512x256xbf16>
    %cst_38 = arith.constant dense<0.000000e+00> : vector<8x256xf32>
    %104 = tpu.matmul %102, %103, %cst_38 {dimension_numbers = #tpu.dot_dimension_numbers<[1], [0], [0], [1], [0, 0, 1, 1], [], []>} : vector<8x512xbf16>, vector<512x256xbf16>, vector<8x256xf32> -> vector<8x256xf32>
    %c0_39 = arith.constant 0 : index
    %c0_40 = arith.constant 0 : index
    %105 = vector.load %arg13[%c0_39, %c0_40] : memref<1x256xf32, #tpu.memory_space<vmem>>, vector<1x256xf32>
    %106 = vector.broadcast %105 : vector<1x256xf32> to vector<8x256xf32>
    %107 = arith.addf %104, %106 : vector<8x256xf32>
    %cst_41 = arith.constant 0.000000e+00 : f32
    %108 = vector.broadcast %cst_41 : f32 to vector<8x256xf32>
    %109 = arith.maximumf %107, %108 : vector<8x256xf32>
    %c0_42 = arith.constant 0 : index
    %c0_43 = arith.constant 0 : index
    %110 = vector.load %arg14[%c0_42, %c0_43] : memref<8x256xf32, #tpu.memory_space<vmem>>, vector<8x256xf32>
    tpu.vector_store %arg14[%c0_42, %c0_43], %109 {strides = array<i32>} : memref<8x256xf32, #tpu.memory_space<vmem>>, vector<8x256xf32>,
    return
  }
  func.func @transform_0(%arg0: i32) -> (i32, i32) {
    %c0_i32 = arith.constant 0 : i32
    %c0_i32_0 = arith.constant 0 : i32
    return %arg0, %c0_i32 : i32, i32
  }
  func.func @transform_1(%arg0: i32) -> (i32, i32) {
    %c0_i32 = arith.constant 0 : i32
    %c0_i32_0 = arith.constant 0 : i32
    %c0_i32_1 = arith.constant 0 : i32
    return %c0_i32, %c0_i32_0 : i32, i32
  }
  func.func @transform_2(%arg0: i32) -> (i32, i32) {
    %c0_i32 = arith.constant 0 : i32
    %c0_i32_0 = arith.constant 0 : i32
    %c0_i32_1 = arith.constant 0 : i32
    return %c0_i32, %c0_i32_0 : i32, i32
  }
  func.func @transform_3(%arg0: i32) -> (i32, i32) {
    %c0_i32 = arith.constant 0 : i32
    %c0_i32_0 = arith.constant 0 : i32
    %c0_i32_1 = arith.constant 0 : i32
    return %c0_i32, %c0_i32_0 : i32, i32
  }
  func.func @transform_4(%arg0: i32) -> (i32, i32) {
    %c0_i32 = arith.constant 0 : i32
    %c0_i32_0 = arith.constant 0 : i32
    %c0_i32_1 = arith.constant 0 : i32
    return %c0_i32, %c0_i32_0 : i32, i32
  }
  func.func @transform_5(%arg0: i32) -> (i32, i32) {
    %c0_i32 = arith.constant 0 : i32
    %c0_i32_0 = arith.constant 0 : i32
    %c0_i32_1 = arith.constant 0 : i32
    return %c0_i32, %c0_i32_0 : i32, i32
  }
  func.func @transform_6(%arg0: i32) -> (i32, i32) {
    %c0_i32 = arith.constant 0 : i32
    %c0_i32_0 = arith.constant 0 : i32
    %c0_i32_1 = arith.constant 0 : i32
    return %c0_i32, %c0_i32_0 : i32, i32
  }
  func.func @transform_7(%arg0: i32) -> (i32, i32) {
    %c0_i32 = arith.constant 0 : i32
    %c0_i32_0 = arith.constant 0 : i32
    %c0_i32_1 = arith.constant 0 : i32
    return %c0_i32, %c0_i32_0 : i32, i32
  }
  func.func @transform_8(%arg0: i32) -> (i32, i32) {
    %c0_i32 = arith.constant 0 : i32
    %c0_i32_0 = arith.constant 0 : i32
    %c0_i32_1 = arith.constant 0 : i32
    return %c0_i32, %c0_i32_0 : i32, i32
  }
  func.func @transform_9(%arg0: i32) -> (i32, i32) {
    %c0_i32 = arith.constant 0 : i32
    %c0_i32_0 = arith.constant 0 : i32
    %c0_i32_1 = arith.constant 0 : i32
    return %c0_i32, %c0_i32_0 : i32, i32
  }
  func.func @transform_10(%arg0: i32) -> (i32, i32) {
    %c0_i32 = arith.constant 0 : i32
    %c0_i32_0 = arith.constant 0 : i32
    %c0_i32_1 = arith.constant 0 : i32
    return %c0_i32, %c0_i32_0 : i32, i32
  }
  func.func @transform_11(%arg0: i32) -> (i32, i32) {
    %c0_i32 = arith.constant 0 : i32
    %c0_i32_0 = arith.constant 0 : i32
    %c0_i32_1 = arith.constant 0 : i32
    return %c0_i32, %c0_i32_0 : i32, i32
  }
  func.func @transform_12(%arg0: i32) -> (i32, i32) {
    %c0_i32 = arith.constant 0 : i32
    %c0_i32_0 = arith.constant 0 : i32
    %c0_i32_1 = arith.constant 0 : i32
    return %c0_i32, %c0_i32_0 : i32, i32
  }
  func.func @transform_13(%arg0: i32) -> (i32, i32) {
    %c0_i32 = arith.constant 0 : i32
    %c0_i32_0 = arith.constant 0 : i32
    return %arg0, %c0_i32 : i32, i32
  }
}

</mosaic_0001>

<llo_original>
// kernel: tf_forward.1
$region0: #{tf_forward.1}
  #allocation0 [shape = 'u32[]', space=smem, size = 0x4, offset = 0x4, fixed_abs, tag = 'smem constant byte address 0x4 - core index']
  #allocation1 [shape = 'u32[144,128]{1,0:T(1,128)}', space=vmem, size = 0x12000, scoped, tag = 'internal scratch']
  %s0 = inlined_call_operand.vmem [shape: f32[8,32], index: 0, kind: input, shape index: {}]
  %s1 = inlined_call_operand.vmem [shape: bf16[32,384], index: 1, kind: input, shape index: {}]
  %s2 = inlined_call_operand.vmem [shape: f32[1,384], index: 2, kind: input, shape index: {}]
  %s3 = inlined_call_operand.vmem [shape: bf16[32,512], index: 3, kind: input, shape index: {}]
  %s4 = inlined_call_operand.vmem [shape: f32[1,512], index: 4, kind: input, shape index: {}]
  %s5 = inlined_call_operand.vmem [shape: bf16[512,32], index: 5, kind: input, shape index: {}]
  %s6 = inlined_call_operand.vmem [shape: f32[1,32], index: 6, kind: input, shape index: {}]
  %s7 = inlined_call_operand.vmem [shape: bf16[32,384], index: 7, kind: input, shape index: {}]
  %s8 = inlined_call_operand.vmem [shape: f32[1,384], index: 8, kind: input, shape index: {}]
  %s9 = inlined_call_operand.vmem [shape: bf16[32,512], index: 9, kind: input, shape index: {}]
  %s10 = inlined_call_operand.vmem [shape: f32[1,512], index: 10, kind: input, shape index: {}]
  %s11 = inlined_call_operand.hbm [shape: bf16[512,256], index: 11, kind: input, shape index: {}]
  %s12 = inlined_call_operand.vmem [shape: f32[1,256], index: 12, kind: input, shape index: {}]
  %s13 = inlined_call_operand.hbm [shape: f32[8,256], index: 13, kind: output, shape index: {}]
  %s14 = sld [smem:[#allocation0]]
  $region66: #{tf_forward.1} parent=0
    _
  %s16 = ssub.s32 1, %s14
  %s17 = scalar_select 0, %s16, %s14
  $region1: #{tf_forward.1} parent=0
    #allocation2 [shape = 'u8[262144]{0}', space=vmem, size = 0x40000, scoped, tag = 'input window, operand 11, single buffered']
    #allocation3 [shape = 's32[1]{0}', space=sflag, size = 0x4, scoped, tag = 'scoped memory for tf_forward.1']
    #allocation4 [shape = 's32[1]{0}', space=sflag, size = 0x4, scoped, tag = 'scoped memory for tf_forward.1']
    #allocation5 [shape = 'u8[8192]{0}', space=vmem, size = 0x2000, scoped, tag = 'output window, operand 0, single buffered']
    %18 = vsyncpa [#allocation3], 0
    %19 = vsyncpa [#allocation4], 0
    // Predicated region
    $region2: #{tf_forward.1} parent=1 // pred_check
      _
    $region3: #{tf_forward.1} parent=1 // pred_check_branch
      %21 = sbr.rel (0) target = $region5
    $region4: #{tf_forward.1} parent=1 // pred_region
      _
    $region5: #{tf_forward.1} parent=1 // pred_fallthru
      _
    // Predicated region
    $region6: #{tf_forward.1} parent=1 // pred_check
      _
    $region7: #{tf_forward.1} parent=1 // pred_check_branch
      %23 = sbr.rel (0) target = $region9
    $region8: #{tf_forward.1} parent=1 // pred_region
      _
    $region9: #{tf_forward.1} parent=1 // pred_fallthru
      _
    // Predicated region
    $region10: #{tf_forward.1} parent=1 // pred_check
      _
    $region11: #{tf_forward.1} parent=1 // pred_check_branch
      %25 = sbr.rel (0) target = $region13
    $region12: #{tf_forward.1} parent=1 // pred_region
      _
    $region13: #{tf_forward.1} parent=1 // pred_fallthru
      _
    // Predicated region
    $region14: #{tf_forward.1} parent=1 // pred_check
      _
    $region15: #{tf_forward.1} parent=1 // pred_check_branch
      %27 = sbr.rel (0) target = $region17
    $region16: #{tf_forward.1} parent=1 // pred_region
      _
    $region17: #{tf_forward.1} parent=1 // pred_fallthru
      _
    // Predicated region
    $region18: #{tf_forward.1} parent=1 // pred_check
      _
    $region19: #{tf_forward.1} parent=1 // pred_check_branch
      %29 = sbr.rel (0) target = $region21
    $region20: #{tf_forward.1} parent=1 // pred_region
      _
    $region21: #{tf_forward.1} parent=1 // pred_fallthru
      _
    // Predicated region
    $region22: #{tf_forward.1} parent=1 // pred_check
      _
    $region23: #{tf_forward.1} parent=1 // pred_check_branch
      %31 = sbr.rel (0) target = $region25
    $region24: #{tf_forward.1} parent=1 // pred_region
      _
    $region25: #{tf_forward.1} parent=1 // pred_fallthru
      _
    // Predicated region
    $region26: #{tf_forward.1} parent=1 // pred_check
      _
    $region27: #{tf_forward.1} parent=1 // pred_check_branch
      %33 = sbr.rel (0) target = $region29
    $region28: #{tf_forward.1} parent=1 // pred_region
      _
    $region29: #{tf_forward.1} parent=1 // pred_fallthru
      _
    // Predicated region
    $region30: #{tf_forward.1} parent=1 // pred_check
      _
    $region31: #{tf_forward.1} parent=1 // pred_check_branch
      %35 = sbr.rel (0) target = $region33
    $region32: #{tf_forward.1} parent=1 // pred_region
      _
    $region33: #{tf_forward.1} parent=1 // pred_fallthru
      _
    // Predicated region
    $region34: #{tf_forward.1} parent=1 // pred_check
      _
    $region35: #{tf_forward.1} parent=1 // pred_check_branch
      %37 = sbr.rel (0) target = $region37
    $region36: #{tf_forward.1} parent=1 // pred_region
      _
    $region37: #{tf_forward.1} parent=1 // pred_fallthru
      _
    // Predicated region
    $region38: #{tf_forward.1} parent=1 // pred_check
      _
    $region39: #{tf_forward.1} parent=1 // pred_check_branch
      %39 = sbr.rel (0) target = $region41
    $region40: #{tf_forward.1} parent=1 // pred_region
      _
    $region41: #{tf_forward.1} parent=1 // pred_fallthru
      _
    // Predicated region
    $region42: #{tf_forward.1} parent=1 // pred_check
      _
    $region43: #{tf_forward.1} parent=1 // pred_check_branch
      %41 = sbr.rel (0) target = $region45
    $region44: #{tf_forward.1} parent=1 // pred_region
      _
    $region45: #{tf_forward.1} parent=1 // pred_fallthru
      _
    // Predicated region
    $region46: #{tf_forward.1} parent=1 // pred_check
      _
    $region47: #{tf_forward.1} parent=1 // pred_check_branch
      %43 = sbr.rel (0) target = $region49
    $region48: #{tf_forward.1} parent=1 // pred_region
      %s45 = ssub.s32 8192, 8192
      %46 = vsyncadd [#allocation3], %s45
      %s47 = sshll.u32 [#allocation2], 4
      %s48 = int_to_ptr.vmem [resolvable:$true] %s47
      %53 = dma.hbm_to_vmem [thread:$0]  %s11, 8192, %s48, [#allocation3], 128, 128, 8
    $region49: #{tf_forward.1} parent=1 // pred_fallthru
      _
    // Predicated region
    $region50: #{tf_forward.1} parent=1 // pred_check
      _
    $region51: #{tf_forward.1} parent=1 // pred_check_branch
      %55 = sbr.rel (0) target = $region53
    $region52: #{tf_forward.1} parent=1 // pred_region
      _
    $region53: #{tf_forward.1} parent=1 // pred_fallthru
      _
    // Predicated region
    $region54: #{tf_forward.1} parent=1 // pred_check
      _
    $region55: #{tf_forward.1} parent=1 // pred_check_branch
      %57 = sbr.rel (0) target = $region57
    $region56: #{tf_forward.1} parent=1 // pred_region
      %58 = dma.done [#allocation3], 8192
    $region57: #{tf_forward.1} parent=1 // pred_fallthru
      _
    %v60 = vld [vmem:[%s0] sm:$0xff]
    %v61 = vpack.c.bf16 %v60, %v60
    %v62 = vld [vmem:[%s1] sm:$0xff]
    %v63 = vld [vmem:[%s1 + $0x8] sm:$0xf]
    %v64 = vld [vmem:[%s1 + $0xc] sm:$0xff]
    %v65 = vld [vmem:[%s1 + $0x14] sm:$0xf]
    %v66 = vld [vmem:[%s1 + $0x18] sm:$0xff]
    %v67 = vld [vmem:[%s1 + $0x20] sm:$0xf]
    %v68 = vld [vmem:[%s1 + $0x24] sm:$0xff]
    %v69 = vld [vmem:[%s1 + $0x2c] sm:$0xf]
    %v70 = vld [vmem:[%s2] sm:$0x7]
    %v72 = vlaneseq
    %v73 = vshrl.u32 %v72, 7
    %v74 = vsub.s32 0, %v73
    %v75 = vrot.slane %v70, %v74
    %v76 = vlaneseq
    %v77 = vshrl.u32 %v76, 7
    %v78 = vsub.s32 1, %v77
    %v79 = vrot.slane %v70, %v78
    %v80 = vlaneseq
    %v81 = vshrl.u32 %v80, 7
    %v82 = vsub.s32 2, %v81
    %v83 = vrot.slane %v70, %v82
    %v95 = vunpack.c.l.b16 %v62
    %v96 = vunpack.c.h.b16 %v62
    %v97 = vunpack.c.l.b16 %v63
    %v98 = vunpack.c.l.b16 %v64
    %v99 = vunpack.c.h.b16 %v64
    %v100 = vunpack.c.l.b16 %v65
    %v101 = vunpack.c.l.b16 %v66
    %v102 = vunpack.c.h.b16 %v66
    %v103 = vunpack.c.l.b16 %v67
    %v104 = vunpack.c.l.b16 %v68
    %v105 = vunpack.c.h.b16 %v68
    %v106 = vunpack.c.l.b16 %v69
    %v107 = vpack.c.b16 %v98, %v95
    %v108 = vpack.c.b16 %v99, %v96
    %v109 = vpack.c.b16 %v100, %v97
    %v110 = vpack.c.b16 %v104, %v101
    %v111 = vpack.c.b16 %v105, %v102
    %v112 = vpack.c.b16 %v106, %v103
    %vm119 = vcmask 261120
    %v121 = vsel %vm119, %v61, 0
    %123 = vmatprep.subr.bf16.mxu0 0
    %124 = vmatpush1.bf16.msra.mxu0 0
    %125 = vmatprep.subr.bf16.mxu0 0
    %126 = vmatpush1.bf16.msra.mxu0 0
    %127 = vmatprep.subr.bf16.mxu0 0
    %128 = vmatpush1.bf16.msra.mxu0 0
    %129 = vmatprep.subr.bf16.mxu0 0
    %130 = vmatpush1.bf16.msra.mxu0 0
    %131 = vmatprep.subr.bf16.mxu0 0
    %132 = vmatpush1.bf16.msra.mxu0 0
    %133 = vmatprep.subr.bf16.mxu0 0
    %134 = vmatpush1.bf16.msra.mxu0 0
    %135 = vmatprep.subr.bf16.mxu0 %v111
    %136 = vmatpush1.bf16.msra.mxu0 %v110
    %137 = vmatprep.subr.bf16.mxu0 %v108
    %138 = vmatpush1.bf16.msra.mxu0 %v107
    %139 = vmatprep.subr.bf16.mxu0 0
    %140 = vmatpush2.bf16.msra.mxu0 0
    %141 = vmatprep.subr.bf16.mxu0 0
    %142 = vmatpush2.bf16.msra.mxu0 0
    %143 = vmatprep.subr.bf16.mxu0 0
    %144 = vmatpush2.bf16.msra.mxu0 0
    %145 = vmatprep.subr.bf16.mxu0 0
    %146 = vmatpush2.bf16.msra.mxu0 0
    %147 = vmatprep.subr.bf16.mxu0 0
    %148 = vmatpush2.bf16.msra.mxu0 0
    %149 = vmatprep.subr.bf16.mxu0 0
    %150 = vmatpush2.bf16.msra.mxu0 0
    %151 = vmatprep.subr.bf16.mxu0 0
    %152 = vmatpush2.bf16.msra.mxu0 0
    %153 = vmatprep.subr.bf16.mxu0 0
    %154 = vmatpush2.bf16.msra.mxu0 0
    %155 = vmatprep.mubr.bf16.mxu0 0
    %156 = vmatmul.mubr.bf16.gmra.mxu0 %v121
    %v157 = vpop.f32.mrf.mxu0
    %v158 = vadd.f32 %v75, %v157
    %v159 = vpop.f32.mrf.mxu0
    %v160 = vadd.f32 %v79, %v159
    %v161 = vpop.f32.mrf.mxu0
    %v162 = vpop.f32.mrf.mxu0
    %163 = vdwg.mxu0
    %164 = vmatprep.subr.bf16.mxu0 0
    %165 = vmatpush1.bf16.msra.mxu0 0
    %166 = vmatprep.subr.bf16.mxu0 0
    %167 = vmatpush1.bf16.msra.mxu0 0
    %168 = vmatprep.subr.bf16.mxu0 0
    %169 = vmatpush1.bf16.msra.mxu0 0
    %170 = vmatprep.subr.bf16.mxu0 0
    %171 = vmatpush1.bf16.msra.mxu0 0
    %172 = vmatprep.subr.bf16.mxu0 0
    %173 = vmatpush1.bf16.msra.mxu0 0
    %174 = vmatprep.subr.bf16.mxu0 0
    %175 = vmatpush1.bf16.msra.mxu0 0
    %176 = vmatprep.subr.bf16.mxu0 0
    %177 = vmatpush1.bf16.msra.mxu0 %v112
    %178 = vmatprep.subr.bf16.mxu0 0
    %179 = vmatpush1.bf16.msra.mxu0 %v109
    %180 = vmatprep.subr.bf16.mxu0 0
    %181 = vmatpush2.bf16.msra.mxu0 0
    %182 = vmatprep.subr.bf16.mxu0 0
    %183 = vmatpush2.bf16.msra.mxu0 0
    %184 = vmatprep.subr.bf16.mxu0 0
    %185 = vmatpush2.bf16.msra.mxu0 0
    %186 = vmatprep.subr.bf16.mxu0 0
    %187 = vmatpush2.bf16.msra.mxu0 0
    %188 = vmatprep.subr.bf16.mxu0 0
    %189 = vmatpush2.bf16.msra.mxu0 0
    %190 = vmatprep.subr.bf16.mxu0 0
    %191 = vmatpush2.bf16.msra.mxu0 0
    %192 = vmatprep.subr.bf16.mxu0 0
    %193 = vmatpush2.bf16.msra.mxu0 0
    %194 = vmatprep.subr.bf16.mxu0 0
    %195 = vmatpush2.bf16.msra.mxu0 0
    %196 = vmatprep.mubr.bf16.mxu0 0
    %197 = vmatmul.mubr.bf16.gmra.mxu0 %v121
    %v198 = vpop.f32.mrf.mxu0
    %v199 = vadd.f32 %v83, %v198
    %v200 = vpop.f32.mrf.mxu0
    %v201 = vpop.f32.mrf.mxu0
    %v202 = vpop.f32.mrf.mxu0
    %203 = vdwg.mxu0
    %v204 = vsel %vm119, %v160, -inf
    %205 = vmax.xlane.f32.xlu0 %v204
    %v206 = vpop.xlane.xlu0 %205
    %v207 = vsel %vm119, %v160, inf
    %208 = vmin.xlane.f32.xlu0 %v207
    %v209 = vpop.xlane.xlu0 %208
    %v210 = vmul.f32 %v158, %v206
    %v211 = vmul.f32 %v158, %v209
    %v212 = vmax.f32 %v210, %v211
    %v213 = vlaneseq
    %v214 = vshrl.u32 %v213, 7
    %v215 = vsub.s32 0, %v214
    %v216 = vrot.slane %v158, %v215
    %218 = vbcast.lane.b32.xlu0 %v216, 256
    %v219 = vpop.permute.xlu0 %218
    %s221 = sor.u32 256, 8
    %222 = vbcast.lane.b32.xlu0 %v216, %s221
    %v223 = vpop.permute.xlu0 %222
    %s225 = sor.u32 256, 16
    %226 = vbcast.lane.b32.xlu0 %v216, %s225
    %v227 = vpop.permute.xlu0 %226
    %s229 = sor.u32 256, 24
    %230 = vbcast.lane.b32.xlu0 %v216, %s229
    %v231 = vpop.permute.xlu0 %230
    %v232 = vlaneseq
    %v233 = vshrl.u32 %v232, 7
    %v234 = vsub.s32 1, %v233
    %v235 = vrot.slane %v158, %v234
    %237 = vbcast.lane.b32.xlu0 %v235, 256
    %v238 = vpop.permute.xlu0 %237
    %s240 = sor.u32 256, 8
    %241 = vbcast.lane.b32.xlu0 %v235, %s240
    %v242 = vpop.permute.xlu0 %241
    %s244 = sor.u32 256, 16
    %245 = vbcast.lane.b32.xlu0 %v235, %s244
    %v246 = vpop.permute.xlu0 %245
    %s248 = sor.u32 256, 24
    %249 = vbcast.lane.b32.xlu0 %v235, %s248
    %v250 = vpop.permute.xlu0 %249
    %v251 = vlaneseq
    %v252 = vshrl.u32 %v251, 7
    %v253 = vsub.s32 2, %v252
    %v254 = vrot.slane %v158, %v253
    %256 = vbcast.lane.b32.xlu0 %v254, 256
    %v257 = vpop.permute.xlu0 %256
    %s259 = sor.u32 256, 8
    %260 = vbcast.lane.b32.xlu0 %v254, %s259
    %v261 = vpop.permute.xlu0 %260
    %s263 = sor.u32 256, 16
    %264 = vbcast.lane.b32.xlu0 %v254, %s263
    %v265 = vpop.permute.xlu0 %264
    %s267 = sor.u32 256, 24
    %268 = vbcast.lane.b32.xlu0 %v254, %s267
    %v269 = vpop.permute.xlu0 %268
    %v270 = vlaneseq
    %v271 = vshrl.u32 %v270, 7
    %v272 = vsub.s32 3, %v271
    %v273 = vrot.slane %v158, %v272
    %275 = vbcast.lane.b32.xlu0 %v273, 256
    %v276 = vpop.permute.xlu0 %275
    %s278 = sor.u32 256, 8
    %279 = vbcast.lane.b32.xlu0 %v273, %s278
    %v280 = vpop.permute.xlu0 %279
    %s282 = sor.u32 256, 16
    %283 = vbcast.lane.b32.xlu0 %v273, %s282
    %v284 = vpop.permute.xlu0 %283
    %s286 = sor.u32 256, 24
    %287 = vbcast.lane.b32.xlu0 %v273, %s286
    %v288 = vpop.permute.xlu0 %287
    %v289 = vlaneseq
    %v290 = vshrl.u32 %v289, 7
    %v291 = vsub.s32 4, %v290
    %v292 = vrot.slane %v158, %v291
    %294 = vbcast.lane.b32.xlu0 %v292, 256
    %v295 = vpop.permute.xlu0 %294
    %s297 = sor.u32 256, 8
    %298 = vbcast.lane.b32.xlu0 %v292, %s297
    %v299 = vpop.permute.xlu0 %298
    %s301 = sor.u32 256, 16
    %302 = vbcast.lane.b32.xlu0 %v292, %s301
    %v303 = vpop.permute.xlu0 %302
    %s305 = sor.u32 256, 24
    %306 = vbcast.lane.b32.xlu0 %v292, %s305
    %v307 = vpop.permute.xlu0 %306
    %v308 = vlaneseq
    %v309 = vshrl.u32 %v308, 7
    %v310 = vsub.s32 5, %v309
    %v311 = vrot.slane %v158, %v310
    %313 = vbcast.lane.b32.xlu0 %v311, 256
    %v314 = vpop.permute.xlu0 %313
    %s316 = sor.u32 256, 8
    %317 = vbcast.lane.b32.xlu0 %v311, %s316
    %v318 = vpop.permute.xlu0 %317
    %s320 = sor.u32 256, 16
    %321 = vbcast.lane.b32.xlu0 %v311, %s320
    %v322 = vpop.permute.xlu0 %321
    %s324 = sor.u32 256, 24
    %325 = vbcast.lane.b32.xlu0 %v311, %s324
    %v326 = vpop.permute.xlu0 %325
    %v327 = vlaneseq
    %v328 = vshrl.u32 %v327, 7
    %v329 = vsub.s32 6, %v328
    %v330 = vrot.slane %v158, %v329
    %332 = vbcast.lane.b32.xlu0 %v330, 256
    %v333 = vpop.permute.xlu0 %332
    %s335 = sor.u32 256, 8
    %336 = vbcast.lane.b32.xlu0 %v330, %s335
    %v337 = vpop.permute.xlu0 %336
    %s339 = sor.u32 256, 16
    %340 = vbcast.lane.b32.xlu0 %v330, %s339
    %v341 = vpop.permute.xlu0 %340
    %s343 = sor.u32 256, 24
    %344 = vbcast.lane.b32.xlu0 %v330, %s343
    %v345 = vpop.permute.xlu0 %344
    %v346 = vlaneseq
    %v347 = vshrl.u32 %v346, 7
    %v348 = vsub.s32 7, %v347
    %v349 = vrot.slane %v158, %v348
    %351 = vbcast.lane.b32.xlu0 %v349, 256
    %v352 = vpop.permute.xlu0 %351
    %s354 = sor.u32 256, 8
    %355 = vbcast.lane.b32.xlu0 %v349, %s354
    %v356 = vpop.permute.xlu0 %355
    %s358 = sor.u32 256, 16
    %359 = vbcast.lane.b32.xlu0 %v349, %s358
    %v360 = vpop.permute.xlu0 %359
    %s362 = sor.u32 256, 24
    %363 = vbcast.lane.b32.xlu0 %v349, %s362
    %v364 = vpop.permute.xlu0 %363
    %v366 = vcombine.high %v160, %v160
    %v368 = vunpack.c.l.s4 1966171168
    %v369 = vunpack.c.0.s8 %v368
    %v370 = vlaneseq
    %v371 = vshrl.u32 %v370, 7
    %v372 = vsub.s32 %v369, %v371
    %v373 = vrot.slane %v160, %v372
    %v375 = vunpack.c.l.s4 1966171168
    %v376 = vunpack.c.0.s8 %v375
    %v377 = vlaneseq
    %v378 = vshrl.u32 %v377, 7
    %v379 = vsub.s32 %v376, %v378
    %v380 = vrot.slane %v366, %v379
    %v381 = vcombine.high %v373, %v373
    %v382 = vcombine.high %v380, %v380
    %v384 = vunpack.c.l.s4 1966171168
    %v385 = vunpack.c.0.s8 %v384
    %v386 = vlaneseq
    %v387 = vshrl.u32 %v386, 7
    %v388 = vsub.s32 %v385, %v387
    %v389 = vrot.slane %v373, %v388
    %v391 = vunpack.c.l.s4 1966171168
    %v392 = vunpack.c.0.s8 %v391
    %v393 = vlaneseq
    %v394 = vshrl.u32 %v393, 7
    %v395 = vsub.s32 %v392, %v394
    %v396 = vrot.slane %v380, %v395
    %v398 = vunpack.c.l.s4 1966171168
    %v399 = vunpack.c.0.s8 %v398
    %v400 = vlaneseq
    %v401 = vshrl.u32 %v400, 7
    %v402 = vsub.s32 %v399, %v401
    %v403 = vrot.slane %v381, %v402
    %v405 = vunpack.c.l.s4 1966171168
    %v406 = vunpack.c.0.s8 %v405
    %v407 = vlaneseq
    %v408 = vshrl.u32 %v407, 7
    %v409 = vsub.s32 %v406, %v408
    %v410 = vrot.slane %v382, %v409
    %v411 = vcombine.high %v389, %v389
    %v412 = vcombine.high %v396, %v396
    %v413 = vcombine.high %v403, %v403
    %v414 = vcombine.high %v410, %v410
    %v415 = vlaneseq
    %v416 = vshrl.u32 %v415, 7
    %v417 = vsub.s32 0, %v416
    %v418 = vrot.slane %v389, %v417
    %v419 = vlaneseq
    %v420 = vshrl.u32 %v419, 7
    %v421 = vsub.s32 0, %v420
    %v422 = vrot.slane %v403, %v421
    %v423 = vlaneseq
    %v424 = vshrl.u32 %v423, 7
    %v425 = vsub.s32 0, %v424
    %v426 = vrot.slane %v411, %v425
    %v427 = vlaneseq
    %v428 = vshrl.u32 %v427, 7
    %v429 = vsub.s32 0, %v428
    %v430 = vrot.slane %v413, %v429
    %v431 = vlaneseq
    %v432 = vshrl.u32 %v431, 7
    %v433 = vsub.s32 0, %v432
    %v434 = vrot.slane %v396, %v433
    %v435 = vlaneseq
    %v436 = vshrl.u32 %v435, 7
    %v437 = vsub.s32 0, %v436
    %v438 = vrot.slane %v410, %v437
    %v439 = vlaneseq
    %v440 = vshrl.u32 %v439, 7
    %v441 = vsub.s32 0, %v440
    %v442 = vrot.slane %v412, %v441
    %v443 = vlaneseq
    %v444 = vshrl.u32 %v443, 7
    %v445 = vsub.s32 0, %v444
    %v446 = vrot.slane %v414, %v445
    %v455 = vmul.f32 %v219, %v418
    %v456 = vmul.f32 %v223, %v418
    %v457 = vmul.f32 %v227, %v418
    %v458 = vmul.f32 %v231, %v418
    %v459 = vmul.f32 %v238, %v422
    %v460 = vmul.f32 %v242, %v422
    %v461 = vmul.f32 %v246, %v422
    %v462 = vmul.f32 %v250, %v422
    %v463 = vmul.f32 %v257, %v426
    %v464 = vmul.f32 %v261, %v426
    %v465 = vmul.f32 %v265, %v426
    %v466 = vmul.f32 %v269, %v426
    %v467 = vmul.f32 %v276, %v430
    %v468 = vmul.f32 %v280, %v430
    %v469 = vmul.f32 %v284, %v430
    %v470 = vmul.f32 %v288, %v430
    %v471 = vmul.f32 %v295, %v434
    %v472 = vmul.f32 %v299, %v434
    %v473 = vmul.f32 %v303, %v434
    %v474 = vmul.f32 %v307, %v434
    %v475 = vmul.f32 %v314, %v438
    %v476 = vmul.f32 %v318, %v438
    %v477 = vmul.f32 %v322, %v438
    %v478 = vmul.f32 %v326, %v438
    %v479 = vmul.f32 %v333, %v442
    %v480 = vmul.f32 %v337, %v442
    %v481 = vmul.f32 %v341, %v442
    %v482 = vmul.f32 %v345, %v442
    %v483 = vmul.f32 %v352, %v446
    %v484 = vmul.f32 %v356, %v446
    %v485 = vmul.f32 %v360, %v446
    %v486 = vmul.f32 %v364, %v446
    %v487 = vlaneseq
    %v488 = vshrl.u32 %v487, 7
    %v489 = vsub.s32 0, %v488
    %v490 = vrot.slane %v212, %v489
    %492 = vbcast.lane.b32.xlu0 %v490, 256
    %v493 = vpop.permute.xlu0 %492
    %s495 = sor.u32 256, 8
    %496 = vbcast.lane.b32.xlu0 %v490, %s495
    %v497 = vpop.permute.xlu0 %496
    %s499 = sor.u32 256, 16
    %500 = vbcast.lane.b32.xlu0 %v490, %s499
    %v501 = vpop.permute.xlu0 %500
    %s503 = sor.u32 256, 24
    %504 = vbcast.lane.b32.xlu0 %v490, %s503
    %v505 = vpop.permute.xlu0 %504
    %v506 = vlaneseq
    %v507 = vshrl.u32 %v506, 7
    %v508 = vsub.s32 1, %v507
    %v509 = vrot.slane %v212, %v508
    %511 = vbcast.lane.b32.xlu0 %v509, 256
    %v512 = vpop.permute.xlu0 %511
    %s514 = sor.u32 256, 8
    %515 = vbcast.lane.b32.xlu0 %v509, %s514
    %v516 = vpop.permute.xlu0 %515
    %s518 = sor.u32 256, 16
    %519 = vbcast.lane.b32.xlu0 %v509, %s518
    %v520 = vpop.permute.xlu0 %519
    %s522 = sor.u32 256, 24
    %523 = vbcast.lane.b32.xlu0 %v509, %s522
    %v524 = vpop.permute.xlu0 %523
    %v525 = vlaneseq
    %v526 = vshrl.u32 %v525, 7
    %v527 = vsub.s32 2, %v526
    %v528 = vrot.slane %v212, %v527
    %530 = vbcast.lane.b32.xlu0 %v528, 256
    %v531 = vpop.permute.xlu0 %530
    %s533 = sor.u32 256, 8
    %534 = vbcast.lane.b32.xlu0 %v528, %s533
    %v535 = vpop.permute.xlu0 %534
    %s537 = sor.u32 256, 16
    %538 = vbcast.lane.b32.xlu0 %v528, %s537
    %v539 = vpop.permute.xlu0 %538
    %s541 = sor.u32 256, 24
    %542 = vbcast.lane.b32.xlu0 %v528, %s541
    %v543 = vpop.permute.xlu0 %542
    %v544 = vlaneseq
    %v545 = vshrl.u32 %v544, 7
    %v546 = vsub.s32 3, %v545
    %v547 = vrot.slane %v212, %v546
    %549 = vbcast.lane.b32.xlu0 %v547, 256
    %v550 = vpop.permute.xlu0 %549
    %s552 = sor.u32 256, 8
    %553 = vbcast.lane.b32.xlu0 %v547, %s552
    %v554 = vpop.permute.xlu0 %553
    %s556 = sor.u32 256, 16
    %557 = vbcast.lane.b32.xlu0 %v547, %s556
    %v558 = vpop.permute.xlu0 %557
    %s560 = sor.u32 256, 24
    %561 = vbcast.lane.b32.xlu0 %v547, %s560
    %v562 = vpop.permute.xlu0 %561
    %v563 = vlaneseq
    %v564 = vshrl.u32 %v563, 7
    %v565 = vsub.s32 4, %v564
    %v566 = vrot.slane %v212, %v565
    %568 = vbcast.lane.b32.xlu0 %v566, 256
    %v569 = vpop.permute.xlu0 %568
    %s571 = sor.u32 256, 8
    %572 = vbcast.lane.b32.xlu0 %v566, %s571
    %v573 = vpop.permute.xlu0 %572
    %s575 = sor.u32 256, 16
    %576 = vbcast.lane.b32.xlu0 %v566, %s575
    %v577 = vpop.permute.xlu0 %576
    %s579 = sor.u32 256, 24
    %580 = vbcast.lane.b32.xlu0 %v566, %s579
    %v581 = vpop.permute.xlu0 %580
    %v582 = vlaneseq
    %v583 = vshrl.u32 %v582, 7
    %v584 = vsub.s32 5, %v583
    %v585 = vrot.slane %v212, %v584
    %587 = vbcast.lane.b32.xlu0 %v585, 256
    %v588 = vpop.permute.xlu0 %587
    %s590 = sor.u32 256, 8
    %591 = vbcast.lane.b32.xlu0 %v585, %s590
    %v592 = vpop.permute.xlu0 %591
    %s594 = sor.u32 256, 16
    %595 = vbcast.lane.b32.xlu0 %v585, %s594
    %v596 = vpop.permute.xlu0 %595
    %s598 = sor.u32 256, 24
    %599 = vbcast.lane.b32.xlu0 %v585, %s598
    %v600 = vpop.permute.xlu0 %599
    %v601 = vlaneseq
    %v602 = vshrl.u32 %v601, 7
    %v603 = vsub.s32 6, %v602
    %v604 = vrot.slane %v212, %v603
    %606 = vbcast.lane.b32.xlu0 %v604, 256
    %v607 = vpop.permute.xlu0 %606
    %s609 = sor.u32 256, 8
    %610 = vbcast.lane.b32.xlu0 %v604, %s609
    %v611 = vpop.permute.xlu0 %610
    %s613 = sor.u32 256, 16
    %614 = vbcast.lane.b32.xlu0 %v604, %s613
    %v615 = vpop.permute.xlu0 %614
    %s617 = sor.u32 256, 24
    %618 = vbcast.lane.b32.xlu0 %v604, %s617
    %v619 = vpop.permute.xlu0 %618
    %v620 = vlaneseq
    %v621 = vshrl.u32 %v620, 7
    %v622 = vsub.s32 7, %v621
    %v623 = vrot.slane %v212, %v622
    %625 = vbcast.lane.b32.xlu0 %v623, 256
    %v626 = vpop.permute.xlu0 %625
    %s628 = sor.u32 256, 8
    %629 = vbcast.lane.b32.xlu0 %v623, %s628
    %v630 = vpop.permute.xlu0 %629
    %s632 = sor.u32 256, 16
    %633 = vbcast.lane.b32.xlu0 %v623, %s632
    %v634 = vpop.permute.xlu0 %633
    %s636 = sor.u32 256, 24
    %637 = vbcast.lane.b32.xlu0 %v623, %s636
    %v638 = vpop.permute.xlu0 %637
    %v639 = vsub.f32 %v455, %v493
    %v640 = vsub.f32 %v456, %v497
    %v641 = vsub.f32 %v457, %v501
    %v642 = vsub.f32 %v458, %v505
    %v643 = vsub.f32 %v459, %v512
    %v644 = vsub.f32 %v460, %v516
    %v645 = vsub.f32 %v461, %v520
    %v646 = vsub.f32 %v462, %v524
    %v647 = vsub.f32 %v463, %v531
    %v648 = vsub.f32 %v464, %v535
    %v649 = vsub.f32 %v465, %v539
    %v650 = vsub.f32 %v466, %v543
    %v651 = vsub.f32 %v467, %v550
    %v652 = vsub.f32 %v468, %v554
    %v653 = vsub.f32 %v469, %v558
    %v654 = vsub.f32 %v470, %v562
    %v655 = vsub.f32 %v471, %v569
    %v656 = vsub.f32 %v472, %v573
    %v657 = vsub.f32 %v473, %v577
    %v658 = vsub.f32 %v474, %v581
    %v659 = vsub.f32 %v475, %v588
    %v660 = vsub.f32 %v476, %v592
    %v661 = vsub.f32 %v477, %v596
    %v662 = vsub.f32 %v478, %v600
    %v663 = vsub.f32 %v479, %v607
    %v664 = vsub.f32 %v480, %v611
    %v665 = vsub.f32 %v481, %v615
    %v666 = vsub.f32 %v482, %v619
    %v667 = vsub.f32 %v483, %v626
    %v668 = vsub.f32 %v484, %v630
    %v669 = vsub.f32 %v485, %v634
    %v670 = vsub.f32 %v486, %v638
    %v671 = vmul.f32 %v639, 1.442695
    %v672 = vpow.pop %v671
    %v673 = vmul.f32 %v640, 1.442695
    %v674 = vpow.pop %v673
    %v675 = vmul.f32 %v641, 1.442695
    %v676 = vpow.pop %v675
    %v677 = vmul.f32 %v642, 1.442695
    %v678 = vpow.pop %v677
    %v679 = vmul.f32 %v643, 1.442695
    %v680 = vpow.pop %v679
    %v681 = vmul.f32 %v644, 1.442695
    %v682 = vpow.pop %v681
    %v683 = vmul.f32 %v645, 1.442695
    %v684 = vpow.pop %v683
    %v685 = vmul.f32 %v646, 1.442695
    %v686 = vpow.pop %v685
    %v687 = vmul.f32 %v647, 1.442695
    %v688 = vpow.pop %v687
    %v689 = vmul.f32 %v648, 1.442695
    %v690 = vpow.pop %v689
    %v691 = vmul.f32 %v649, 1.442695
    %v692 = vpow.pop %v691
    %v693 = vmul.f32 %v650, 1.442695
    %v694 = vpow.pop %v693
    %v695 = vmul.f32 %v651, 1.442695
    %v696 = vpow.pop %v695
    %v697 = vmul.f32 %v652, 1.442695
    %v698 = vpow.pop %v697
    %v699 = vmul.f32 %v653, 1.442695
    %v700 = vpow.pop %v699
    %v701 = vmul.f32 %v654, 1.442695
    %v702 = vpow.pop %v701
    %v703 = vmul.f32 %v655, 1.442695
    %v704 = vpow.pop %v703
    %v705 = vmul.f32 %v656, 1.442695
    %v706 = vpow.pop %v705
    %v707 = vmul.f32 %v657, 1.442695
    %v708 = vpow.pop %v707
    %v709 = vmul.f32 %v658, 1.442695
    %v710 = vpow.pop %v709
    %v711 = vmul.f32 %v659, 1.442695
    %v712 = vpow.pop %v711
    %v713 = vmul.f32 %v660, 1.442695
    %v714 = vpow.pop %v713
    %v715 = vmul.f32 %v661, 1.442695
    %v716 = vpow.pop %v715
    %v717 = vmul.f32 %v662, 1.442695
    %v718 = vpow.pop %v717
    %v719 = vmul.f32 %v663, 1.442695
    %v720 = vpow.pop %v719
    %v721 = vmul.f32 %v664, 1.442695
    %v722 = vpow.pop %v721
    %v723 = vmul.f32 %v665, 1.442695
    %v724 = vpow.pop %v723
    %v725 = vmul.f32 %v666, 1.442695
    %v726 = vpow.pop %v725
    %v727 = vmul.f32 %v667, 1.442695
    %v728 = vpow.pop %v727
    %v729 = vmul.f32 %v668, 1.442695
    %v730 = vpow.pop %v729
    %v731 = vmul.f32 %v669, 1.442695
    %v732 = vpow.pop %v731
    %v733 = vmul.f32 %v670, 1.442695
    %v734 = vpow.pop %v733
    %v735 = vlaneseq
    %v736 = vshrl.u32 %v735, 7
    %v737 = vsub.s32 0, %v736
    %v738 = vrot.slane %v199, %v737
    %740 = vbcast.lane.b32.xlu0 %v738, 256
    %v741 = vpop.permute.xlu0 %740
    %s743 = sor.u32 256, 8
    %744 = vbcast.lane.b32.xlu0 %v738, %s743
    %v745 = vpop.permute.xlu0 %744
    %s747 = sor.u32 256, 16
    %748 = vbcast.lane.b32.xlu0 %v738, %s747
    %v749 = vpop.permute.xlu0 %748
    %s751 = sor.u32 256, 24
    %752 = vbcast.lane.b32.xlu0 %v738, %s751
    %v753 = vpop.permute.xlu0 %752
    %v754 = vlaneseq
    %v755 = vshrl.u32 %v754, 7
    %v756 = vsub.s32 1, %v755
    %v757 = vrot.slane %v199, %v756
    %759 = vbcast.lane.b32.xlu0 %v757, 256
    %v760 = vpop.permute.xlu0 %759
    %s762 = sor.u32 256, 8
    %763 = vbcast.lane.b32.xlu0 %v757, %s762
    %v764 = vpop.permute.xlu0 %763
    %s766 = sor.u32 256, 16
    %767 = vbcast.lane.b32.xlu0 %v757, %s766
    %v768 = vpop.permute.xlu0 %767
    %s770 = sor.u32 256, 24
    %771 = vbcast.lane.b32.xlu0 %v757, %s770
    %v772 = vpop.permute.xlu0 %771
    %v773 = vlaneseq
    %v774 = vshrl.u32 %v773, 7
    %v775 = vsub.s32 2, %v774
    %v776 = vrot.slane %v199, %v775
    %778 = vbcast.lane.b32.xlu0 %v776, 256
    %v779 = vpop.permute.xlu0 %778
    %s781 = sor.u32 256, 8
    %782 = vbcast.lane.b32.xlu0 %v776, %s781
    %v783 = vpop.permute.xlu0 %782
    %s785 = sor.u32 256, 16
    %786 = vbcast.lane.b32.xlu0 %v776, %s785
    %v787 = vpop.permute.xlu0 %786
    %s789 = sor.u32 256, 24
    %790 = vbcast.lane.b32.xlu0 %v776, %s789
    %v791 = vpop.permute.xlu0 %790
    %v792 = vlaneseq
    %v793 = vshrl.u32 %v792, 7
    %v794 = vsub.s32 3, %v793
    %v795 = vrot.slane %v199, %v794
    %797 = vbcast.lane.b32.xlu0 %v795, 256
    %v798 = vpop.permute.xlu0 %797
    %s800 = sor.u32 256, 8
    %801 = vbcast.lane.b32.xlu0 %v795, %s800
    %v802 = vpop.permute.xlu0 %801
    %s804 = sor.u32 256, 16
    %805 = vbcast.lane.b32.xlu0 %v795, %s804
    %v806 = vpop.permute.xlu0 %805
    %s808 = sor.u32 256, 24
    %809 = vbcast.lane.b32.xlu0 %v795, %s808
    %v810 = vpop.permute.xlu0 %809
    %v811 = vlaneseq
    %v812 = vshrl.u32 %v811, 7
    %v813 = vsub.s32 4, %v812
    %v814 = vrot.slane %v199, %v813
    %816 = vbcast.lane.b32.xlu0 %v814, 256
    %v817 = vpop.permute.xlu0 %816
    %s819 = sor.u32 256, 8
    %820 = vbcast.lane.b32.xlu0 %v814, %s819
    %v821 = vpop.permute.xlu0 %820
    %s823 = sor.u32 256, 16
    %824 = vbcast.lane.b32.xlu0 %v814, %s823
    %v825 = vpop.permute.xlu0 %824
    %s827 = sor.u32 256, 24
    %828 = vbcast.lane.b32.xlu0 %v814, %s827
    %v829 = vpop.permute.xlu0 %828
    %v830 = vlaneseq
    %v831 = vshrl.u32 %v830, 7
    %v832 = vsub.s32 5, %v831
    %v833 = vrot.slane %v199, %v832
    %835 = vbcast.lane.b32.xlu0 %v833, 256
    %v836 = vpop.permute.xlu0 %835
    %s838 = sor.u32 256, 8
    %839 = vbcast.lane.b32.xlu0 %v833, %s838
    %v840 = vpop.permute.xlu0 %839
    %s842 = sor.u32 256, 16
    %843 = vbcast.lane.b32.xlu0 %v833, %s842
    %v844 = vpop.permute.xlu0 %843
    %s846 = sor.u32 256, 24
    %847 = vbcast.lane.b32.xlu0 %v833, %s846
    %v848 = vpop.permute.xlu0 %847
    %v849 = vlaneseq
    %v850 = vshrl.u32 %v849, 7
    %v851 = vsub.s32 6, %v850
    %v852 = vrot.slane %v199, %v851
    %854 = vbcast.lane.b32.xlu0 %v852, 256
    %v855 = vpop.permute.xlu0 %854
    %s857 = sor.u32 256, 8
    %858 = vbcast.lane.b32.xlu0 %v852, %s857
    %v859 = vpop.permute.xlu0 %858
    %s861 = sor.u32 256, 16
    %862 = vbcast.lane.b32.xlu0 %v852, %s861
    %v863 = vpop.permute.xlu0 %862
    %s865 = sor.u32 256, 24
    %866 = vbcast.lane.b32.xlu0 %v852, %s865
    %v867 = vpop.permute.xlu0 %866
    %v868 = vlaneseq
    %v869 = vshrl.u32 %v868, 7
    %v870 = vsub.s32 7, %v869
    %v871 = vrot.slane %v199, %v870
    %873 = vbcast.lane.b32.xlu0 %v871, 256
    %v874 = vpop.permute.xlu0 %873
    %s876 = sor.u32 256, 8
    %877 = vbcast.lane.b32.xlu0 %v871, %s876
    %v878 = vpop.permute.xlu0 %877
    %s880 = sor.u32 256, 16
    %881 = vbcast.lane.b32.xlu0 %v871, %s880
    %v882 = vpop.permute.xlu0 %881
    %s884 = sor.u32 256, 24
    %885 = vbcast.lane.b32.xlu0 %v871, %s884
    %v886 = vpop.permute.xlu0 %885
    %vm887 = vcmask 7168
    %v888 = vsel %vm887, %v741, 1.0
    %v889 = vsel %vm887, %v745, 1.0
    %v890 = vsel %vm887, %v749, 1.0
    %v891 = vsel %vm887, %v753, 1.0
    %v892 = vsel %vm887, %v760, 1.0
    %v893 = vsel %vm887, %v764, 1.0
    %v894 = vsel %vm887, %v768, 1.0
    %v895 = vsel %vm887, %v772, 1.0
    %v896 = vsel %vm887, %v779, 1.0
    %v897 = vsel %vm887, %v783, 1.0
    %v898 = vsel %vm887, %v787, 1.0
    %v899 = vsel %vm887, %v791, 1.0
    %v900 = vsel %vm887, %v798, 1.0
    %v901 = vsel %vm887, %v802, 1.0
    %v902 = vsel %vm887, %v806, 1.0
    %v903 = vsel %vm887, %v810, 1.0
    %v904 = vsel %vm887, %v817, 1.0
    %v905 = vsel %vm887, %v821, 1.0
    %v906 = vsel %vm887, %v825, 1.0
    %v907 = vsel %vm887, %v829, 1.0
    %v908 = vsel %vm887, %v836, 1.0
    %v909 = vsel %vm887, %v840, 1.0
    %v910 = vsel %vm887, %v844, 1.0
    %v911 = vsel %vm887, %v848, 1.0
    %v912 = vsel %vm887, %v855, 1.0
    %v913 = vsel %vm887, %v859, 1.0
    %v914 = vsel %vm887, %v863, 1.0
    %v915 = vsel %vm887, %v867, 1.0
    %v916 = vsel %vm887, %v874, 1.0
    %v917 = vsel %vm887, %v878, 1.0
    %v918 = vsel %vm887, %v882, 1.0
    %v919 = vsel %vm887, %v886, 1.0
    %v921 = vsel %vm119, %v672, 0
    %v924 = vsel %vm119, %v674, 0
    %v927 = vsel %vm119, %v676, 0
    %v930 = vsel %vm119, %v678, 0
    %932 = vmatprep.subr.mxu0 0.0
    %933 = vmatpush1.msra.mxu0 0.0
    %934 = vmatprep.subr.mxu0 0.0
    %935 = vmatpush1.msra.mxu0 0.0
    %936 = vmatprep.subr.mxu0 0.0
    %937 = vmatpush1.msra.mxu0 0.0
    %938 = vmatprep.subr.mxu0 0.0
    %939 = vmatpush1.msra.mxu0 0.0
    %940 = vmatprep.subr.mxu0 0.0
    %941 = vmatpush1.msra.mxu0 0.0
    %942 = vmatprep.subr.mxu0 0.0
    %943 = vmatpush1.msra.mxu0 0.0
    %944 = vmatprep.subr.mxu0 0.0
    %945 = vmatpush1.msra.mxu0 0.0
    %946 = vmatprep.subr.mxu0 0.0
    %947 = vmatpush1.msra.mxu0 0.0
    %948 = vmatprep.subr.mxu0 0.0
    %949 = vmatpush1.msra.mxu0 0.0
    %950 = vmatprep.subr.mxu0 0.0
    %951 = vmatpush1.msra.mxu0 0.0
    %952 = vmatprep.subr.mxu0 0.0
    %953 = vmatpush1.msra.mxu0 0.0
    %954 = vmatprep.subr.mxu0 0.0
    %955 = vmatpush1.msra.mxu0 0.0
    %956 = vmatprep.subr.mxu0 0.0
    %957 = vmatpush1.msra.mxu0 %v891
    %958 = vmatprep.subr.mxu0 0.0
    %959 = vmatpush1.msra.mxu0 %v890
    %960 = vmatprep.subr.mxu0 0.0
    %961 = vmatpush1.msra.mxu0 %v889
    %962 = vmatprep.subr.mxu0 0.0
    %963 = vmatpush1.msra.mxu0 %v888
    %964 = vmatprep.subr.mxu0 0.0
    %965 = vmatpush2.msra.mxu0 0.0
    %966 = vmatprep.subr.mxu0 0.0
    %967 = vmatpush2.msra.mxu0 0.0
    %968 = vmatprep.subr.mxu0 0.0
    %969 = vmatpush2.msra.mxu0 0.0
    %970 = vmatprep.subr.mxu0 0.0
    %971 = vmatpush2.msra.mxu0 0.0
    %972 = vmatprep.subr.mxu0 0.0
    %973 = vmatpush2.msra.mxu0 0.0
    %974 = vmatprep.subr.mxu0 0.0
    %975 = vmatpush2.msra.mxu0 0.0
    %976 = vmatprep.subr.mxu0 0.0
    %977 = vmatpush2.msra.mxu0 0.0
    %978 = vmatprep.subr.mxu0 0.0
    %979 = vmatpush2.msra.mxu0 0.0
    %980 = vmatprep.subr.mxu0 0.0
    %981 = vmatpush2.msra.mxu0 0.0
    %982 = vmatprep.subr.mxu0 0.0
    %983 = vmatpush2.msra.mxu0 0.0
    %984 = vmatprep.subr.mxu0 0.0
    %985 = vmatpush2.msra.mxu0 0.0
    %986 = vmatprep.subr.mxu0 0.0
    %987 = vmatpush2.msra.mxu0 0.0
    %988 = vmatprep.subr.mxu0 0.0
    %989 = vmatpush2.msra.mxu0 0.0
    %990 = vmatprep.subr.mxu0 0.0
    %991 = vmatpush2.msra.mxu0 0.0
    %992 = vmatprep.subr.mxu0 0.0
    %993 = vmatpush2.msra.mxu0 0.0
    %994 = vmatprep.subr.mxu0 0.0
    %995 = vmatpush2.msra.mxu0 0.0
    %996 = vmatprep.mubr.f32.mxu0 0.0
    %997 = vmatmul.mubr.f32.gmra.mxu0 %v921
    %v998 = vpop.f32.mrf.mxu0
    %v999 = vadd.f32 0.0, %v998
    %v1000 = vpop.f32.mrf.mxu0
    %1001 = vmatprep.mubr.f32.mxu0 0.0
    %1002 = vmatmul.mubr.f32.gmra.mxu0 %v924
    %v1003 = vpop.f32.mrf.mxu0
    %v1004 = vadd.f32 0.0, %v1003
    %v1005 = vpop.f32.mrf.mxu0
    %1006 = vmatprep.mubr.f32.mxu0 0.0
    %1007 = vmatmul.mubr.f32.gmra.mxu0 %v927
    %v1008 = vpop.f32.mrf.mxu0
    %v1009 = vadd.f32 0.0, %v1008
    %v1010 = vpop.f32.mrf.mxu0
    %1011 = vmatprep.mubr.f32.mxu0 0.0
    %1012 = vmatmul.mubr.f32.gmra.mxu0 %v930
    %v1013 = vpop.f32.mrf.mxu0
    %v1014 = vadd.f32 0.0, %v1013
    %v1015 = vpop.f32.mrf.mxu0
    %1016 = vdwg.mxu0
    %v1018 = vsel %vm119, %v680, 0
    %v1021 = vsel %vm119, %v682, 0
    %v1024 = vsel %vm119, %v684, 0
    %v1027 = vsel %vm119, %v686, 0
    %1029 = vmatprep.subr.mxu0 0.0
    %1030 = vmatpush1.msra.mxu0 0.0
    %1031 = vmatprep.subr.mxu0 0.0
    %1032 = vmatpush1.msra.mxu0 0.0
    %1033 = vmatprep.subr.mxu0 0.0
    %1034 = vmatpush1.msra.mxu0 0.0
    %1035 = vmatprep.subr.mxu0 0.0
    %1036 = vmatpush1.msra.mxu0 0.0
    %1037 = vmatprep.subr.mxu0 0.0
    %1038 = vmatpush1.msra.mxu0 0.0
    %1039 = vmatprep.subr.mxu0 0.0
    %1040 = vmatpush1.msra.mxu0 0.0
    %1041 = vmatprep.subr.mxu0 0.0
    %1042 = vmatpush1.msra.mxu0 0.0
    %1043 = vmatprep.subr.mxu0 0.0
    %1044 = vmatpush1.msra.mxu0 0.0
    %1045 = vmatprep.subr.mxu0 0.0
    %1046 = vmatpush1.msra.mxu0 0.0
    %1047 = vmatprep.subr.mxu0 0.0
    %1048 = vmatpush1.msra.mxu0 0.0
    %1049 = vmatprep.subr.mxu0 0.0
    %1050 = vmatpush1.msra.mxu0 0.0
    %1051 = vmatprep.subr.mxu0 0.0
    %1052 = vmatpush1.msra.mxu0 0.0
    %1053 = vmatprep.subr.mxu0 0.0
    %1054 = vmatpush1.msra.mxu0 %v895
    %1055 = vmatprep.subr.mxu0 0.0
    %1056 = vmatpush1.msra.mxu0 %v894
    %1057 = vmatprep.subr.mxu0 0.0
    %1058 = vmatpush1.msra.mxu0 %v893
    %1059 = vmatprep.subr.mxu0 0.0
    %1060 = vmatpush1.msra.mxu0 %v892
    %1061 = vmatprep.subr.mxu0 0.0
    %1062 = vmatpush2.msra.mxu0 0.0
    %1063 = vmatprep.subr.mxu0 0.0
    %1064 = vmatpush2.msra.mxu0 0.0
    %1065 = vmatprep.subr.mxu0 0.0
    %1066 = vmatpush2.msra.mxu0 0.0
    %1067 = vmatprep.subr.mxu0 0.0
    %1068 = vmatpush2.msra.mxu0 0.0
    %1069 = vmatprep.subr.mxu0 0.0
    %1070 = vmatpush2.msra.mxu0 0.0
    %1071 = vmatprep.subr.mxu0 0.0
    %1072 = vmatpush2.msra.mxu0 0.0
    %1073 = vmatprep.subr.mxu0 0.0
    %1074 = vmatpush2.msra.mxu0 0.0
    %1075 = vmatprep.subr.mxu0 0.0
    %1076 = vmatpush2.msra.mxu0 0.0
    %1077 = vmatprep.subr.mxu0 0.0
    %1078 = vmatpush2.msra.mxu0 0.0
    %1079 = vmatprep.subr.mxu0 0.0
    %1080 = vmatpush2.msra.mxu0 0.0
    %1081 = vmatprep.subr.mxu0 0.0
    %1082 = vmatpush2.msra.mxu0 0.0
    %1083 = vmatprep.subr.mxu0 0.0
    %1084 = vmatpush2.msra.mxu0 0.0
    %1085 = vmatprep.subr.mxu0 0.0
    %1086 = vmatpush2.msra.mxu0 0.0
    %1087 = vmatprep.subr.mxu0 0.0
    %1088 = vmatpush2.msra.mxu0 0.0
    %1089 = vmatprep.subr.mxu0 0.0
    %1090 = vmatpush2.msra.mxu0 0.0
    %1091 = vmatprep.subr.mxu0 0.0
    %1092 = vmatpush2.msra.mxu0 0.0
    %1093 = vmatprep.mubr.f32.mxu0 0.0
    %1094 = vmatmul.mubr.f32.gmra.mxu0 %v1018
    %v1095 = vpop.f32.mrf.mxu0
    %v1096 = vadd.f32 0.0, %v1095
    %v1097 = vpop.f32.mrf.mxu0
    %1098 = vmatprep.mubr.f32.mxu0 0.0
    %1099 = vmatmul.mubr.f32.gmra.mxu0 %v1021
    %v1100 = vpop.f32.mrf.mxu0
    %v1101 = vadd.f32 0.0, %v1100
    %v1102 = vpop.f32.mrf.mxu0
    %1103 = vmatprep.mubr.f32.mxu0 0.0
    %1104 = vmatmul.mubr.f32.gmra.mxu0 %v1024
    %v1105 = vpop.f32.mrf.mxu0
    %v1106 = vadd.f32 0.0, %v1105
    %v1107 = vpop.f32.mrf.mxu0
    %1108 = vmatprep.mubr.f32.mxu0 0.0
    %1109 = vmatmul.mubr.f32.gmra.mxu0 %v1027
    %v1110 = vpop.f32.mrf.mxu0
    %v1111 = vadd.f32 0.0, %v1110
    %v1112 = vpop.f32.mrf.mxu0
    %1113 = vdwg.mxu0
    %v1115 = vsel %vm119, %v688, 0
    %v1118 = vsel %vm119, %v690, 0
    %v1121 = vsel %vm119, %v692, 0
    %v1124 = vsel %vm119, %v694, 0
    %1126 = vmatprep.subr.mxu0 0.0
    %1127 = vmatpush1.msra.mxu0 0.0
    %1128 = vmatprep.subr.mxu0 0.0
    %1129 = vmatpush1.msra.mxu0 0.0
    %1130 = vmatprep.subr.mxu0 0.0
    %1131 = vmatpush1.msra.mxu0 0.0
    %1132 = vmatprep.subr.mxu0 0.0
    %1133 = vmatpush1.msra.mxu0 0.0
    %1134 = vmatprep.subr.mxu0 0.0
    %1135 = vmatpush1.msra.mxu0 0.0
    %1136 = vmatprep.subr.mxu0 0.0
    %1137 = vmatpush1.msra.mxu0 0.0
    %1138 = vmatprep.subr.mxu0 0.0
    %1139 = vmatpush1.msra.mxu0 0.0
    %1140 = vmatprep.subr.mxu0 0.0
    %1141 = vmatpush1.msra.mxu0 0.0
    %1142 = vmatprep.subr.mxu0 0.0
    %1143 = vmatpush1.msra.mxu0 0.0
    %1144 = vmatprep.subr.mxu0 0.0
    %1145 = vmatpush1.msra.mxu0 0.0
    %1146 = vmatprep.subr.mxu0 0.0
    %1147 = vmatpush1.msra.mxu0 0.0
    %1148 = vmatprep.subr.mxu0 0.0
    %1149 = vmatpush1.msra.mxu0 0.0
    %1150 = vmatprep.subr.mxu0 0.0
    %1151 = vmatpush1.msra.mxu0 %v899
    %1152 = vmatprep.subr.mxu0 0.0
    %1153 = vmatpush1.msra.mxu0 %v898
    %1154 = vmatprep.subr.mxu0 0.0
    %1155 = vmatpush1.msra.mxu0 %v897
    %1156 = vmatprep.subr.mxu0 0.0
    %1157 = vmatpush1.msra.mxu0 %v896
    %1158 = vmatprep.subr.mxu0 0.0
    %1159 = vmatpush2.msra.mxu0 0.0
    %1160 = vmatprep.subr.mxu0 0.0
    %1161 = vmatpush2.msra.mxu0 0.0
    %1162 = vmatprep.subr.mxu0 0.0
    %1163 = vmatpush2.msra.mxu0 0.0
    %1164 = vmatprep.subr.mxu0 0.0
    %1165 = vmatpush2.msra.mxu0 0.0
    %1166 = vmatprep.subr.mxu0 0.0
    %1167 = vmatpush2.msra.mxu0 0.0
    %1168 = vmatprep.subr.mxu0 0.0
    %1169 = vmatpush2.msra.mxu0 0.0
    %1170 = vmatprep.subr.mxu0 0.0
    %1171 = vmatpush2.msra.mxu0 0.0
    %1172 = vmatprep.subr.mxu0 0.0
    %1173 = vmatpush2.msra.mxu0 0.0
    %1174 = vmatprep.subr.mxu0 0.0
    %1175 = vmatpush2.msra.mxu0 0.0
    %1176 = vmatprep.subr.mxu0 0.0
    %1177 = vmatpush2.msra.mxu0 0.0
    %1178 = vmatprep.subr.mxu0 0.0
    %1179 = vmatpush2.msra.mxu0 0.0
    %1180 = vmatprep.subr.mxu0 0.0
    %1181 = vmatpush2.msra.mxu0 0.0
    %1182 = vmatprep.subr.mxu0 0.0
    %1183 = vmatpush2.msra.mxu0 0.0
    %1184 = vmatprep.subr.mxu0 0.0
    %1185 = vmatpush2.msra.mxu0 0.0
    %1186 = vmatprep.subr.mxu0 0.0
    %1187 = vmatpush2.msra.mxu0 0.0
    %1188 = vmatprep.subr.mxu0 0.0
    %1189 = vmatpush2.msra.mxu0 0.0
    %1190 = vmatprep.mubr.f32.mxu0 0.0
    %1191 = vmatmul.mubr.f32.gmra.mxu0 %v1115
    %v1192 = vpop.f32.mrf.mxu0
    %v1193 = vadd.f32 0.0, %v1192
    %v1194 = vpop.f32.mrf.mxu0
    %1195 = vmatprep.mubr.f32.mxu0 0.0
    %1196 = vmatmul.mubr.f32.gmra.mxu0 %v1118
    %v1197 = vpop.f32.mrf.mxu0
    %v1198 = vadd.f32 0.0, %v1197
    %v1199 = vpop.f32.mrf.mxu0
    %1200 = vmatprep.mubr.f32.mxu0 0.0
    %1201 = vmatmul.mubr.f32.gmra.mxu0 %v1121
    %v1202 = vpop.f32.mrf.mxu0
    %v1203 = vadd.f32 0.0, %v1202
    %v1204 = vpop.f32.mrf.mxu0
    %1205 = vmatprep.mubr.f32.mxu0 0.0
    %1206 = vmatmul.mubr.f32.gmra.mxu0 %v1124
    %v1207 = vpop.f32.mrf.mxu0
    %v1208 = vadd.f32 0.0, %v1207
    %v1209 = vpop.f32.mrf.mxu0
    %1210 = vdwg.mxu0
    %v1212 = vsel %vm119, %v696, 0
    %v1215 = vsel %vm119, %v698, 0
    %v1218 = vsel %vm119, %v700, 0
    %v1221 = vsel %vm119, %v702, 0
    %1223 = vmatprep.subr.mxu0 0.0
    %1224 = vmatpush1.msra.mxu0 0.0
    %1225 = vmatprep.subr.mxu0 0.0
    %1226 = vmatpush1.msra.mxu0 0.0
    %1227 = vmatprep.subr.mxu0 0.0
    %1228 = vmatpush1.msra.mxu0 0.0
    %1229 = vmatprep.subr.mxu0 0.0
    %1230 = vmatpush1.msra.mxu0 0.0
    %1231 = vmatprep.subr.mxu0 0.0
    %1232 = vmatpush1.msra.mxu0 0.0
    %1233 = vmatprep.subr.mxu0 0.0
    %1234 = vmatpush1.msra.mxu0 0.0
    %1235 = vmatprep.subr.mxu0 0.0
    %1236 = vmatpush1.msra.mxu0 0.0
    %1237 = vmatprep.subr.mxu0 0.0
    %1238 = vmatpush1.msra.mxu0 0.0
    %1239 = vmatprep.subr.mxu0 0.0
    %1240 = vmatpush1.msra.mxu0 0.0
    %1241 = vmatprep.subr.mxu0 0.0
    %1242 = vmatpush1.msra.mxu0 0.0
    %1243 = vmatprep.subr.mxu0 0.0
    %1244 = vmatpush1.msra.mxu0 0.0
    %1245 = vmatprep.subr.mxu0 0.0
    %1246 = vmatpush1.msra.mxu0 0.0
    %1247 = vmatprep.subr.mxu0 0.0
    %1248 = vmatpush1.msra.mxu0 %v903
    %1249 = vmatprep.subr.mxu0 0.0
    %1250 = vmatpush1.msra.mxu0 %v902
    %1251 = vmatprep.subr.mxu0 0.0
    %1252 = vmatpush1.msra.mxu0 %v901
    %1253 = vmatprep.subr.mxu0 0.0
    %1254 = vmatpush1.msra.mxu0 %v900
    %1255 = vmatprep.subr.mxu0 0.0
    %1256 = vmatpush2.msra.mxu0 0.0
    %1257 = vmatprep.subr.mxu0 0.0
    %1258 = vmatpush2.msra.mxu0 0.0
    %1259 = vmatprep.subr.mxu0 0.0
    %1260 = vmatpush2.msra.mxu0 0.0
    %1261 = vmatprep.subr.mxu0 0.0
    %1262 = vmatpush2.msra.mxu0 0.0
    %1263 = vmatprep.subr.mxu0 0.0
    %1264 = vmatpush2.msra.mxu0 0.0
    %1265 = vmatprep.subr.mxu0 0.0
    %1266 = vmatpush2.msra.mxu0 0.0
    %1267 = vmatprep.subr.mxu0 0.0
    %1268 = vmatpush2.msra.mxu0 0.0
    %1269 = vmatprep.subr.mxu0 0.0
    %1270 = vmatpush2.msra.mxu0 0.0
    %1271 = vmatprep.subr.mxu0 0.0
    %1272 = vmatpush2.msra.mxu0 0.0
    %1273 = vmatprep.subr.mxu0 0.0
    %1274 = vmatpush2.msra.mxu0 0.0
    %1275 = vmatprep.subr.mxu0 0.0
    %1276 = vmatpush2.msra.mxu0 0.0
    %1277 = vmatprep.subr.mxu0 0.0
    %1278 = vmatpush2.msra.mxu0 0.0
    %1279 = vmatprep.subr.mxu0 0.0
    %1280 = vmatpush2.msra.mxu0 0.0
    %1281 = vmatprep.subr.mxu0 0.0
    %1282 = vmatpush2.msra.mxu0 0.0
    %1283 = vmatprep.subr.mxu0 0.0
    %1284 = vmatpush2.msra.mxu0 0.0
    %1285 = vmatprep.subr.mxu0 0.0
    %1286 = vmatpush2.msra.mxu0 0.0
    %1287 = vmatprep.mubr.f32.mxu0 0.0
    %1288 = vmatmul.mubr.f32.gmra.mxu0 %v1212
    %v1289 = vpop.f32.mrf.mxu0
    %v1290 = vadd.f32 0.0, %v1289
    %v1291 = vpop.f32.mrf.mxu0
    %1292 = vmatprep.mubr.f32.mxu0 0.0
    %1293 = vmatmul.mubr.f32.gmra.mxu0 %v1215
    %v1294 = vpop.f32.mrf.mxu0
    %v1295 = vadd.f32 0.0, %v1294
    %v1296 = vpop.f32.mrf.mxu0
    %1297 = vmatprep.mubr.f32.mxu0 0.0
    %1298 = vmatmul.mubr.f32.gmra.mxu0 %v1218
    %v1299 = vpop.f32.mrf.mxu0
    %v1300 = vadd.f32 0.0, %v1299
    %v1301 = vpop.f32.mrf.mxu0
    %1302 = vmatprep.mubr.f32.mxu0 0.0
    %1303 = vmatmul.mubr.f32.gmra.mxu0 %v1221
    %v1304 = vpop.f32.mrf.mxu0
    %v1305 = vadd.f32 0.0, %v1304
    %v1306 = vpop.f32.mrf.mxu0
    %1307 = vdwg.mxu0
    %v1309 = vsel %vm119, %v704, 0
    %v1312 = vsel %vm119, %v706, 0
    %v1315 = vsel %vm119, %v708, 0
    %v1318 = vsel %vm119, %v710, 0
    %1320 = vmatprep.subr.mxu0 0.0
    %1321 = vmatpush1.msra.mxu0 0.0
    %1322 = vmatprep.subr.mxu0 0.0
    %1323 = vmatpush1.msra.mxu0 0.0
    %1324 = vmatprep.subr.mxu0 0.0
    %1325 = vmatpush1.msra.mxu0 0.0
    %1326 = vmatprep.subr.mxu0 0.0
    %1327 = vmatpush1.msra.mxu0 0.0
    %1328 = vmatprep.subr.mxu0 0.0
    %1329 = vmatpush1.msra.mxu0 0.0
    %1330 = vmatprep.subr.mxu0 0.0
    %1331 = vmatpush1.msra.mxu0 0.0
    %1332 = vmatprep.subr.mxu0 0.0
    %1333 = vmatpush1.msra.mxu0 0.0
    %1334 = vmatprep.subr.mxu0 0.0
    %1335 = vmatpush1.msra.mxu0 0.0
    %1336 = vmatprep.subr.mxu0 0.0
    %1337 = vmatpush1.msra.mxu0 0.0
    %1338 = vmatprep.subr.mxu0 0.0
    %1339 = vmatpush1.msra.mxu0 0.0
    %1340 = vmatprep.subr.mxu0 0.0
    %1341 = vmatpush1.msra.mxu0 0.0
    %1342 = vmatprep.subr.mxu0 0.0
    %1343 = vmatpush1.msra.mxu0 0.0
    %1344 = vmatprep.subr.mxu0 0.0
    %1345 = vmatpush1.msra.mxu0 %v907
    %1346 = vmatprep.subr.mxu0 0.0
    %1347 = vmatpush1.msra.mxu0 %v906
    %1348 = vmatprep.subr.mxu0 0.0
    %1349 = vmatpush1.msra.mxu0 %v905
    %1350 = vmatprep.subr.mxu0 0.0
    %1351 = vmatpush1.msra.mxu0 %v904
    %1352 = vmatprep.subr.mxu0 0.0
    %1353 = vmatpush2.msra.mxu0 0.0
    %1354 = vmatprep.subr.mxu0 0.0
    %1355 = vmatpush2.msra.mxu0 0.0
    %1356 = vmatprep.subr.mxu0 0.0
    %1357 = vmatpush2.msra.mxu0 0.0
    %1358 = vmatprep.subr.mxu0 0.0
    %1359 = vmatpush2.msra.mxu0 0.0
    %1360 = vmatprep.subr.mxu0 0.0
    %1361 = vmatpush2.msra.mxu0 0.0
    %1362 = vmatprep.subr.mxu0 0.0
    %1363 = vmatpush2.msra.mxu0 0.0
    %1364 = vmatprep.subr.mxu0 0.0
    %1365 = vmatpush2.msra.mxu0 0.0
    %1366 = vmatprep.subr.mxu0 0.0
    %1367 = vmatpush2.msra.mxu0 0.0
    %1368 = vmatprep.subr.mxu0 0.0
    %1369 = vmatpush2.msra.mxu0 0.0
    %1370 = vmatprep.subr.mxu0 0.0
    %1371 = vmatpush2.msra.mxu0 0.0
    %1372 = vmatprep.subr.mxu0 0.0
    %1373 = vmatpush2.msra.mxu0 0.0
    %1374 = vmatprep.subr.mxu0 0.0
    %1375 = vmatpush2.msra.mxu0 0.0
    %1376 = vmatprep.subr.mxu0 0.0
    %1377 = vmatpush2.msra.mxu0 0.0
    %1378 = vmatprep.subr.mxu0 0.0
    %1379 = vmatpush2.msra.mxu0 0.0
    %1380 = vmatprep.subr.mxu0 0.0
    %1381 = vmatpush2.msra.mxu0 0.0
    %1382 = vmatprep.subr.mxu0 0.0
    %1383 = vmatpush2.msra.mxu0 0.0
    %1384 = vmatprep.mubr.f32.mxu0 0.0
    %1385 = vmatmul.mubr.f32.gmra.mxu0 %v1309
    %v1386 = vpop.f32.mrf.mxu0
    %v1387 = vadd.f32 0.0, %v1386
    %v1388 = vpop.f32.mrf.mxu0
    %1389 = vmatprep.mubr.f32.mxu0 0.0
    %1390 = vmatmul.mubr.f32.gmra.mxu0 %v1312
    %v1391 = vpop.f32.mrf.mxu0
    %v1392 = vadd.f32 0.0, %v1391
    %v1393 = vpop.f32.mrf.mxu0
    %1394 = vmatprep.mubr.f32.mxu0 0.0
    %1395 = vmatmul.mubr.f32.gmra.mxu0 %v1315
    %v1396 = vpop.f32.mrf.mxu0
    %v1397 = vadd.f32 0.0, %v1396
    %v1398 = vpop.f32.mrf.mxu0
    %1399 = vmatprep.mubr.f32.mxu0 0.0
    %1400 = vmatmul.mubr.f32.gmra.mxu0 %v1318
    %v1401 = vpop.f32.mrf.mxu0
    %v1402 = vadd.f32 0.0, %v1401
    %v1403 = vpop.f32.mrf.mxu0
    %1404 = vdwg.mxu0
    %v1406 = vsel %vm119, %v712, 0
    %v1409 = vsel %vm119, %v714, 0
    %v1412 = vsel %vm119, %v716, 0
    %v1415 = vsel %vm119, %v718, 0
    %1417 = vmatprep.subr.mxu0 0.0
    %1418 = vmatpush1.msra.mxu0 0.0
    %1419 = vmatprep.subr.mxu0 0.0
    %1420 = vmatpush1.msra.mxu0 0.0
    %1421 = vmatprep.subr.mxu0 0.0
    %1422 = vmatpush1.msra.mxu0 0.0
    %1423 = vmatprep.subr.mxu0 0.0
    %1424 = vmatpush1.msra.mxu0 0.0
    %1425 = vmatprep.subr.mxu0 0.0
    %1426 = vmatpush1.msra.mxu0 0.0
    %1427 = vmatprep.subr.mxu0 0.0
    %1428 = vmatpush1.msra.mxu0 0.0
    %1429 = vmatprep.subr.mxu0 0.0
    %1430 = vmatpush1.msra.mxu0 0.0
    %1431 = vmatprep.subr.mxu0 0.0
    %1432 = vmatpush1.msra.mxu0 0.0
    %1433 = vmatprep.subr.mxu0 0.0
    %1434 = vmatpush1.msra.mxu0 0.0
    %1435 = vmatprep.subr.mxu0 0.0
    %1436 = vmatpush1.msra.mxu0 0.0
    %1437 = vmatprep.subr.mxu0 0.0
    %1438 = vmatpush1.msra.mxu0 0.0
    %1439 = vmatprep.subr.mxu0 0.0
    %1440 = vmatpush1.msra.mxu0 0.0
    %1441 = vmatprep.subr.mxu0 0.0
    %1442 = vmatpush1.msra.mxu0 %v911
    %1443 = vmatprep.subr.mxu0 0.0
    %1444 = vmatpush1.msra.mxu0 %v910
    %1445 = vmatprep.subr.mxu0 0.0
    %1446 = vmatpush1.msra.mxu0 %v909
    %1447 = vmatprep.subr.mxu0 0.0
    %1448 = vmatpush1.msra.mxu0 %v908
    %1449 = vmatprep.subr.mxu0 0.0
    %1450 = vmatpush2.msra.mxu0 0.0
    %1451 = vmatprep.subr.mxu0 0.0
    %1452 = vmatpush2.msra.mxu0 0.0
    %1453 = vmatprep.subr.mxu0 0.0
    %1454 = vmatpush2.msra.mxu0 0.0
    %1455 = vmatprep.subr.mxu0 0.0
    %1456 = vmatpush2.msra.mxu0 0.0
    %1457 = vmatprep.subr.mxu0 0.0
    %1458 = vmatpush2.msra.mxu0 0.0
    %1459 = vmatprep.subr.mxu0 0.0
    %1460 = vmatpush2.msra.mxu0 0.0
    %1461 = vmatprep.subr.mxu0 0.0
    %1462 = vmatpush2.msra.mxu0 0.0
    %1463 = vmatprep.subr.mxu0 0.0
    %1464 = vmatpush2.msra.mxu0 0.0
    %1465 = vmatprep.subr.mxu0 0.0
    %1466 = vmatpush2.msra.mxu0 0.0
    %1467 = vmatprep.subr.mxu0 0.0
    %1468 = vmatpush2.msra.mxu0 0.0
    %1469 = vmatprep.subr.mxu0 0.0
    %1470 = vmatpush2.msra.mxu0 0.0
    %1471 = vmatprep.subr.mxu0 0.0
    %1472 = vmatpush2.msra.mxu0 0.0
    %1473 = vmatprep.subr.mxu0 0.0
    %1474 = vmatpush2.msra.mxu0 0.0
    %1475 = vmatprep.subr.mxu0 0.0
    %1476 = vmatpush2.msra.mxu0 0.0
    %1477 = vmatprep.subr.mxu0 0.0
    %1478 = vmatpush2.msra.mxu0 0.0
    %1479 = vmatprep.subr.mxu0 0.0
    %1480 = vmatpush2.msra.mxu0 0.0
    %1481 = vmatprep.mubr.f32.mxu0 0.0
    %1482 = vmatmul.mubr.f32.gmra.mxu0 %v1406
    %v1483 = vpop.f32.mrf.mxu0
    %v1484 = vadd.f32 0.0, %v1483
    %v1485 = vpop.f32.mrf.mxu0
    %1486 = vmatprep.mubr.f32.mxu0 0.0
    %1487 = vmatmul.mubr.f32.gmra.mxu0 %v1409
    %v1488 = vpop.f32.mrf.mxu0
    %v1489 = vadd.f32 0.0, %v1488
    %v1490 = vpop.f32.mrf.mxu0
    %1491 = vmatprep.mubr.f32.mxu0 0.0
    %1492 = vmatmul.mubr.f32.gmra.mxu0 %v1412
    %v1493 = vpop.f32.mrf.mxu0
    %v1494 = vadd.f32 0.0, %v1493
    %v1495 = vpop.f32.mrf.mxu0
    %1496 = vmatprep.mubr.f32.mxu0 0.0
    %1497 = vmatmul.mubr.f32.gmra.mxu0 %v1415
    %v1498 = vpop.f32.mrf.mxu0
    %v1499 = vadd.f32 0.0, %v1498
    %v1500 = vpop.f32.mrf.mxu0
    %1501 = vdwg.mxu0
    %v1503 = vsel %vm119, %v720, 0
    %v1506 = vsel %vm119, %v722, 0
    %v1509 = vsel %vm119, %v724, 0
    %v1512 = vsel %vm119, %v726, 0
    %1514 = vmatprep.subr.mxu0 0.0
    %1515 = vmatpush1.msra.mxu0 0.0
    %1516 = vmatprep.subr.mxu0 0.0
    %1517 = vmatpush1.msra.mxu0 0.0
    %1518 = vmatprep.subr.mxu0 0.0
    %1519 = vmatpush1.msra.mxu0 0.0
    %1520 = vmatprep.subr.mxu0 0.0
    %1521 = vmatpush1.msra.mxu0 0.0
    %1522 = vmatprep.subr.mxu0 0.0
    %1523 = vmatpush1.msra.mxu0 0.0
    %1524 = vmatprep.subr.mxu0 0.0
    %1525 = vmatpush1.msra.mxu0 0.0
    %1526 = vmatprep.subr.mxu0 0.0
    %1527 = vmatpush1.msra.mxu0 0.0
    %1528 = vmatprep.subr.mxu0 0.0
    %1529 = vmatpush1.msra.mxu0 0.0
    %1530 = vmatprep.subr.mxu0 0.0
    %1531 = vmatpush1.msra.mxu0 0.0
    %1532 = vmatprep.subr.mxu0 0.0
    %1533 = vmatpush1.msra.mxu0 0.0
    %1534 = vmatprep.subr.mxu0 0.0
    %1535 = vmatpush1.msra.mxu0 0.0
    %1536 = vmatprep.subr.mxu0 0.0
    %1537 = vmatpush1.msra.mxu0 0.0
    %1538 = vmatprep.subr.mxu0 0.0
    %1539 = vmatpush1.msra.mxu0 %v915
    %1540 = vmatprep.subr.mxu0 0.0
    %1541 = vmatpush1.msra.mxu0 %v914
    %1542 = vmatprep.subr.mxu0 0.0
    %1543 = vmatpush1.msra.mxu0 %v913
    %1544 = vmatprep.subr.mxu0 0.0
    %1545 = vmatpush1.msra.mxu0 %v912
    %1546 = vmatprep.subr.mxu0 0.0
    %1547 = vmatpush2.msra.mxu0 0.0
    %1548 = vmatprep.subr.mxu0 0.0
    %1549 = vmatpush2.msra.mxu0 0.0
    %1550 = vmatprep.subr.mxu0 0.0
    %1551 = vmatpush2.msra.mxu0 0.0
    %1552 = vmatprep.subr.mxu0 0.0
    %1553 = vmatpush2.msra.mxu0 0.0
    %1554 = vmatprep.subr.mxu0 0.0
    %1555 = vmatpush2.msra.mxu0 0.0
    %1556 = vmatprep.subr.mxu0 0.0
    %1557 = vmatpush2.msra.mxu0 0.0
    %1558 = vmatprep.subr.mxu0 0.0
    %1559 = vmatpush2.msra.mxu0 0.0
    %1560 = vmatprep.subr.mxu0 0.0
    %1561 = vmatpush2.msra.mxu0 0.0
    %1562 = vmatprep.subr.mxu0 0.0
    %1563 = vmatpush2.msra.mxu0 0.0
    %1564 = vmatprep.subr.mxu0 0.0
    %1565 = vmatpush2.msra.mxu0 0.0
    %1566 = vmatprep.subr.mxu0 0.0
    %1567 = vmatpush2.msra.mxu0 0.0
    %1568 = vmatprep.subr.mxu0 0.0
    %1569 = vmatpush2.msra.mxu0 0.0
    %1570 = vmatprep.subr.mxu0 0.0
    %1571 = vmatpush2.msra.mxu0 0.0
    %1572 = vmatprep.subr.mxu0 0.0
    %1573 = vmatpush2.msra.mxu0 0.0
    %1574 = vmatprep.subr.mxu0 0.0
    %1575 = vmatpush2.msra.mxu0 0.0
    %1576 = vmatprep.subr.mxu0 0.0
    %1577 = vmatpush2.msra.mxu0 0.0
    %1578 = vmatprep.mubr.f32.mxu0 0.0
    %1579 = vmatmul.mubr.f32.gmra.mxu0 %v1503
    %v1580 = vpop.f32.mrf.mxu0
    %v1581 = vadd.f32 0.0, %v1580
    %v1582 = vpop.f32.mrf.mxu0
    %1583 = vmatprep.mubr.f32.mxu0 0.0
    %1584 = vmatmul.mubr.f32.gmra.mxu0 %v1506
    %v1585 = vpop.f32.mrf.mxu0
    %v1586 = vadd.f32 0.0, %v1585
    %v1587 = vpop.f32.mrf.mxu0
    %1588 = vmatprep.mubr.f32.mxu0 0.0
    %1589 = vmatmul.mubr.f32.gmra.mxu0 %v1509
    %v1590 = vpop.f32.mrf.mxu0
    %v1591 = vadd.f32 0.0, %v1590
    %v1592 = vpop.f32.mrf.mxu0
    %1593 = vmatprep.mubr.f32.mxu0 0.0
    %1594 = vmatmul.mubr.f32.gmra.mxu0 %v1512
    %v1595 = vpop.f32.mrf.mxu0
    %v1596 = vadd.f32 0.0, %v1595
    %v1597 = vpop.f32.mrf.mxu0
    %1598 = vdwg.mxu0
    %v1600 = vsel %vm119, %v728, 0
    %v1603 = vsel %vm119, %v730, 0
    %v1606 = vsel %vm119, %v732, 0
    %v1609 = vsel %vm119, %v734, 0
    %1611 = vmatprep.subr.mxu0 0.0
    %1612 = vmatpush1.msra.mxu0 0.0
    %1613 = vmatprep.subr.mxu0 0.0
    %1614 = vmatpush1.msra.mxu0 0.0
    %1615 = vmatprep.subr.mxu0 0.0
    %1616 = vmatpush1.msra.mxu0 0.0
    %1617 = vmatprep.subr.mxu0 0.0
    %1618 = vmatpush1.msra.mxu0 0.0
    %1619 = vmatprep.subr.mxu0 0.0
    %1620 = vmatpush1.msra.mxu0 0.0
    %1621 = vmatprep.subr.mxu0 0.0
    %1622 = vmatpush1.msra.mxu0 0.0
    %1623 = vmatprep.subr.mxu0 0.0
    %1624 = vmatpush1.msra.mxu0 0.0
    %1625 = vmatprep.subr.mxu0 0.0
    %1626 = vmatpush1.msra.mxu0 0.0
    %1627 = vmatprep.subr.mxu0 0.0
    %1628 = vmatpush1.msra.mxu0 0.0
    %1629 = vmatprep.subr.mxu0 0.0
    %1630 = vmatpush1.msra.mxu0 0.0
    %1631 = vmatprep.subr.mxu0 0.0
    %1632 = vmatpush1.msra.mxu0 0.0
    %1633 = vmatprep.subr.mxu0 0.0
    %1634 = vmatpush1.msra.mxu0 0.0
    %1635 = vmatprep.subr.mxu0 0.0
    %1636 = vmatpush1.msra.mxu0 %v919
    %1637 = vmatprep.subr.mxu0 0.0
    %1638 = vmatpush1.msra.mxu0 %v918
    %1639 = vmatprep.subr.mxu0 0.0
    %1640 = vmatpush1.msra.mxu0 %v917
    %1641 = vmatprep.subr.mxu0 0.0
    %1642 = vmatpush1.msra.mxu0 %v916
    %1643 = vmatprep.subr.mxu0 0.0
    %1644 = vmatpush2.msra.mxu0 0.0
    %1645 = vmatprep.subr.mxu0 0.0
    %1646 = vmatpush2.msra.mxu0 0.0
    %1647 = vmatprep.subr.mxu0 0.0
    %1648 = vmatpush2.msra.mxu0 0.0
    %1649 = vmatprep.subr.mxu0 0.0
    %1650 = vmatpush2.msra.mxu0 0.0
    %1651 = vmatprep.subr.mxu0 0.0
    %1652 = vmatpush2.msra.mxu0 0.0
    %1653 = vmatprep.subr.mxu0 0.0
    %1654 = vmatpush2.msra.mxu0 0.0
    %1655 = vmatprep.subr.mxu0 0.0
    %1656 = vmatpush2.msra.mxu0 0.0
    %1657 = vmatprep.subr.mxu0 0.0
    %1658 = vmatpush2.msra.mxu0 0.0
    %1659 = vmatprep.subr.mxu0 0.0
    %1660 = vmatpush2.msra.mxu0 0.0
    %1661 = vmatprep.subr.mxu0 0.0
    %1662 = vmatpush2.msra.mxu0 0.0
    %1663 = vmatprep.subr.mxu0 0.0
    %1664 = vmatpush2.msra.mxu0 0.0
    %1665 = vmatprep.subr.mxu0 0.0
    %1666 = vmatpush2.msra.mxu0 0.0
    %1667 = vmatprep.subr.mxu0 0.0
    %1668 = vmatpush2.msra.mxu0 0.0
    %1669 = vmatprep.subr.mxu0 0.0
    %1670 = vmatpush2.msra.mxu0 0.0
    %1671 = vmatprep.subr.mxu0 0.0
    %1672 = vmatpush2.msra.mxu0 0.0
    %1673 = vmatprep.subr.mxu0 0.0
    %1674 = vmatpush2.msra.mxu0 0.0
    %1675 = vmatprep.mubr.f32.mxu0 0.0
    %1676 = vmatmul.mubr.f32.gmra.mxu0 %v1600
    %v1677 = vpop.f32.mrf.mxu0
    %v1678 = vadd.f32 0.0, %v1677
    %v1679 = vpop.f32.mrf.mxu0
    %1680 = vmatprep.mubr.f32.mxu0 0.0
    %1681 = vmatmul.mubr.f32.gmra.mxu0 %v1603
    %v1682 = vpop.f32.mrf.mxu0
    %v1683 = vadd.f32 0.0, %v1682
    %v1684 = vpop.f32.mrf.mxu0
    %1685 = vmatprep.mubr.f32.mxu0 0.0
    %1686 = vmatmul.mubr.f32.gmra.mxu0 %v1606
    %v1687 = vpop.f32.mrf.mxu0
    %v1688 = vadd.f32 0.0, %v1687
    %v1689 = vpop.f32.mrf.mxu0
    %1690 = vmatprep.mubr.f32.mxu0 0.0
    %1691 = vmatmul.mubr.f32.gmra.mxu0 %v1609
    %v1692 = vpop.f32.mrf.mxu0
    %v1693 = vadd.f32 0.0, %v1692
    %v1694 = vpop.f32.mrf.mxu0
    %1695 = vdwg.mxu0
    %1728 = vrot.lane.b32.xlu0 %v999, 127
    %v1729 = vpop.permute.xlu0 %1728
    %1730 = vrot.lane.b32.xlu0 %v1004, 127
    %v1731 = vpop.permute.xlu0 %1730
    %1732 = vrot.lane.b32.xlu0 %v1009, 127
    %v1733 = vpop.permute.xlu0 %1732
    %1734 = vrot.lane.b32.xlu0 %v1014, 127
    %v1735 = vpop.permute.xlu0 %1734
    %1736 = vrot.lane.b32.xlu0 %v1096, 127
    %v1737 = vpop.permute.xlu0 %1736
    %1738 = vrot.lane.b32.xlu0 %v1101, 127
    %v1739 = vpop.permute.xlu0 %1738
    %1740 = vrot.lane.b32.xlu0 %v1106, 127
    %v1741 = vpop.permute.xlu0 %1740
    %1742 = vrot.lane.b32.xlu0 %v1111, 127
    %v1743 = vpop.permute.xlu0 %1742
    %1744 = vrot.lane.b32.xlu0 %v1193, 127
    %v1745 = vpop.permute.xlu0 %1744
    %1746 = vrot.lane.b32.xlu0 %v1198, 127
    %v1747 = vpop.permute.xlu0 %1746
    %1748 = vrot.lane.b32.xlu0 %v1203, 127
    %v1749 = vpop.permute.xlu0 %1748
    %1750 = vrot.lane.b32.xlu0 %v1208, 127
    %v1751 = vpop.permute.xlu0 %1750
    %1752 = vrot.lane.b32.xlu0 %v1290, 127
    %v1753 = vpop.permute.xlu0 %1752
    %1754 = vrot.lane.b32.xlu0 %v1295, 127
    %v1755 = vpop.permute.xlu0 %1754
    %1756 = vrot.lane.b32.xlu0 %v1300, 127
    %v1757 = vpop.permute.xlu0 %1756
    %1758 = vrot.lane.b32.xlu0 %v1305, 127
    %v1759 = vpop.permute.xlu0 %1758
    %1760 = vrot.lane.b32.xlu0 %v1387, 127
    %v1761 = vpop.permute.xlu0 %1760
    %1762 = vrot.lane.b32.xlu0 %v1392, 127
    %v1763 = vpop.permute.xlu0 %1762
    %1764 = vrot.lane.b32.xlu0 %v1397, 127
    %v1765 = vpop.permute.xlu0 %1764
    %1766 = vrot.lane.b32.xlu0 %v1402, 127
    %v1767 = vpop.permute.xlu0 %1766
    %1768 = vrot.lane.b32.xlu0 %v1484, 127
    %v1769 = vpop.permute.xlu0 %1768
    %1770 = vrot.lane.b32.xlu0 %v1489, 127
    %v1771 = vpop.permute.xlu0 %1770
    %1772 = vrot.lane.b32.xlu0 %v1494, 127
    %v1773 = vpop.permute.xlu0 %1772
    %1774 = vrot.lane.b32.xlu0 %v1499, 127
    %v1775 = vpop.permute.xlu0 %1774
    %1776 = vrot.lane.b32.xlu0 %v1581, 127
    %v1777 = vpop.permute.xlu0 %1776
    %1778 = vrot.lane.b32.xlu0 %v1586, 127
    %v1779 = vpop.permute.xlu0 %1778
    %1780 = vrot.lane.b32.xlu0 %v1591, 127
    %v1781 = vpop.permute.xlu0 %1780
    %1782 = vrot.lane.b32.xlu0 %v1596, 127
    %v1783 = vpop.permute.xlu0 %1782
    %1784 = vrot.lane.b32.xlu0 %v1678, 127
    %v1785 = vpop.permute.xlu0 %1784
    %1786 = vrot.lane.b32.xlu0 %v1683, 127
    %v1787 = vpop.permute.xlu0 %1786
    %1788 = vrot.lane.b32.xlu0 %v1688, 127
    %v1789 = vpop.permute.xlu0 %1788
    %1790 = vrot.lane.b32.xlu0 %v1693, 127
    %v1791 = vpop.permute.xlu0 %1790
    %v1824 = vrcp.pop %v1729
    %v1825 = vmul.f32 %v999, %v1824
    %v1826 = vrcp.pop %v1731
    %v1827 = vmul.f32 %v1004, %v1826
    %v1828 = vrcp.pop %v1733
    %v1829 = vmul.f32 %v1009, %v1828
    %v1830 = vrcp.pop %v1735
    %v1831 = vmul.f32 %v1014, %v1830
    %v1832 = vrcp.pop %v1737
    %v1833 = vmul.f32 %v1096, %v1832
    %v1834 = vrcp.pop %v1739
    %v1835 = vmul.f32 %v1101, %v1834
    %v1836 = vrcp.pop %v1741
    %v1837 = vmul.f32 %v1106, %v1836
    %v1838 = vrcp.pop %v1743
    %v1839 = vmul.f32 %v1111, %v1838
    %v1840 = vrcp.pop %v1745
    %v1841 = vmul.f32 %v1193, %v1840
    %v1842 = vrcp.pop %v1747
    %v1843 = vmul.f32 %v1198, %v1842
    %v1844 = vrcp.pop %v1749
    %v1845 = vmul.f32 %v1203, %v1844
    %v1846 = vrcp.pop %v1751
    %v1847 = vmul.f32 %v1208, %v1846
    %v1848 = vrcp.pop %v1753
    %v1849 = vmul.f32 %v1290, %v1848
    %v1850 = vrcp.pop %v1755
    %v1851 = vmul.f32 %v1295, %v1850
    %v1852 = vrcp.pop %v1757
    %v1853 = vmul.f32 %v1300, %v1852
    %v1854 = vrcp.pop %v1759
    %v1855 = vmul.f32 %v1305, %v1854
    %v1856 = vrcp.pop %v1761
    %v1857 = vmul.f32 %v1387, %v1856
    %v1858 = vrcp.pop %v1763
    %v1859 = vmul.f32 %v1392, %v1858
    %v1860 = vrcp.pop %v1765
    %v1861 = vmul.f32 %v1397, %v1860
    %v1862 = vrcp.pop %v1767
    %v1863 = vmul.f32 %v1402, %v1862
    %v1864 = vrcp.pop %v1769
    %v1865 = vmul.f32 %v1484, %v1864
    %v1866 = vrcp.pop %v1771
    %v1867 = vmul.f32 %v1489, %v1866
    %v1868 = vrcp.pop %v1773
    %v1869 = vmul.f32 %v1494, %v1868
    %v1870 = vrcp.pop %v1775
    %v1871 = vmul.f32 %v1499, %v1870
    %v1872 = vrcp.pop %v1777
    %v1873 = vmul.f32 %v1581, %v1872
    %v1874 = vrcp.pop %v1779
    %v1875 = vmul.f32 %v1586, %v1874
    %v1876 = vrcp.pop %v1781
    %v1877 = vmul.f32 %v1591, %v1876
    %v1878 = vrcp.pop %v1783
    %v1879 = vmul.f32 %v1596, %v1878
    %v1880 = vrcp.pop %v1785
    %v1881 = vmul.f32 %v1678, %v1880
    %v1882 = vrcp.pop %v1787
    %v1883 = vmul.f32 %v1683, %v1882
    %v1884 = vrcp.pop %v1789
    %v1885 = vmul.f32 %v1688, %v1884
    %v1886 = vrcp.pop %v1791
    %v1887 = vmul.f32 %v1693, %v1886
    %v1889 = vlaneseq
    %v1890 = vshrl.u32 %v1889, 7
    %v1891 = vsub.s32 0, %v1890
    %v1892 = vrot.slane %v60, %v1891
    %1894 = vbcast.lane.b32.xlu0 %v1892, 256
    %v1895 = vpop.permute.xlu0 %1894
    %s1897 = sor.u32 256, 8
    %1898 = vbcast.lane.b32.xlu0 %v1892, %s1897
    %v1899 = vpop.permute.xlu0 %1898
    %s1901 = sor.u32 256, 16
    %1902 = vbcast.lane.b32.xlu0 %v1892, %s1901
    %v1903 = vpop.permute.xlu0 %1902
    %s1905 = sor.u32 256, 24
    %1906 = vbcast.lane.b32.xlu0 %v1892, %s1905
    %v1907 = vpop.permute.xlu0 %1906
    %v1908 = vlaneseq
    %v1909 = vshrl.u32 %v1908, 7
    %v1910 = vsub.s32 1, %v1909
    %v1911 = vrot.slane %v60, %v1910
    %1913 = vbcast.lane.b32.xlu0 %v1911, 256
    %v1914 = vpop.permute.xlu0 %1913
    %s1916 = sor.u32 256, 8
    %1917 = vbcast.lane.b32.xlu0 %v1911, %s1916
    %v1918 = vpop.permute.xlu0 %1917
    %s1920 = sor.u32 256, 16
    %1921 = vbcast.lane.b32.xlu0 %v1911, %s1920
    %v1922 = vpop.permute.xlu0 %1921
    %s1924 = sor.u32 256, 24
    %1925 = vbcast.lane.b32.xlu0 %v1911, %s1924
    %v1926 = vpop.permute.xlu0 %1925
    %v1927 = vlaneseq
    %v1928 = vshrl.u32 %v1927, 7
    %v1929 = vsub.s32 2, %v1928
    %v1930 = vrot.slane %v60, %v1929
    %1932 = vbcast.lane.b32.xlu0 %v1930, 256
    %v1933 = vpop.permute.xlu0 %1932
    %s1935 = sor.u32 256, 8
    %1936 = vbcast.lane.b32.xlu0 %v1930, %s1935
    %v1937 = vpop.permute.xlu0 %1936
    %s1939 = sor.u32 256, 16
    %1940 = vbcast.lane.b32.xlu0 %v1930, %s1939
    %v1941 = vpop.permute.xlu0 %1940
    %s1943 = sor.u32 256, 24
    %1944 = vbcast.lane.b32.xlu0 %v1930, %s1943
    %v1945 = vpop.permute.xlu0 %1944
    %v1946 = vlaneseq
    %v1947 = vshrl.u32 %v1946, 7
    %v1948 = vsub.s32 3, %v1947
    %v1949 = vrot.slane %v60, %v1948
    %1951 = vbcast.lane.b32.xlu0 %v1949, 256
    %v1952 = vpop.permute.xlu0 %1951
    %s1954 = sor.u32 256, 8
    %1955 = vbcast.lane.b32.xlu0 %v1949, %s1954
    %v1956 = vpop.permute.xlu0 %1955
    %s1958 = sor.u32 256, 16
    %1959 = vbcast.lane.b32.xlu0 %v1949, %s1958
    %v1960 = vpop.permute.xlu0 %1959
    %s1962 = sor.u32 256, 24
    %1963 = vbcast.lane.b32.xlu0 %v1949, %s1962
    %v1964 = vpop.permute.xlu0 %1963
    %v1965 = vlaneseq
    %v1966 = vshrl.u32 %v1965, 7
    %v1967 = vsub.s32 4, %v1966
    %v1968 = vrot.slane %v60, %v1967
    %1970 = vbcast.lane.b32.xlu0 %v1968, 256
    %v1971 = vpop.permute.xlu0 %1970
    %s1973 = sor.u32 256, 8
    %1974 = vbcast.lane.b32.xlu0 %v1968, %s1973
    %v1975 = vpop.permute.xlu0 %1974
    %s1977 = sor.u32 256, 16
    %1978 = vbcast.lane.b32.xlu0 %v1968, %s1977
    %v1979 = vpop.permute.xlu0 %1978
    %s1981 = sor.u32 256, 24
    %1982 = vbcast.lane.b32.xlu0 %v1968, %s1981
    %v1983 = vpop.permute.xlu0 %1982
    %v1984 = vlaneseq
    %v1985 = vshrl.u32 %v1984, 7
    %v1986 = vsub.s32 5, %v1985
    %v1987 = vrot.slane %v60, %v1986
    %1989 = vbcast.lane.b32.xlu0 %v1987, 256
    %v1990 = vpop.permute.xlu0 %1989
    %s1992 = sor.u32 256, 8
    %1993 = vbcast.lane.b32.xlu0 %v1987, %s1992
    %v1994 = vpop.permute.xlu0 %1993
    %s1996 = sor.u32 256, 16
    %1997 = vbcast.lane.b32.xlu0 %v1987, %s1996
    %v1998 = vpop.permute.xlu0 %1997
    %s2000 = sor.u32 256, 24
    %2001 = vbcast.lane.b32.xlu0 %v1987, %s2000
    %v2002 = vpop.permute.xlu0 %2001
    %v2003 = vlaneseq
    %v2004 = vshrl.u32 %v2003, 7
    %v2005 = vsub.s32 6, %v2004
    %v2006 = vrot.slane %v60, %v2005
    %2008 = vbcast.lane.b32.xlu0 %v2006, 256
    %v2009 = vpop.permute.xlu0 %2008
    %s2011 = sor.u32 256, 8
    %2012 = vbcast.lane.b32.xlu0 %v2006, %s2011
    %v2013 = vpop.permute.xlu0 %2012
    %s2015 = sor.u32 256, 16
    %2016 = vbcast.lane.b32.xlu0 %v2006, %s2015
    %v2017 = vpop.permute.xlu0 %2016
    %s2019 = sor.u32 256, 24
    %2020 = vbcast.lane.b32.xlu0 %v2006, %s2019
    %v2021 = vpop.permute.xlu0 %2020
    %v2022 = vlaneseq
    %v2023 = vshrl.u32 %v2022, 7
    %v2024 = vsub.s32 7, %v2023
    %v2025 = vrot.slane %v60, %v2024
    %2027 = vbcast.lane.b32.xlu0 %v2025, 256
    %v2028 = vpop.permute.xlu0 %2027
    %s2030 = sor.u32 256, 8
    %2031 = vbcast.lane.b32.xlu0 %v2025, %s2030
    %v2032 = vpop.permute.xlu0 %2031
    %s2034 = sor.u32 256, 16
    %2035 = vbcast.lane.b32.xlu0 %v2025, %s2034
    %v2036 = vpop.permute.xlu0 %2035
    %s2038 = sor.u32 256, 24
    %2039 = vbcast.lane.b32.xlu0 %v2025, %s2038
    %v2040 = vpop.permute.xlu0 %2039
    %v2073 = vadd.f32 %v1825, %v1895
    %v2074 = vadd.f32 %v1827, %v1899
    %v2075 = vadd.f32 %v1829, %v1903
    %v2076 = vadd.f32 %v1831, %v1907
    %v2077 = vadd.f32 %v1833, %v1914
    %v2078 = vadd.f32 %v1835, %v1918
    %v2079 = vadd.f32 %v1837, %v1922
    %v2080 = vadd.f32 %v1839, %v1926
    %v2081 = vadd.f32 %v1841, %v1933
    %v2082 = vadd.f32 %v1843, %v1937
    %v2083 = vadd.f32 %v1845, %v1941
    %v2084 = vadd.f32 %v1847, %v1945
    %v2085 = vadd.f32 %v1849, %v1952
    %v2086 = vadd.f32 %v1851, %v1956
    %v2087 = vadd.f32 %v1853, %v1960
    %v2088 = vadd.f32 %v1855, %v1964
    %v2089 = vadd.f32 %v1857, %v1971
    %v2090 = vadd.f32 %v1859, %v1975
    %v2091 = vadd.f32 %v1861, %v1979
    %v2092 = vadd.f32 %v1863, %v1983
    %v2093 = vadd.f32 %v1865, %v1990
    %v2094 = vadd.f32 %v1867, %v1994
    %v2095 = vadd.f32 %v1869, %v1998
    %v2096 = vadd.f32 %v1871, %v2002
    %v2097 = vadd.f32 %v1873, %v2009
    %v2098 = vadd.f32 %v1875, %v2013
    %v2099 = vadd.f32 %v1877, %v2017
    %v2100 = vadd.f32 %v1879, %v2021
    %v2101 = vadd.f32 %v1881, %v2028
    %v2102 = vadd.f32 %v1883, %v2032
    %v2103 = vadd.f32 %v1885, %v2036
    %v2104 = vadd.f32 %v1887, %v2040
    %v2105 = vpack.c.bf16 %v2074, %v2073
    %v2106 = vpack.c.bf16 %v2076, %v2075
    %v2107 = vpack.c.bf16 %v2078, %v2077
    %v2108 = vpack.c.bf16 %v2080, %v2079
    %v2109 = vpack.c.bf16 %v2082, %v2081
    %v2110 = vpack.c.bf16 %v2084, %v2083
    %v2111 = vpack.c.bf16 %v2086, %v2085
    %v2112 = vpack.c.bf16 %v2088, %v2087
    %v2113 = vpack.c.bf16 %v2090, %v2089
    %v2114 = vpack.c.bf16 %v2092, %v2091
    %v2115 = vpack.c.bf16 %v2094, %v2093
    %v2116 = vpack.c.bf16 %v2096, %v2095
    %v2117 = vpack.c.bf16 %v2098, %v2097
    %v2118 = vpack.c.bf16 %v2100, %v2099
    %v2119 = vpack.c.bf16 %v2102, %v2101
    %v2120 = vpack.c.bf16 %v2104, %v2103
    %v2121 = vld [vmem:[%s3] sm:$0xff]
    %v2122 = vld [vmem:[%s3 + $0x8] sm:$0xff]
    %v2123 = vld [vmem:[%s3 + $0x10] sm:$0xff]
    %v2124 = vld [vmem:[%s3 + $0x18] sm:$0xff]
    %v2125 = vld [vmem:[%s3 + $0x20] sm:$0xff]
    %v2126 = vld [vmem:[%s3 + $0x28] sm:$0xff]
    %v2127 = vld [vmem:[%s3 + $0x30] sm:$0xff]
    %v2128 = vld [vmem:[%s3 + $0x38] sm:$0xff]
    %v2129 = vld [vmem:[%s4] sm:$0xf]
    %v2131 = vlaneseq
    %v2132 = vshrl.u32 %v2131, 7
    %v2133 = vsub.s32 0, %v2132
    %v2134 = vrot.slane %v2129, %v2133
    %v2135 = vlaneseq
    %v2136 = vshrl.u32 %v2135, 7
    %v2137 = vsub.s32 1, %v2136
    %v2138 = vrot.slane %v2129, %v2137
    %v2139 = vlaneseq
    %v2140 = vshrl.u32 %v2139, 7
    %v2141 = vsub.s32 2, %v2140
    %v2142 = vrot.slane %v2129, %v2141
    %v2143 = vlaneseq
    %v2144 = vshrl.u32 %v2143, 7
    %v2145 = vsub.s32 3, %v2144
    %v2146 = vrot.slane %v2129, %v2145
    %v2167 = vunpack.c.l.b16 %v2105
    %v2168 = vunpack.c.h.b16 %v2105
    %v2169 = vunpack.c.l.b16 %v2106
    %v2170 = vunpack.c.h.b16 %v2106
    %v2171 = vunpack.c.l.b16 %v2107
    %v2172 = vunpack.c.h.b16 %v2107
    %v2173 = vunpack.c.l.b16 %v2108
    %v2174 = vunpack.c.h.b16 %v2108
    %v2175 = vunpack.c.l.b16 %v2109
    %v2176 = vunpack.c.h.b16 %v2109
    %v2177 = vunpack.c.l.b16 %v2110
    %v2178 = vunpack.c.h.b16 %v2110
    %v2179 = vunpack.c.l.b16 %v2111
    %v2180 = vunpack.c.h.b16 %v2111
    %v2181 = vunpack.c.l.b16 %v2112
    %v2182 = vunpack.c.h.b16 %v2112
    %v2183 = vunpack.c.l.b16 %v2113
    %v2184 = vunpack.c.h.b16 %v2113
    %v2185 = vunpack.c.l.b16 %v2114
    %v2186 = vunpack.c.h.b16 %v2114
    %v2187 = vunpack.c.l.b16 %v2115
    %v2188 = vunpack.c.h.b16 %v2115
    %v2189 = vunpack.c.l.b16 %v2116
    %v2190 = vunpack.c.h.b16 %v2116
    %v2191 = vunpack.c.l.b16 %v2117
    %v2192 = vunpack.c.h.b16 %v2117
    %v2193 = vunpack.c.l.b16 %v2118
    %v2194 = vunpack.c.h.b16 %v2118
    %v2195 = vunpack.c.l.b16 %v2119
    %v2196 = vunpack.c.h.b16 %v2119
    %v2197 = vunpack.c.l.b16 %v2120
    %v2198 = vunpack.c.h.b16 %v2120
    %2199 = vset.pattern.permute.xlu0 0
    %2200 = vperm.xlu0 %2199, %v2167
    %v2201 = vpop.permute.xlu0 %2200
    %2202 = vset.pattern.permute.xlu0 0
    %2203 = vperm.xlu0 %2202, %v2168
    %v2204 = vpop.permute.xlu0 %2203
    %2205 = vset.pattern.permute.xlu0 0
    %2206 = vperm.xlu0 %2205, %v2169
    %v2207 = vpop.permute.xlu0 %2206
    %2208 = vset.pattern.permute.xlu0 0
    %2209 = vperm.xlu0 %2208, %v2170
    %v2210 = vpop.permute.xlu0 %2209
    %2211 = vset.pattern.permute.xlu0 0
    %2212 = vperm.xlu0 %2211, %v2171
    %v2213 = vpop.permute.xlu0 %2212
    %2214 = vset.pattern.permute.xlu0 0
    %2215 = vperm.xlu0 %2214, %v2172
    %v2216 = vpop.permute.xlu0 %2215
    %2217 = vset.pattern.permute.xlu0 0
    %2218 = vperm.xlu0 %2217, %v2173
    %v2219 = vpop.permute.xlu0 %2218
    %2220 = vset.pattern.permute.xlu0 0
    %2221 = vperm.xlu0 %2220, %v2174
    %v2222 = vpop.permute.xlu0 %2221
    %2223 = vset.pattern.permute.xlu0 0
    %2224 = vperm.xlu0 %2223, %v2175
    %v2225 = vpop.permute.xlu0 %2224
    %2226 = vset.pattern.permute.xlu0 0
    %2227 = vperm.xlu0 %2226, %v2176
    %v2228 = vpop.permute.xlu0 %2227
    %2229 = vset.pattern.permute.xlu0 0
    %2230 = vperm.xlu0 %2229, %v2177
    %v2231 = vpop.permute.xlu0 %2230
    %2232 = vset.pattern.permute.xlu0 0
    %2233 = vperm.xlu0 %2232, %v2178
    %v2234 = vpop.permute.xlu0 %2233
    %2235 = vset.pattern.permute.xlu0 0
    %2236 = vperm.xlu0 %2235, %v2179
    %v2237 = vpop.permute.xlu0 %2236
    %2238 = vset.pattern.permute.xlu0 0
    %2239 = vperm.xlu0 %2238, %v2180
    %v2240 = vpop.permute.xlu0 %2239
    %2241 = vset.pattern.permute.xlu0 0
    %2242 = vperm.xlu0 %2241, %v2181
    %v2243 = vpop.permute.xlu0 %2242
    %2244 = vset.pattern.permute.xlu0 0
    %2245 = vperm.xlu0 %2244, %v2182
    %v2246 = vpop.permute.xlu0 %2245
    %2247 = vset.pattern.permute.xlu0 0
    %2248 = vperm.xlu0 %2247, %v2183
    %v2249 = vpop.permute.xlu0 %2248
    %2250 = vset.pattern.permute.xlu0 0
    %2251 = vperm.xlu0 %2250, %v2184
    %v2252 = vpop.permute.xlu0 %2251
    %2253 = vset.pattern.permute.xlu0 0
    %2254 = vperm.xlu0 %2253, %v2185
    %v2255 = vpop.permute.xlu0 %2254
    %2256 = vset.pattern.permute.xlu0 0
    %2257 = vperm.xlu0 %2256, %v2186
    %v2258 = vpop.permute.xlu0 %2257
    %2259 = vset.pattern.permute.xlu0 0
    %2260 = vperm.xlu0 %2259, %v2187
    %v2261 = vpop.permute.xlu0 %2260
    %2262 = vset.pattern.permute.xlu0 0
    %2263 = vperm.xlu0 %2262, %v2188
    %v2264 = vpop.permute.xlu0 %2263
    %2265 = vset.pattern.permute.xlu0 0
    %2266 = vperm.xlu0 %2265, %v2189
    %v2267 = vpop.permute.xlu0 %2266
    %2268 = vset.pattern.permute.xlu0 0
    %2269 = vperm.xlu0 %2268, %v2190
    %v2270 = vpop.permute.xlu0 %2269
    %2271 = vset.pattern.permute.xlu0 0
    %2272 = vperm.xlu0 %2271, %v2191
    %v2273 = vpop.permute.xlu0 %2272
    %2274 = vset.pattern.permute.xlu0 0
    %2275 = vperm.xlu0 %2274, %v2192
    %v2276 = vpop.permute.xlu0 %2275
    %2277 = vset.pattern.permute.xlu0 0
    %2278 = vperm.xlu0 %2277, %v2193
    %v2279 = vpop.permute.xlu0 %2278
    %2280 = vset.pattern.permute.xlu0 0
    %2281 = vperm.xlu0 %2280, %v2194
    %v2282 = vpop.permute.xlu0 %2281
    %2283 = vset.pattern.permute.xlu0 0
    %2284 = vperm.xlu0 %2283, %v2195
    %v2285 = vpop.permute.xlu0 %2284
    %2286 = vset.pattern.permute.xlu0 0
    %2287 = vperm.xlu0 %2286, %v2196
    %v2288 = vpop.permute.xlu0 %2287
    %2289 = vset.pattern.permute.xlu0 0
    %2290 = vperm.xlu0 %2289, %v2197
    %v2291 = vpop.permute.xlu0 %2290
    %2292 = vset.pattern.permute.xlu0 0
    %2293 = vperm.xlu0 %2292, %v2198
    %v2294 = vpop.permute.xlu0 %2293
    %v2295 = vlaneseq
    %v2296 = vand.u32 %v2295, 127
    %v2297 = vlaneseq
    %v2298 = vshrl.u32 %v2297, 7
    %v2299 = vsub.s32 %v2296, %v2298
    %v2300 = vrot.slane %v2201, %v2299
    %v2301 = vadd.s32 %v2296, 4294967288
    %v2302 = vlaneseq
    %v2303 = vshrl.u32 %v2302, 7
    %v2304 = vsub.s32 %v2301, %v2303
    %v2305 = vrot.slane %v2204, %v2304
    %vm2306 = vcmask 130112
    %v2307 = vsel %vm2306, %v2305, %v2300
    %v2308 = vadd.s32 %v2296, 4294967280
    %v2309 = vlaneseq
    %v2310 = vshrl.u32 %v2309, 7
    %v2311 = vsub.s32 %v2308, %v2310
    %v2312 = vrot.slane %v2207, %v2311
    %vm2313 = vcmask 195712
    %v2314 = vsel %vm2313, %v2312, %v2307
    %v2315 = vadd.s32 %v2296, 4294967272
    %v2316 = vlaneseq
    %v2317 = vshrl.u32 %v2316, 7
    %v2318 = vsub.s32 %v2315, %v2317
    %v2319 = vrot.slane %v2210, %v2318
    %vm2320 = vcmask 261312
    %v2321 = vsel %vm2320, %v2319, %v2314
    %v2322 = vlaneseq
    %v2323 = vshrl.u32 %v2322, 7
    %v2324 = vsub.s32 %v2296, %v2323
    %v2325 = vrot.slane %v2213, %v2324
    %v2326 = vlaneseq
    %v2327 = vshrl.u32 %v2326, 7
    %v2328 = vsub.s32 %v2301, %v2327
    %v2329 = vrot.slane %v2216, %v2328
    %v2330 = vsel %vm2306, %v2329, %v2325
    %v2331 = vlaneseq
    %v2332 = vshrl.u32 %v2331, 7
    %v2333 = vsub.s32 %v2308, %v2332
    %v2334 = vrot.slane %v2219, %v2333
    %v2335 = vsel %vm2313, %v2334, %v2330
    %v2336 = vlaneseq
    %v2337 = vshrl.u32 %v2336, 7
    %v2338 = vsub.s32 %v2315, %v2337
    %v2339 = vrot.slane %v2222, %v2338
    %v2340 = vsel %vm2320, %v2339, %v2335
    %v2341 = vlaneseq
    %v2342 = vshrl.u32 %v2341, 7
    %v2343 = vsub.s32 %v2296, %v2342
    %v2344 = vrot.slane %v2225, %v2343
    %v2345 = vlaneseq
    %v2346 = vshrl.u32 %v2345, 7
    %v2347 = vsub.s32 %v2301, %v2346
    %v2348 = vrot.slane %v2228, %v2347
    %v2349 = vsel %vm2306, %v2348, %v2344
    %v2350 = vlaneseq
    %v2351 = vshrl.u32 %v2350, 7
    %v2352 = vsub.s32 %v2308, %v2351
    %v2353 = vrot.slane %v2231, %v2352
    %v2354 = vsel %vm2313, %v2353, %v2349
    %v2355 = vlaneseq
    %v2356 = vshrl.u32 %v2355, 7
    %v2357 = vsub.s32 %v2315, %v2356
    %v2358 = vrot.slane %v2234, %v2357
    %v2359 = vsel %vm2320, %v2358, %v2354
    %v2360 = vlaneseq
    %v2361 = vshrl.u32 %v2360, 7
    %v2362 = vsub.s32 %v2296, %v2361
    %v2363 = vrot.slane %v2237, %v2362
    %v2364 = vlaneseq
    %v2365 = vshrl.u32 %v2364, 7
    %v2366 = vsub.s32 %v2301, %v2365
    %v2367 = vrot.slane %v2240, %v2366
    %v2368 = vsel %vm2306, %v2367, %v2363
    %v2369 = vlaneseq
    %v2370 = vshrl.u32 %v2369, 7
    %v2371 = vsub.s32 %v2308, %v2370
    %v2372 = vrot.slane %v2243, %v2371
    %v2373 = vsel %vm2313, %v2372, %v2368
    %v2374 = vlaneseq
    %v2375 = vshrl.u32 %v2374, 7
    %v2376 = vsub.s32 %v2315, %v2375
    %v2377 = vrot.slane %v2246, %v2376
    %v2378 = vsel %vm2320, %v2377, %v2373
    %v2379 = vlaneseq
    %v2380 = vshrl.u32 %v2379, 7
    %v2381 = vsub.s32 %v2296, %v2380
    %v2382 = vrot.slane %v2249, %v2381
    %v2383 = vlaneseq
    %v2384 = vshrl.u32 %v2383, 7
    %v2385 = vsub.s32 %v2301, %v2384
    %v2386 = vrot.slane %v2252, %v2385
    %v2387 = vsel %vm2306, %v2386, %v2382
    %v2388 = vlaneseq
    %v2389 = vshrl.u32 %v2388, 7
    %v2390 = vsub.s32 %v2308, %v2389
    %v2391 = vrot.slane %v2255, %v2390
    %v2392 = vsel %vm2313, %v2391, %v2387
    %v2393 = vlaneseq
    %v2394 = vshrl.u32 %v2393, 7
    %v2395 = vsub.s32 %v2315, %v2394
    %v2396 = vrot.slane %v2258, %v2395
    %v2397 = vsel %vm2320, %v2396, %v2392
    %v2398 = vlaneseq
    %v2399 = vshrl.u32 %v2398, 7
    %v2400 = vsub.s32 %v2296, %v2399
    %v2401 = vrot.slane %v2261, %v2400
    %v2402 = vlaneseq
    %v2403 = vshrl.u32 %v2402, 7
    %v2404 = vsub.s32 %v2301, %v2403
    %v2405 = vrot.slane %v2264, %v2404
    %v2406 = vsel %vm2306, %v2405, %v2401
    %v2407 = vlaneseq
    %v2408 = vshrl.u32 %v2407, 7
    %v2409 = vsub.s32 %v2308, %v2408
    %v2410 = vrot.slane %v2267, %v2409
    %v2411 = vsel %vm2313, %v2410, %v2406
    %v2412 = vlaneseq
    %v2413 = vshrl.u32 %v2412, 7
    %v2414 = vsub.s32 %v2315, %v2413
    %v2415 = vrot.slane %v2270, %v2414
    %v2416 = vsel %vm2320, %v2415, %v2411
    %v2417 = vlaneseq
    %v2418 = vshrl.u32 %v2417, 7
    %v2419 = vsub.s32 %v2296, %v2418
    %v2420 = vrot.slane %v2273, %v2419
    %v2421 = vlaneseq
    %v2422 = vshrl.u32 %v2421, 7
    %v2423 = vsub.s32 %v2301, %v2422
    %v2424 = vrot.slane %v2276, %v2423
    %v2425 = vsel %vm2306, %v2424, %v2420
    %v2426 = vlaneseq
    %v2427 = vshrl.u32 %v2426, 7
    %v2428 = vsub.s32 %v2308, %v2427
    %v2429 = vrot.slane %v2279, %v2428
    %v2430 = vsel %vm2313, %v2429, %v2425
    %v2431 = vlaneseq
    %v2432 = vshrl.u32 %v2431, 7
    %v2433 = vsub.s32 %v2315, %v2432
    %v2434 = vrot.slane %v2282, %v2433
    %v2435 = vsel %vm2320, %v2434, %v2430
    %v2436 = vlaneseq
    %v2437 = vshrl.u32 %v2436, 7
    %v2438 = vsub.s32 %v2296, %v2437
    %v2439 = vrot.slane %v2285, %v2438
    %v2440 = vlaneseq
    %v2441 = vshrl.u32 %v2440, 7
    %v2442 = vsub.s32 %v2301, %v2441
    %v2443 = vrot.slane %v2288, %v2442
    %v2444 = vsel %vm2306, %v2443, %v2439
    %v2445 = vlaneseq
    %v2446 = vshrl.u32 %v2445, 7
    %v2447 = vsub.s32 %v2308, %v2446
    %v2448 = vrot.slane %v2291, %v2447
    %v2449 = vsel %vm2313, %v2448, %v2444
    %v2450 = vlaneseq
    %v2451 = vshrl.u32 %v2450, 7
    %v2452 = vsub.s32 %v2315, %v2451
    %v2453 = vrot.slane %v2294, %v2452
    %v2454 = vsel %vm2320, %v2453, %v2449
    %vm2455 = vcmask 1041409
    %v2456 = vsel %vm2455, %v2340, %v2321
    %vm2457 = vcmask 1042434
    %v2458 = vsel %vm2457, %v2359, %v2456
    %vm2459 = vcmask 1043459
    %v2460 = vsel %vm2459, %v2378, %v2458
    %vm2461 = vcmask 1044484
    %v2462 = vsel %vm2461, %v2397, %v2460
    %vm2463 = vcmask 1045509
    %v2464 = vsel %vm2463, %v2416, %v2462
    %vm2465 = vcmask 1046534
    %v2466 = vsel %vm2465, %v2435, %v2464
    %vm2467 = vcmask 1047559
    %v2468 = vsel %vm2467, %v2454, %v2466
    %v2469 = vpack.c.b16 %v2468, %v2468
    %v2478 = vunpack.c.l.b16 %v2121
    %v2479 = vunpack.c.h.b16 %v2121
    %v2480 = vunpack.c.l.b16 %v2122
    %v2481 = vunpack.c.h.b16 %v2122
    %v2482 = vunpack.c.l.b16 %v2123
    %v2483 = vunpack.c.h.b16 %v2123
    %v2484 = vunpack.c.l.b16 %v2124
    %v2485 = vunpack.c.h.b16 %v2124
    %v2486 = vunpack.c.l.b16 %v2125
    %v2487 = vunpack.c.h.b16 %v2125
    %v2488 = vunpack.c.l.b16 %v2126
    %v2489 = vunpack.c.h.b16 %v2126
    %v2490 = vunpack.c.l.b16 %v2127
    %v2491 = vunpack.c.h.b16 %v2127
    %v2492 = vunpack.c.l.b16 %v2128
    %v2493 = vunpack.c.h.b16 %v2128
    %v2494 = vpack.c.b16 %v2482, %v2478
    %v2495 = vpack.c.b16 %v2483, %v2479
    %v2496 = vpack.c.b16 %v2484, %v2480
    %v2497 = vpack.c.b16 %v2485, %v2481
    %v2498 = vpack.c.b16 %v2490, %v2486
    %v2499 = vpack.c.b16 %v2491, %v2487
    %v2500 = vpack.c.b16 %v2492, %v2488
    %v2501 = vpack.c.b16 %v2493, %v2489
    %v2511 = vsel %vm119, %v2469, 0
    %2513 = vmatprep.subr.bf16.mxu0 0
    %2514 = vmatpush1.bf16.msra.mxu0 0
    %2515 = vmatprep.subr.bf16.mxu0 0
    %2516 = vmatpush1.bf16.msra.mxu0 0
    %2517 = vmatprep.subr.bf16.mxu0 0
    %2518 = vmatpush1.bf16.msra.mxu0 0
    %2519 = vmatprep.subr.bf16.mxu0 0
    %2520 = vmatpush1.bf16.msra.mxu0 0
    %2521 = vmatprep.subr.bf16.mxu0 0
    %2522 = vmatpush1.bf16.msra.mxu0 0
    %2523 = vmatprep.subr.bf16.mxu0 0
    %2524 = vmatpush1.bf16.msra.mxu0 0
    %2525 = vmatprep.subr.bf16.mxu0 %v2499
    %2526 = vmatpush1.bf16.msra.mxu0 %v2498
    %2527 = vmatprep.subr.bf16.mxu0 %v2495
    %2528 = vmatpush1.bf16.msra.mxu0 %v2494
    %2529 = vmatprep.subr.bf16.mxu0 0
    %2530 = vmatpush2.bf16.msra.mxu0 0
    %2531 = vmatprep.subr.bf16.mxu0 0
    %2532 = vmatpush2.bf16.msra.mxu0 0
    %2533 = vmatprep.subr.bf16.mxu0 0
    %2534 = vmatpush2.bf16.msra.mxu0 0
    %2535 = vmatprep.subr.bf16.mxu0 0
    %2536 = vmatpush2.bf16.msra.mxu0 0
    %2537 = vmatprep.subr.bf16.mxu0 0
    %2538 = vmatpush2.bf16.msra.mxu0 0
    %2539 = vmatprep.subr.bf16.mxu0 0
    %2540 = vmatpush2.bf16.msra.mxu0 0
    %2541 = vmatprep.subr.bf16.mxu0 0
    %2542 = vmatpush2.bf16.msra.mxu0 0
    %2543 = vmatprep.subr.bf16.mxu0 0
    %2544 = vmatpush2.bf16.msra.mxu0 0
    %2545 = vmatprep.mubr.bf16.mxu0 0
    %2546 = vmatmul.mubr.bf16.gmra.mxu0 %v2511
    %v2547 = vpop.f32.mrf.mxu0
    %v2548 = vadd.f32 %v2134, %v2547
    %v2549 = vpop.f32.mrf.mxu0
    %v2550 = vadd.f32 %v2138, %v2549
    %v2551 = vpop.f32.mrf.mxu0
    %v2552 = vpop.f32.mrf.mxu0
    %2553 = vdwg.mxu0
    %2554 = vmatprep.subr.bf16.mxu0 0
    %2555 = vmatpush1.bf16.msra.mxu0 0
    %2556 = vmatprep.subr.bf16.mxu0 0
    %2557 = vmatpush1.bf16.msra.mxu0 0
    %2558 = vmatprep.subr.bf16.mxu0 0
    %2559 = vmatpush1.bf16.msra.mxu0 0
    %2560 = vmatprep.subr.bf16.mxu0 0
    %2561 = vmatpush1.bf16.msra.mxu0 0
    %2562 = vmatprep.subr.bf16.mxu0 0
    %2563 = vmatpush1.bf16.msra.mxu0 0
    %2564 = vmatprep.subr.bf16.mxu0 0
    %2565 = vmatpush1.bf16.msra.mxu0 0
    %2566 = vmatprep.subr.bf16.mxu0 %v2501
    %2567 = vmatpush1.bf16.msra.mxu0 %v2500
    %2568 = vmatprep.subr.bf16.mxu0 %v2497
    %2569 = vmatpush1.bf16.msra.mxu0 %v2496
    %2570 = vmatprep.subr.bf16.mxu0 0
    %2571 = vmatpush2.bf16.msra.mxu0 0
    %2572 = vmatprep.subr.bf16.mxu0 0
    %2573 = vmatpush2.bf16.msra.mxu0 0
    %2574 = vmatprep.subr.bf16.mxu0 0
    %2575 = vmatpush2.bf16.msra.mxu0 0
    %2576 = vmatprep.subr.bf16.mxu0 0
    %2577 = vmatpush2.bf16.msra.mxu0 0
    %2578 = vmatprep.subr.bf16.mxu0 0
    %2579 = vmatpush2.bf16.msra.mxu0 0
    %2580 = vmatprep.subr.bf16.mxu0 0
    %2581 = vmatpush2.bf16.msra.mxu0 0
    %2582 = vmatprep.subr.bf16.mxu0 0
    %2583 = vmatpush2.bf16.msra.mxu0 0
    %2584 = vmatprep.subr.bf16.mxu0 0
    %2585 = vmatpush2.bf16.msra.mxu0 0
    %2586 = vmatprep.mubr.bf16.mxu0 0
    %2587 = vmatmul.mubr.bf16.gmra.mxu0 %v2511
    %v2588 = vpop.f32.mrf.mxu0
    %v2589 = vadd.f32 %v2142, %v2588
    %v2590 = vpop.f32.mrf.mxu0
    %v2591 = vadd.f32 %v2146, %v2590
    %v2592 = vpop.f32.mrf.mxu0
    %v2593 = vpop.f32.mrf.mxu0
    %2594 = vdwg.mxu0
    %v2595 = vmax.f32 %v2548, 0.0
    %v2596 = vmax.f32 %v2550, 0.0
    %v2597 = vmax.f32 %v2589, 0.0
    %v2598 = vmax.f32 %v2591, 0.0
    %v2599 = vpack.c.bf16 %v2595, %v2595
    %v2600 = vpack.c.bf16 %v2596, %v2596
    %v2601 = vpack.c.bf16 %v2597, %v2597
    %v2602 = vpack.c.bf16 %v2598, %v2598
    %v2603 = vld [vmem:[%s5] sm:$0xf]
    %v2604 = vld [vmem:[%s5 + $0x4] sm:$0xf]
    %v2605 = vld [vmem:[%s5 + $0x8] sm:$0xf]
    %v2606 = vld [vmem:[%s5 + $0xc] sm:$0xf]
    %v2607 = vld [vmem:[%s5 + $0x10] sm:$0xf]
    %v2608 = vld [vmem:[%s5 + $0x14] sm:$0xf]
    %v2609 = vld [vmem:[%s5 + $0x18] sm:$0xf]
    %v2610 = vld [vmem:[%s5 + $0x1c] sm:$0xf]
    %v2611 = vld [vmem:[%s5 + $0x20] sm:$0xf]
    %v2612 = vld [vmem:[%s5 + $0x24] sm:$0xf]
    %v2613 = vld [vmem:[%s5 + $0x28] sm:$0xf]
    %v2614 = vld [vmem:[%s5 + $0x2c] sm:$0xf]
    %v2615 = vld [vmem:[%s5 + $0x30] sm:$0xf]
    %v2616 = vld [vmem:[%s5 + $0x34] sm:$0xf]
    %v2617 = vld [vmem:[%s5 + $0x38] sm:$0xf]
    %v2618 = vld [vmem:[%s5 + $0x3c] sm:$0xf]
    %v2619 = vld [vmem:[%s5 + $0x40] sm:$0xf]
    %v2620 = vld [vmem:[%s5 + $0x44] sm:$0xf]
    %v2621 = vld [vmem:[%s5 + $0x48] sm:$0xf]
    %v2622 = vld [vmem:[%s5 + $0x4c] sm:$0xf]
    %v2623 = vld [vmem:[%s5 + $0x50] sm:$0xf]
    %v2624 = vld [vmem:[%s5 + $0x54] sm:$0xf]
    %v2625 = vld [vmem:[%s5 + $0x58] sm:$0xf]
    %v2626 = vld [vmem:[%s5 + $0x5c] sm:$0xf]
    %v2627 = vld [vmem:[%s5 + $0x60] sm:$0xf]
    %v2628 = vld [vmem:[%s5 + $0x64] sm:$0xf]
    %v2629 = vld [vmem:[%s5 + $0x68] sm:$0xf]
    %v2630 = vld [vmem:[%s5 + $0x6c] sm:$0xf]
    %v2631 = vld [vmem:[%s5 + $0x70] sm:$0xf]
    %v2632 = vld [vmem:[%s5 + $0x74] sm:$0xf]
    %v2633 = vld [vmem:[%s5 + $0x78] sm:$0xf]
    %v2634 = vld [vmem:[%s5 + $0x7c] sm:$0xf]
    %v2635 = vld [vmem:[%s5 + $0x80] sm:$0xf]
    %v2636 = vld [vmem:[%s5 + $0x84] sm:$0xf]
    %v2637 = vld [vmem:[%s5 + $0x88] sm:$0xf]
    %v2638 = vld [vmem:[%s5 + $0x8c] sm:$0xf]
    %v2639 = vld [vmem:[%s5 + $0x90] sm:$0xf]
    %v2640 = vld [vmem:[%s5 + $0x94] sm:$0xf]
    %v2641 = vld [vmem:[%s5 + $0x98] sm:$0xf]
    %v2642 = vld [vmem:[%s5 + $0x9c] sm:$0xf]
    %v2643 = vld [vmem:[%s5 + $0xa0] sm:$0xf]
    %v2644 = vld [vmem:[%s5 + $0xa4] sm:$0xf]
    %v2645 = vld [vmem:[%s5 + $0xa8] sm:$0xf]
    %v2646 = vld [vmem:[%s5 + $0xac] sm:$0xf]
    %v2647 = vld [vmem:[%s5 + $0xb0] sm:$0xf]
    %v2648 = vld [vmem:[%s5 + $0xb4] sm:$0xf]
    %v2649 = vld [vmem:[%s5 + $0xb8] sm:$0xf]
    %v2650 = vld [vmem:[%s5 + $0xbc] sm:$0xf]
    %v2651 = vld [vmem:[%s5 + $0xc0] sm:$0xf]
    %v2652 = vld [vmem:[%s5 + $0xc4] sm:$0xf]
    %v2653 = vld [vmem:[%s5 + $0xc8] sm:$0xf]
    %v2654 = vld [vmem:[%s5 + $0xcc] sm:$0xf]
    %v2655 = vld [vmem:[%s5 + $0xd0] sm:$0xf]
    %v2656 = vld [vmem:[%s5 + $0xd4] sm:$0xf]
    %v2657 = vld [vmem:[%s5 + $0xd8] sm:$0xf]
    %v2658 = vld [vmem:[%s5 + $0xdc] sm:$0xf]
    %v2659 = vld [vmem:[%s5 + $0xe0] sm:$0xf]
    %v2660 = vld [vmem:[%s5 + $0xe4] sm:$0xf]
    %v2661 = vld [vmem:[%s5 + $0xe8] sm:$0xf]
    %v2662 = vld [vmem:[%s5 + $0xec] sm:$0xf]
    %v2663 = vld [vmem:[%s5 + $0xf0] sm:$0xf]
    %v2664 = vld [vmem:[%s5 + $0xf4] sm:$0xf]
    %v2665 = vld [vmem:[%s5 + $0xf8] sm:$0xf]
    %v2666 = vld [vmem:[%s5 + $0xfc] sm:$0xf]
    %v2667 = vld [vmem:[%s6] sm:$0x1]
    %v2669 = vlaneseq
    %v2670 = vshrl.u32 %v2669, 7
    %v2671 = vsub.s32 0, %v2670
    %v2672 = vrot.slane %v2667, %v2671
    %v2738 = vunpack.c.l.b16 %v2603
    %v2739 = vunpack.c.l.b16 %v2604
    %v2740 = vunpack.c.l.b16 %v2605
    %v2741 = vunpack.c.l.b16 %v2606
    %v2742 = vunpack.c.l.b16 %v2607
    %v2743 = vunpack.c.l.b16 %v2608
    %v2744 = vunpack.c.l.b16 %v2609
    %v2745 = vunpack.c.l.b16 %v2610
    %v2746 = vunpack.c.l.b16 %v2611
    %v2747 = vunpack.c.l.b16 %v2612
    %v2748 = vunpack.c.l.b16 %v2613
    %v2749 = vunpack.c.l.b16 %v2614
    %v2750 = vunpack.c.l.b16 %v2615
    %v2751 = vunpack.c.l.b16 %v2616
    %v2752 = vunpack.c.l.b16 %v2617
    %v2753 = vunpack.c.l.b16 %v2618
    %v2754 = vunpack.c.l.b16 %v2619
    %v2755 = vunpack.c.l.b16 %v2620
    %v2756 = vunpack.c.l.b16 %v2621
    %v2757 = vunpack.c.l.b16 %v2622
    %v2758 = vunpack.c.l.b16 %v2623
    %v2759 = vunpack.c.l.b16 %v2624
    %v2760 = vunpack.c.l.b16 %v2625
    %v2761 = vunpack.c.l.b16 %v2626
    %v2762 = vunpack.c.l.b16 %v2627
    %v2763 = vunpack.c.l.b16 %v2628
    %v2764 = vunpack.c.l.b16 %v2629
    %v2765 = vunpack.c.l.b16 %v2630
    %v2766 = vunpack.c.l.b16 %v2631
    %v2767 = vunpack.c.l.b16 %v2632
    %v2768 = vunpack.c.l.b16 %v2633
    %v2769 = vunpack.c.l.b16 %v2634
    %v2770 = vunpack.c.l.b16 %v2635
    %v2771 = vunpack.c.l.b16 %v2636
    %v2772 = vunpack.c.l.b16 %v2637
    %v2773 = vunpack.c.l.b16 %v2638
    %v2774 = vunpack.c.l.b16 %v2639
    %v2775 = vunpack.c.l.b16 %v2640
    %v2776 = vunpack.c.l.b16 %v2641
    %v2777 = vunpack.c.l.b16 %v2642
    %v2778 = vunpack.c.l.b16 %v2643
    %v2779 = vunpack.c.l.b16 %v2644
    %v2780 = vunpack.c.l.b16 %v2645
    %v2781 = vunpack.c.l.b16 %v2646
    %v2782 = vunpack.c.l.b16 %v2647
    %v2783 = vunpack.c.l.b16 %v2648
    %v2784 = vunpack.c.l.b16 %v2649
    %v2785 = vunpack.c.l.b16 %v2650
    %v2786 = vunpack.c.l.b16 %v2651
    %v2787 = vunpack.c.l.b16 %v2652
    %v2788 = vunpack.c.l.b16 %v2653
    %v2789 = vunpack.c.l.b16 %v2654
    %v2790 = vunpack.c.l.b16 %v2655
    %v2791 = vunpack.c.l.b16 %v2656
    %v2792 = vunpack.c.l.b16 %v2657
    %v2793 = vunpack.c.l.b16 %v2658
    %v2794 = vunpack.c.l.b16 %v2659
    %v2795 = vunpack.c.l.b16 %v2660
    %v2796 = vunpack.c.l.b16 %v2661
    %v2797 = vunpack.c.l.b16 %v2662
    %v2798 = vunpack.c.l.b16 %v2663
    %v2799 = vunpack.c.l.b16 %v2664
    %v2800 = vunpack.c.l.b16 %v2665
    %v2801 = vunpack.c.l.b16 %v2666
    %v2802 = vpack.c.b16 %v2739, %v2738
    %v2803 = vpack.c.b16 %v2741, %v2740
    %v2804 = vpack.c.b16 %v2743, %v2742
    %v2805 = vpack.c.b16 %v2745, %v2744
    %v2806 = vpack.c.b16 %v2747, %v2746
    %v2807 = vpack.c.b16 %v2749, %v2748
    %v2808 = vpack.c.b16 %v2751, %v2750
    %v2809 = vpack.c.b16 %v2753, %v2752
    %v2810 = vpack.c.b16 %v2755, %v2754
    %v2811 = vpack.c.b16 %v2757, %v2756
    %v2812 = vpack.c.b16 %v2759, %v2758
    %v2813 = vpack.c.b16 %v2761, %v2760
    %v2814 = vpack.c.b16 %v2763, %v2762
    %v2815 = vpack.c.b16 %v2765, %v2764
    %v2816 = vpack.c.b16 %v2767, %v2766
    %v2817 = vpack.c.b16 %v2769, %v2768
    %v2818 = vpack.c.b16 %v2771, %v2770
    %v2819 = vpack.c.b16 %v2773, %v2772
    %v2820 = vpack.c.b16 %v2775, %v2774
    %v2821 = vpack.c.b16 %v2777, %v2776
    %v2822 = vpack.c.b16 %v2779, %v2778
    %v2823 = vpack.c.b16 %v2781, %v2780
    %v2824 = vpack.c.b16 %v2783, %v2782
    %v2825 = vpack.c.b16 %v2785, %v2784
    %v2826 = vpack.c.b16 %v2787, %v2786
    %v2827 = vpack.c.b16 %v2789, %v2788
    %v2828 = vpack.c.b16 %v2791, %v2790
    %v2829 = vpack.c.b16 %v2793, %v2792
    %v2830 = vpack.c.b16 %v2795, %v2794
    %v2831 = vpack.c.b16 %v2797, %v2796
    %v2832 = vpack.c.b16 %v2799, %v2798
    %v2833 = vpack.c.b16 %v2801, %v2800
    %2866 = vmatprep.subr.bf16.mxu0 0
    %2867 = vmatpush1.bf16.msra.mxu0 %v2809
    %2868 = vmatprep.subr.bf16.mxu0 0
    %2869 = vmatpush1.bf16.msra.mxu0 %v2808
    %2870 = vmatprep.subr.bf16.mxu0 0
    %2871 = vmatpush1.bf16.msra.mxu0 %v2807
    %2872 = vmatprep.subr.bf16.mxu0 0
    %2873 = vmatpush1.bf16.msra.mxu0 %v2806
    %2874 = vmatprep.subr.bf16.mxu0 0
    %2875 = vmatpush1.bf16.msra.mxu0 %v2805
    %2876 = vmatprep.subr.bf16.mxu0 0
    %2877 = vmatpush1.bf16.msra.mxu0 %v2804
    %2878 = vmatprep.subr.bf16.mxu0 0
    %2879 = vmatpush1.bf16.msra.mxu0 %v2803
    %2880 = vmatprep.subr.bf16.mxu0 0
    %2881 = vmatpush1.bf16.msra.mxu0 %v2802
    %2882 = vmatprep.subr.bf16.mxu0 0
    %2883 = vmatpush2.bf16.msra.mxu0 %v2817
    %2884 = vmatprep.subr.bf16.mxu0 0
    %2885 = vmatpush2.bf16.msra.mxu0 %v2816
    %2886 = vmatprep.subr.bf16.mxu0 0
    %2887 = vmatpush2.bf16.msra.mxu0 %v2815
    %2888 = vmatprep.subr.bf16.mxu0 0
    %2889 = vmatpush2.bf16.msra.mxu0 %v2814
    %2890 = vmatprep.subr.bf16.mxu0 0
    %2891 = vmatpush2.bf16.msra.mxu0 %v2813
    %2892 = vmatprep.subr.bf16.mxu0 0
    %2893 = vmatpush2.bf16.msra.mxu0 %v2812
    %2894 = vmatprep.subr.bf16.mxu0 0
    %2895 = vmatpush2.bf16.msra.mxu0 %v2811
    %2896 = vmatprep.subr.bf16.mxu0 0
    %2897 = vmatpush2.bf16.msra.mxu0 %v2810
    %2898 = vmatprep.mubr.bf16.mxu0 %v2600
    %2899 = vmatmul.mubr.bf16.gmra.mxu0 %v2599
    %v2900 = vpop.f32.mrf.mxu0
    %v2901 = vadd.f32 %v2672, %v2900
    %v2902 = vpop.f32.mrf.mxu0
    %v2903 = vpop.f32.mrf.mxu0
    %v2904 = vpop.f32.mrf.mxu0
    %2905 = vdwg.mxu0
    %2906 = vmatprep.subr.bf16.mxu0 0
    %2907 = vmatpush1.bf16.msra.mxu0 %v2825
    %2908 = vmatprep.subr.bf16.mxu0 0
    %2909 = vmatpush1.bf16.msra.mxu0 %v2824
    %2910 = vmatprep.subr.bf16.mxu0 0
    %2911 = vmatpush1.bf16.msra.mxu0 %v2823
    %2912 = vmatprep.subr.bf16.mxu0 0
    %2913 = vmatpush1.bf16.msra.mxu0 %v2822
    %2914 = vmatprep.subr.bf16.mxu0 0
    %2915 = vmatpush1.bf16.msra.mxu0 %v2821
    %2916 = vmatprep.subr.bf16.mxu0 0
    %2917 = vmatpush1.bf16.msra.mxu0 %v2820
    %2918 = vmatprep.subr.bf16.mxu0 0
    %2919 = vmatpush1.bf16.msra.mxu0 %v2819
    %2920 = vmatprep.subr.bf16.mxu0 0
    %2921 = vmatpush1.bf16.msra.mxu0 %v2818
    %2922 = vmatprep.subr.bf16.mxu0 0
    %2923 = vmatpush2.bf16.msra.mxu0 %v2833
    %2924 = vmatprep.subr.bf16.mxu0 0
    %2925 = vmatpush2.bf16.msra.mxu0 %v2832
    %2926 = vmatprep.subr.bf16.mxu0 0
    %2927 = vmatpush2.bf16.msra.mxu0 %v2831
    %2928 = vmatprep.subr.bf16.mxu0 0
    %2929 = vmatpush2.bf16.msra.mxu0 %v2830
    %2930 = vmatprep.subr.bf16.mxu0 0
    %2931 = vmatpush2.bf16.msra.mxu0 %v2829
    %2932 = vmatprep.subr.bf16.mxu0 0
    %2933 = vmatpush2.bf16.msra.mxu0 %v2828
    %2934 = vmatprep.subr.bf16.mxu0 0
    %2935 = vmatpush2.bf16.msra.mxu0 %v2827
    %2936 = vmatprep.subr.bf16.mxu0 0
    %2937 = vmatpush2.bf16.msra.mxu0 %v2826
    %2938 = vmatprep.mubr.bf16.mxu0 %v2602
    %2939 = vmatmul.mubr.bf16.gmra.mxu0 %v2601
    %v2940 = vpop.f32.mrf.mxu0
    %v2941 = vadd.f32 %v2901, %v2940
    %v2942 = vpop.f32.mrf.mxu0
    %v2943 = vpop.f32.mrf.mxu0
    %v2944 = vpop.f32.mrf.mxu0
    %2945 = vdwg.mxu0
    %v2946 = vmax.f32 %v2941, 0.0
    %2979 = vset.pattern.permute.xlu0 0
    %2980 = vperm.xlu0 %2979, %v2073
    %v2981 = vpop.permute.xlu0 %2980
    %2982 = vset.pattern.permute.xlu0 0
    %2983 = vperm.xlu0 %2982, %v2074
    %v2984 = vpop.permute.xlu0 %2983
    %2985 = vset.pattern.permute.xlu0 0
    %2986 = vperm.xlu0 %2985, %v2075
    %v2987 = vpop.permute.xlu0 %2986
    %2988 = vset.pattern.permute.xlu0 0
    %2989 = vperm.xlu0 %2988, %v2076
    %v2990 = vpop.permute.xlu0 %2989
    %2991 = vset.pattern.permute.xlu0 0
    %2992 = vperm.xlu0 %2991, %v2077
    %v2993 = vpop.permute.xlu0 %2992
    %2994 = vset.pattern.permute.xlu0 0
    %2995 = vperm.xlu0 %2994, %v2078
    %v2996 = vpop.permute.xlu0 %2995
    %2997 = vset.pattern.permute.xlu0 0
    %2998 = vperm.xlu0 %2997, %v2079
    %v2999 = vpop.permute.xlu0 %2998
    %3000 = vset.pattern.permute.xlu0 0
    %3001 = vperm.xlu0 %3000, %v2080
    %v3002 = vpop.permute.xlu0 %3001
    %3003 = vset.pattern.permute.xlu0 0
    %3004 = vperm.xlu0 %3003, %v2081
    %v3005 = vpop.permute.xlu0 %3004
    %3006 = vset.pattern.permute.xlu0 0
    %3007 = vperm.xlu0 %3006, %v2082
    %v3008 = vpop.permute.xlu0 %3007
    %3009 = vset.pattern.permute.xlu0 0
    %3010 = vperm.xlu0 %3009, %v2083
    %v3011 = vpop.permute.xlu0 %3010
    %3012 = vset.pattern.permute.xlu0 0
    %3013 = vperm.xlu0 %3012, %v2084
    %v3014 = vpop.permute.xlu0 %3013
    %3015 = vset.pattern.permute.xlu0 0
    %3016 = vperm.xlu0 %3015, %v2085
    %v3017 = vpop.permute.xlu0 %3016
    %3018 = vset.pattern.permute.xlu0 0
    %3019 = vperm.xlu0 %3018, %v2086
    %v3020 = vpop.permute.xlu0 %3019
    %3021 = vset.pattern.permute.xlu0 0
    %3022 = vperm.xlu0 %3021, %v2087
    %v3023 = vpop.permute.xlu0 %3022
    %3024 = vset.pattern.permute.xlu0 0
    %3025 = vperm.xlu0 %3024, %v2088
    %v3026 = vpop.permute.xlu0 %3025
    %3027 = vset.pattern.permute.xlu0 0
    %3028 = vperm.xlu0 %3027, %v2089
    %v3029 = vpop.permute.xlu0 %3028
    %3030 = vset.pattern.permute.xlu0 0
    %3031 = vperm.xlu0 %3030, %v2090
    %v3032 = vpop.permute.xlu0 %3031
    %3033 = vset.pattern.permute.xlu0 0
    %3034 = vperm.xlu0 %3033, %v2091
    %v3035 = vpop.permute.xlu0 %3034
    %3036 = vset.pattern.permute.xlu0 0
    %3037 = vperm.xlu0 %3036, %v2092
    %v3038 = vpop.permute.xlu0 %3037
    %3039 = vset.pattern.permute.xlu0 0
    %3040 = vperm.xlu0 %3039, %v2093
    %v3041 = vpop.permute.xlu0 %3040
    %3042 = vset.pattern.permute.xlu0 0
    %3043 = vperm.xlu0 %3042, %v2094
    %v3044 = vpop.permute.xlu0 %3043
    %3045 = vset.pattern.permute.xlu0 0
    %3046 = vperm.xlu0 %3045, %v2095
    %v3047 = vpop.permute.xlu0 %3046
    %3048 = vset.pattern.permute.xlu0 0
    %3049 = vperm.xlu0 %3048, %v2096
    %v3050 = vpop.permute.xlu0 %3049
    %3051 = vset.pattern.permute.xlu0 0
    %3052 = vperm.xlu0 %3051, %v2097
    %v3053 = vpop.permute.xlu0 %3052
    %3054 = vset.pattern.permute.xlu0 0
    %3055 = vperm.xlu0 %3054, %v2098
    %v3056 = vpop.permute.xlu0 %3055
    %3057 = vset.pattern.permute.xlu0 0
    %3058 = vperm.xlu0 %3057, %v2099
    %v3059 = vpop.permute.xlu0 %3058
    %3060 = vset.pattern.permute.xlu0 0
    %3061 = vperm.xlu0 %3060, %v2100
    %v3062 = vpop.permute.xlu0 %3061
    %3063 = vset.pattern.permute.xlu0 0
    %3064 = vperm.xlu0 %3063, %v2101
    %v3065 = vpop.permute.xlu0 %3064
    %3066 = vset.pattern.permute.xlu0 0
    %3067 = vperm.xlu0 %3066, %v2102
    %v3068 = vpop.permute.xlu0 %3067
    %3069 = vset.pattern.permute.xlu0 0
    %3070 = vperm.xlu0 %3069, %v2103
    %v3071 = vpop.permute.xlu0 %3070
    %3072 = vset.pattern.permute.xlu0 0
    %3073 = vperm.xlu0 %3072, %v2104
    %v3074 = vpop.permute.xlu0 %3073
    %v3075 = vlaneseq
    %v3076 = vshrl.u32 %v3075, 7
    %v3077 = vsub.s32 %v2296, %v3076
    %v3078 = vrot.slane %v2981, %v3077
    %v3079 = vlaneseq
    %v3080 = vshrl.u32 %v3079, 7
    %v3081 = vsub.s32 %v2301, %v3080
    %v3082 = vrot.slane %v2984, %v3081
    %v3083 = vsel %vm2306, %v3082, %v3078
    %v3084 = vlaneseq
    %v3085 = vshrl.u32 %v3084, 7
    %v3086 = vsub.s32 %v2308, %v3085
    %v3087 = vrot.slane %v2987, %v3086
    %v3088 = vsel %vm2313, %v3087, %v3083
    %v3089 = vlaneseq
    %v3090 = vshrl.u32 %v3089, 7
    %v3091 = vsub.s32 %v2315, %v3090
    %v3092 = vrot.slane %v2990, %v3091
    %v3093 = vsel %vm2320, %v3092, %v3088
    %v3094 = vlaneseq
    %v3095 = vshrl.u32 %v3094, 7
    %v3096 = vsub.s32 %v2296, %v3095
    %v3097 = vrot.slane %v2993, %v3096
    %v3098 = vlaneseq
    %v3099 = vshrl.u32 %v3098, 7
    %v3100 = vsub.s32 %v2301, %v3099
    %v3101 = vrot.slane %v2996, %v3100
    %v3102 = vsel %vm2306, %v3101, %v3097
    %v3103 = vlaneseq
    %v3104 = vshrl.u32 %v3103, 7
    %v3105 = vsub.s32 %v2308, %v3104
    %v3106 = vrot.slane %v2999, %v3105
    %v3107 = vsel %vm2313, %v3106, %v3102
    %v3108 = vlaneseq
    %v3109 = vshrl.u32 %v3108, 7
    %v3110 = vsub.s32 %v2315, %v3109
    %v3111 = vrot.slane %v3002, %v3110
    %v3112 = vsel %vm2320, %v3111, %v3107
    %v3113 = vlaneseq
    %v3114 = vshrl.u32 %v3113, 7
    %v3115 = vsub.s32 %v2296, %v3114
    %v3116 = vrot.slane %v3005, %v3115
    %v3117 = vlaneseq
    %v3118 = vshrl.u32 %v3117, 7
    %v3119 = vsub.s32 %v2301, %v3118
    %v3120 = vrot.slane %v3008, %v3119
    %v3121 = vsel %vm2306, %v3120, %v3116
    %v3122 = vlaneseq
    %v3123 = vshrl.u32 %v3122, 7
    %v3124 = vsub.s32 %v2308, %v3123
    %v3125 = vrot.slane %v3011, %v3124
    %v3126 = vsel %vm2313, %v3125, %v3121
    %v3127 = vlaneseq
    %v3128 = vshrl.u32 %v3127, 7
    %v3129 = vsub.s32 %v2315, %v3128
    %v3130 = vrot.slane %v3014, %v3129
    %v3131 = vsel %vm2320, %v3130, %v3126
    %v3132 = vlaneseq
    %v3133 = vshrl.u32 %v3132, 7
    %v3134 = vsub.s32 %v2296, %v3133
    %v3135 = vrot.slane %v3017, %v3134
    %v3136 = vlaneseq
    %v3137 = vshrl.u32 %v3136, 7
    %v3138 = vsub.s32 %v2301, %v3137
    %v3139 = vrot.slane %v3020, %v3138
    %v3140 = vsel %vm2306, %v3139, %v3135
    %v3141 = vlaneseq
    %v3142 = vshrl.u32 %v3141, 7
    %v3143 = vsub.s32 %v2308, %v3142
    %v3144 = vrot.slane %v3023, %v3143
    %v3145 = vsel %vm2313, %v3144, %v3140
    %v3146 = vlaneseq
    %v3147 = vshrl.u32 %v3146, 7
    %v3148 = vsub.s32 %v2315, %v3147
    %v3149 = vrot.slane %v3026, %v3148
    %v3150 = vsel %vm2320, %v3149, %v3145
    %v3151 = vlaneseq
    %v3152 = vshrl.u32 %v3151, 7
    %v3153 = vsub.s32 %v2296, %v3152
    %v3154 = vrot.slane %v3029, %v3153
    %v3155 = vlaneseq
    %v3156 = vshrl.u32 %v3155, 7
    %v3157 = vsub.s32 %v2301, %v3156
    %v3158 = vrot.slane %v3032, %v3157
    %v3159 = vsel %vm2306, %v3158, %v3154
    %v3160 = vlaneseq
    %v3161 = vshrl.u32 %v3160, 7
    %v3162 = vsub.s32 %v2308, %v3161
    %v3163 = vrot.slane %v3035, %v3162
    %v3164 = vsel %vm2313, %v3163, %v3159
    %v3165 = vlaneseq
    %v3166 = vshrl.u32 %v3165, 7
    %v3167 = vsub.s32 %v2315, %v3166
    %v3168 = vrot.slane %v3038, %v3167
    %v3169 = vsel %vm2320, %v3168, %v3164
    %v3170 = vlaneseq
    %v3171 = vshrl.u32 %v3170, 7
    %v3172 = vsub.s32 %v2296, %v3171
    %v3173 = vrot.slane %v3041, %v3172
    %v3174 = vlaneseq
    %v3175 = vshrl.u32 %v3174, 7
    %v3176 = vsub.s32 %v2301, %v3175
    %v3177 = vrot.slane %v3044, %v3176
    %v3178 = vsel %vm2306, %v3177, %v3173
    %v3179 = vlaneseq
    %v3180 = vshrl.u32 %v3179, 7
    %v3181 = vsub.s32 %v2308, %v3180
    %v3182 = vrot.slane %v3047, %v3181
    %v3183 = vsel %vm2313, %v3182, %v3178
    %v3184 = vlaneseq
    %v3185 = vshrl.u32 %v3184, 7
    %v3186 = vsub.s32 %v2315, %v3185
    %v3187 = vrot.slane %v3050, %v3186
    %v3188 = vsel %vm2320, %v3187, %v3183
    %v3189 = vlaneseq
    %v3190 = vshrl.u32 %v3189, 7
    %v3191 = vsub.s32 %v2296, %v3190
    %v3192 = vrot.slane %v3053, %v3191
    %v3193 = vlaneseq
    %v3194 = vshrl.u32 %v3193, 7
    %v3195 = vsub.s32 %v2301, %v3194
    %v3196 = vrot.slane %v3056, %v3195
    %v3197 = vsel %vm2306, %v3196, %v3192
    %v3198 = vlaneseq
    %v3199 = vshrl.u32 %v3198, 7
    %v3200 = vsub.s32 %v2308, %v3199
    %v3201 = vrot.slane %v3059, %v3200
    %v3202 = vsel %vm2313, %v3201, %v3197
    %v3203 = vlaneseq
    %v3204 = vshrl.u32 %v3203, 7
    %v3205 = vsub.s32 %v2315, %v3204
    %v3206 = vrot.slane %v3062, %v3205
    %v3207 = vsel %vm2320, %v3206, %v3202
    %v3208 = vlaneseq
    %v3209 = vshrl.u32 %v3208, 7
    %v3210 = vsub.s32 %v2296, %v3209
    %v3211 = vrot.slane %v3065, %v3210
    %v3212 = vlaneseq
    %v3213 = vshrl.u32 %v3212, 7
    %v3214 = vsub.s32 %v2301, %v3213
    %v3215 = vrot.slane %v3068, %v3214
    %v3216 = vsel %vm2306, %v3215, %v3211
    %v3217 = vlaneseq
    %v3218 = vshrl.u32 %v3217, 7
    %v3219 = vsub.s32 %v2308, %v3218
    %v3220 = vrot.slane %v3071, %v3219
    %v3221 = vsel %vm2313, %v3220, %v3216
    %v3222 = vlaneseq
    %v3223 = vshrl.u32 %v3222, 7
    %v3224 = vsub.s32 %v2315, %v3223
    %v3225 = vrot.slane %v3074, %v3224
    %v3226 = vsel %vm2320, %v3225, %v3221
    %v3227 = vsel %vm2455, %v3112, %v3093
    %v3228 = vsel %vm2457, %v3131, %v3227
    %v3229 = vsel %vm2459, %v3150, %v3228
    %v3230 = vsel %vm2461, %v3169, %v3229
    %v3231 = vsel %vm2463, %v3188, %v3230
    %v3232 = vsel %vm2465, %v3207, %v3231
    %v3233 = vsel %vm2467, %v3226, %v3232
    %v3235 = vadd.f32 %v2946, %v3233
    %v3236 = vpack.c.bf16 %v3235, %v3235
    %v3237 = vld [vmem:[%s7] sm:$0xff]
    %v3238 = vld [vmem:[%s7 + $0x8] sm:$0xf]
    %v3239 = vld [vmem:[%s7 + $0xc] sm:$0xff]
    %v3240 = vld [vmem:[%s7 + $0x14] sm:$0xf]
    %v3241 = vld [vmem:[%s7 + $0x18] sm:$0xff]
    %v3242 = vld [vmem:[%s7 + $0x20] sm:$0xf]
    %v3243 = vld [vmem:[%s7 + $0x24] sm:$0xff]
    %v3244 = vld [vmem:[%s7 + $0x2c] sm:$0xf]
    %v3245 = vld [vmem:[%s8] sm:$0x7]
    %v3247 = vlaneseq
    %v3248 = vshrl.u32 %v3247, 7
    %v3249 = vsub.s32 0, %v3248
    %v3250 = vrot.slane %v3245, %v3249
    %v3251 = vlaneseq
    %v3252 = vshrl.u32 %v3251, 7
    %v3253 = vsub.s32 1, %v3252
    %v3254 = vrot.slane %v3245, %v3253
    %v3255 = vlaneseq
    %v3256 = vshrl.u32 %v3255, 7
    %v3257 = vsub.s32 2, %v3256
    %v3258 = vrot.slane %v3245, %v3257
    %v3270 = vunpack.c.l.b16 %v3237
    %v3271 = vunpack.c.h.b16 %v3237
    %v3272 = vunpack.c.l.b16 %v3238
    %v3273 = vunpack.c.l.b16 %v3239
    %v3274 = vunpack.c.h.b16 %v3239
    %v3275 = vunpack.c.l.b16 %v3240
    %v3276 = vunpack.c.l.b16 %v3241
    %v3277 = vunpack.c.h.b16 %v3241
    %v3278 = vunpack.c.l.b16 %v3242
    %v3279 = vunpack.c.l.b16 %v3243
    %v3280 = vunpack.c.h.b16 %v3243
    %v3281 = vunpack.c.l.b16 %v3244
    %v3282 = vpack.c.b16 %v3273, %v3270
    %v3283 = vpack.c.b16 %v3274, %v3271
    %v3284 = vpack.c.b16 %v3275, %v3272
    %v3285 = vpack.c.b16 %v3279, %v3276
    %v3286 = vpack.c.b16 %v3280, %v3277
    %v3287 = vpack.c.b16 %v3281, %v3278
    %v3295 = vsel %vm119, %v3236, 0
    %3297 = vmatprep.subr.bf16.mxu0 0
    %3298 = vmatpush1.bf16.msra.mxu0 0
    %3299 = vmatprep.subr.bf16.mxu0 0
    %3300 = vmatpush1.bf16.msra.mxu0 0
    %3301 = vmatprep.subr.bf16.mxu0 0
    %3302 = vmatpush1.bf16.msra.mxu0 0
    %3303 = vmatprep.subr.bf16.mxu0 0
    %3304 = vmatpush1.bf16.msra.mxu0 0
    %3305 = vmatprep.subr.bf16.mxu0 0
    %3306 = vmatpush1.bf16.msra.mxu0 0
    %3307 = vmatprep.subr.bf16.mxu0 0
    %3308 = vmatpush1.bf16.msra.mxu0 0
    %3309 = vmatprep.subr.bf16.mxu0 %v3286
    %3310 = vmatpush1.bf16.msra.mxu0 %v3285
    %3311 = vmatprep.subr.bf16.mxu0 %v3283
    %3312 = vmatpush1.bf16.msra.mxu0 %v3282
    %3313 = vmatprep.subr.bf16.mxu0 0
    %3314 = vmatpush2.bf16.msra.mxu0 0
    %3315 = vmatprep.subr.bf16.mxu0 0
    %3316 = vmatpush2.bf16.msra.mxu0 0
    %3317 = vmatprep.subr.bf16.mxu0 0
    %3318 = vmatpush2.bf16.msra.mxu0 0
    %3319 = vmatprep.subr.bf16.mxu0 0
    %3320 = vmatpush2.bf16.msra.mxu0 0
    %3321 = vmatprep.subr.bf16.mxu0 0
    %3322 = vmatpush2.bf16.msra.mxu0 0
    %3323 = vmatprep.subr.bf16.mxu0 0
    %3324 = vmatpush2.bf16.msra.mxu0 0
    %3325 = vmatprep.subr.bf16.mxu0 0
    %3326 = vmatpush2.bf16.msra.mxu0 0
    %3327 = vmatprep.subr.bf16.mxu0 0
    %3328 = vmatpush2.bf16.msra.mxu0 0
    %3329 = vmatprep.mubr.bf16.mxu0 0
    %3330 = vmatmul.mubr.bf16.gmra.mxu0 %v3295
    %v3331 = vpop.f32.mrf.mxu0
    %v3332 = vadd.f32 %v3250, %v3331
    %v3333 = vpop.f32.mrf.mxu0
    %v3334 = vadd.f32 %v3254, %v3333
    %v3335 = vpop.f32.mrf.mxu0
    %v3336 = vpop.f32.mrf.mxu0
    %3337 = vdwg.mxu0
    %3338 = vmatprep.subr.bf16.mxu0 0
    %3339 = vmatpush1.bf16.msra.mxu0 0
    %3340 = vmatprep.subr.bf16.mxu0 0
    %3341 = vmatpush1.bf16.msra.mxu0 0
    %3342 = vmatprep.subr.bf16.mxu0 0
    %3343 = vmatpush1.bf16.msra.mxu0 0
    %3344 = vmatprep.subr.bf16.mxu0 0
    %3345 = vmatpush1.bf16.msra.mxu0 0
    %3346 = vmatprep.subr.bf16.mxu0 0
    %3347 = vmatpush1.bf16.msra.mxu0 0
    %3348 = vmatprep.subr.bf16.mxu0 0
    %3349 = vmatpush1.bf16.msra.mxu0 0
    %3350 = vmatprep.subr.bf16.mxu0 0
    %3351 = vmatpush1.bf16.msra.mxu0 %v3287
    %3352 = vmatprep.subr.bf16.mxu0 0
    %3353 = vmatpush1.bf16.msra.mxu0 %v3284
    %3354 = vmatprep.subr.bf16.mxu0 0
    %3355 = vmatpush2.bf16.msra.mxu0 0
    %3356 = vmatprep.subr.bf16.mxu0 0
    %3357 = vmatpush2.bf16.msra.mxu0 0
    %3358 = vmatprep.subr.bf16.mxu0 0
    %3359 = vmatpush2.bf16.msra.mxu0 0
    %3360 = vmatprep.subr.bf16.mxu0 0
    %3361 = vmatpush2.bf16.msra.mxu0 0
    %3362 = vmatprep.subr.bf16.mxu0 0
    %3363 = vmatpush2.bf16.msra.mxu0 0
    %3364 = vmatprep.subr.bf16.mxu0 0
    %3365 = vmatpush2.bf16.msra.mxu0 0
    %3366 = vmatprep.subr.bf16.mxu0 0
    %3367 = vmatpush2.bf16.msra.mxu0 0
    %3368 = vmatprep.subr.bf16.mxu0 0
    %3369 = vmatpush2.bf16.msra.mxu0 0
    %3370 = vmatprep.mubr.bf16.mxu0 0
    %3371 = vmatmul.mubr.bf16.gmra.mxu0 %v3295
    %v3372 = vpop.f32.mrf.mxu0
    %v3373 = vadd.f32 %v3258, %v3372
    %v3374 = vpop.f32.mrf.mxu0
    %v3375 = vpop.f32.mrf.mxu0
    %v3376 = vpop.f32.mrf.mxu0
    %3377 = vdwg.mxu0
    %v3378 = vsel %vm119, %v3334, -inf
    %3379 = vmax.xlane.f32.xlu0 %v3378
    %v3380 = vpop.xlane.xlu0 %3379
    %v3381 = vsel %vm119, %v3334, inf
    %3382 = vmin.xlane.f32.xlu0 %v3381
    %v3383 = vpop.xlane.xlu0 %3382
    %v3384 = vmul.f32 %v3332, %v3380
    %v3385 = vmul.f32 %v3332, %v3383
    %v3386 = vmax.f32 %v3384, %v3385
    %v3387 = vlaneseq
    %v3388 = vshrl.u32 %v3387, 7
    %v3389 = vsub.s32 0, %v3388
    %v3390 = vrot.slane %v3332, %v3389
    %3392 = vbcast.lane.b32.xlu0 %v3390, 256
    %v3393 = vpop.permute.xlu0 %3392
    %s3395 = sor.u32 256, 8
    %3396 = vbcast.lane.b32.xlu0 %v3390, %s3395
    %v3397 = vpop.permute.xlu0 %3396
    %s3399 = sor.u32 256, 16
    %3400 = vbcast.lane.b32.xlu0 %v3390, %s3399
    %v3401 = vpop.permute.xlu0 %3400
    %s3403 = sor.u32 256, 24
    %3404 = vbcast.lane.b32.xlu0 %v3390, %s3403
    %v3405 = vpop.permute.xlu0 %3404
    %v3406 = vlaneseq
    %v3407 = vshrl.u32 %v3406, 7
    %v3408 = vsub.s32 1, %v3407
    %v3409 = vrot.slane %v3332, %v3408
    %3411 = vbcast.lane.b32.xlu0 %v3409, 256
    %v3412 = vpop.permute.xlu0 %3411
    %s3414 = sor.u32 256, 8
    %3415 = vbcast.lane.b32.xlu0 %v3409, %s3414
    %v3416 = vpop.permute.xlu0 %3415
    %s3418 = sor.u32 256, 16
    %3419 = vbcast.lane.b32.xlu0 %v3409, %s3418
    %v3420 = vpop.permute.xlu0 %3419
    %s3422 = sor.u32 256, 24
    %3423 = vbcast.lane.b32.xlu0 %v3409, %s3422
    %v3424 = vpop.permute.xlu0 %3423
    %v3425 = vlaneseq
    %v3426 = vshrl.u32 %v3425, 7
    %v3427 = vsub.s32 2, %v3426
    %v3428 = vrot.slane %v3332, %v3427
    %3430 = vbcast.lane.b32.xlu0 %v3428, 256
    %v3431 = vpop.permute.xlu0 %3430
    %s3433 = sor.u32 256, 8
    %3434 = vbcast.lane.b32.xlu0 %v3428, %s3433
    %v3435 = vpop.permute.xlu0 %3434
    %s3437 = sor.u32 256, 16
    %3438 = vbcast.lane.b32.xlu0 %v3428, %s3437
    %v3439 = vpop.permute.xlu0 %3438
    %s3441 = sor.u32 256, 24
    %3442 = vbcast.lane.b32.xlu0 %v3428, %s3441
    %v3443 = vpop.permute.xlu0 %3442
    %v3444 = vlaneseq
    %v3445 = vshrl.u32 %v3444, 7
    %v3446 = vsub.s32 3, %v3445
    %v3447 = vrot.slane %v3332, %v3446
    %3449 = vbcast.lane.b32.xlu0 %v3447, 256
    %v3450 = vpop.permute.xlu0 %3449
    %s3452 = sor.u32 256, 8
    %3453 = vbcast.lane.b32.xlu0 %v3447, %s3452
    %v3454 = vpop.permute.xlu0 %3453
    %s3456 = sor.u32 256, 16
    %3457 = vbcast.lane.b32.xlu0 %v3447, %s3456
    %v3458 = vpop.permute.xlu0 %3457
    %s3460 = sor.u32 256, 24
    %3461 = vbcast.lane.b32.xlu0 %v3447, %s3460
    %v3462 = vpop.permute.xlu0 %3461
    %v3463 = vlaneseq
    %v3464 = vshrl.u32 %v3463, 7
    %v3465 = vsub.s32 4, %v3464
    %v3466 = vrot.slane %v3332, %v3465
    %3468 = vbcast.lane.b32.xlu0 %v3466, 256
    %v3469 = vpop.permute.xlu0 %3468
    %s3471 = sor.u32 256, 8
    %3472 = vbcast.lane.b32.xlu0 %v3466, %s3471
    %v3473 = vpop.permute.xlu0 %3472
    %s3475 = sor.u32 256, 16
    %3476 = vbcast.lane.b32.xlu0 %v3466, %s3475
    %v3477 = vpop.permute.xlu0 %3476
    %s3479 = sor.u32 256, 24
    %3480 = vbcast.lane.b32.xlu0 %v3466, %s3479
    %v3481 = vpop.permute.xlu0 %3480
    %v3482 = vlaneseq
    %v3483 = vshrl.u32 %v3482, 7
    %v3484 = vsub.s32 5, %v3483
    %v3485 = vrot.slane %v3332, %v3484
    %3487 = vbcast.lane.b32.xlu0 %v3485, 256
    %v3488 = vpop.permute.xlu0 %3487
    %s3490 = sor.u32 256, 8
    %3491 = vbcast.lane.b32.xlu0 %v3485, %s3490
    %v3492 = vpop.permute.xlu0 %3491
    %s3494 = sor.u32 256, 16
    %3495 = vbcast.lane.b32.xlu0 %v3485, %s3494
    %v3496 = vpop.permute.xlu0 %3495
    %s3498 = sor.u32 256, 24
    %3499 = vbcast.lane.b32.xlu0 %v3485, %s3498
    %v3500 = vpop.permute.xlu0 %3499
    %v3501 = vlaneseq
    %v3502 = vshrl.u32 %v3501, 7
    %v3503 = vsub.s32 6, %v3502
    %v3504 = vrot.slane %v3332, %v3503
    %3506 = vbcast.lane.b32.xlu0 %v3504, 256
    %v3507 = vpop.permute.xlu0 %3506
    %s3509 = sor.u32 256, 8
    %3510 = vbcast.lane.b32.xlu0 %v3504, %s3509
    %v3511 = vpop.permute.xlu0 %3510
    %s3513 = sor.u32 256, 16
    %3514 = vbcast.lane.b32.xlu0 %v3504, %s3513
    %v3515 = vpop.permute.xlu0 %3514
    %s3517 = sor.u32 256, 24
    %3518 = vbcast.lane.b32.xlu0 %v3504, %s3517
    %v3519 = vpop.permute.xlu0 %3518
    %v3520 = vlaneseq
    %v3521 = vshrl.u32 %v3520, 7
    %v3522 = vsub.s32 7, %v3521
    %v3523 = vrot.slane %v3332, %v3522
    %3525 = vbcast.lane.b32.xlu0 %v3523, 256
    %v3526 = vpop.permute.xlu0 %3525
    %s3528 = sor.u32 256, 8
    %3529 = vbcast.lane.b32.xlu0 %v3523, %s3528
    %v3530 = vpop.permute.xlu0 %3529
    %s3532 = sor.u32 256, 16
    %3533 = vbcast.lane.b32.xlu0 %v3523, %s3532
    %v3534 = vpop.permute.xlu0 %3533
    %s3536 = sor.u32 256, 24
    %3537 = vbcast.lane.b32.xlu0 %v3523, %s3536
    %v3538 = vpop.permute.xlu0 %3537
    %v3540 = vcombine.high %v3334, %v3334
    %v3542 = vunpack.c.l.s4 1966171168
    %v3543 = vunpack.c.0.s8 %v3542
    %v3544 = vlaneseq
    %v3545 = vshrl.u32 %v3544, 7
    %v3546 = vsub.s32 %v3543, %v3545
    %v3547 = vrot.slane %v3334, %v3546
    %v3549 = vunpack.c.l.s4 1966171168
    %v3550 = vunpack.c.0.s8 %v3549
    %v3551 = vlaneseq
    %v3552 = vshrl.u32 %v3551, 7
    %v3553 = vsub.s32 %v3550, %v3552
    %v3554 = vrot.slane %v3540, %v3553
    %v3555 = vcombine.high %v3547, %v3547
    %v3556 = vcombine.high %v3554, %v3554
    %v3558 = vunpack.c.l.s4 1966171168
    %v3559 = vunpack.c.0.s8 %v3558
    %v3560 = vlaneseq
    %v3561 = vshrl.u32 %v3560, 7
    %v3562 = vsub.s32 %v3559, %v3561
    %v3563 = vrot.slane %v3547, %v3562
    %v3565 = vunpack.c.l.s4 1966171168
    %v3566 = vunpack.c.0.s8 %v3565
    %v3567 = vlaneseq
    %v3568 = vshrl.u32 %v3567, 7
    %v3569 = vsub.s32 %v3566, %v3568
    %v3570 = vrot.slane %v3554, %v3569
    %v3572 = vunpack.c.l.s4 1966171168
    %v3573 = vunpack.c.0.s8 %v3572
    %v3574 = vlaneseq
    %v3575 = vshrl.u32 %v3574, 7
    %v3576 = vsub.s32 %v3573, %v3575
    %v3577 = vrot.slane %v3555, %v3576
    %v3579 = vunpack.c.l.s4 1966171168
    %v3580 = vunpack.c.0.s8 %v3579
    %v3581 = vlaneseq
    %v3582 = vshrl.u32 %v3581, 7
    %v3583 = vsub.s32 %v3580, %v3582
    %v3584 = vrot.slane %v3556, %v3583
    %v3585 = vcombine.high %v3563, %v3563
    %v3586 = vcombine.high %v3570, %v3570
    %v3587 = vcombine.high %v3577, %v3577
    %v3588 = vcombine.high %v3584, %v3584
    %v3589 = vlaneseq
    %v3590 = vshrl.u32 %v3589, 7
    %v3591 = vsub.s32 0, %v3590
    %v3592 = vrot.slane %v3563, %v3591
    %v3593 = vlaneseq
    %v3594 = vshrl.u32 %v3593, 7
    %v3595 = vsub.s32 0, %v3594
    %v3596 = vrot.slane %v3577, %v3595
    %v3597 = vlaneseq
    %v3598 = vshrl.u32 %v3597, 7
    %v3599 = vsub.s32 0, %v3598
    %v3600 = vrot.slane %v3585, %v3599
    %v3601 = vlaneseq
    %v3602 = vshrl.u32 %v3601, 7
    %v3603 = vsub.s32 0, %v3602
    %v3604 = vrot.slane %v3587, %v3603
    %v3605 = vlaneseq
    %v3606 = vshrl.u32 %v3605, 7
    %v3607 = vsub.s32 0, %v3606
    %v3608 = vrot.slane %v3570, %v3607
    %v3609 = vlaneseq
    %v3610 = vshrl.u32 %v3609, 7
    %v3611 = vsub.s32 0, %v3610
    %v3612 = vrot.slane %v3584, %v3611
    %v3613 = vlaneseq
    %v3614 = vshrl.u32 %v3613, 7
    %v3615 = vsub.s32 0, %v3614
    %v3616 = vrot.slane %v3586, %v3615
    %v3617 = vlaneseq
    %v3618 = vshrl.u32 %v3617, 7
    %v3619 = vsub.s32 0, %v3618
    %v3620 = vrot.slane %v3588, %v3619
    %v3629 = vmul.f32 %v3393, %v3592
    %v3630 = vmul.f32 %v3397, %v3592
    %v3631 = vmul.f32 %v3401, %v3592
    %v3632 = vmul.f32 %v3405, %v3592
    %v3633 = vmul.f32 %v3412, %v3596
    %v3634 = vmul.f32 %v3416, %v3596
    %v3635 = vmul.f32 %v3420, %v3596
    %v3636 = vmul.f32 %v3424, %v3596
    %v3637 = vmul.f32 %v3431, %v3600
    %v3638 = vmul.f32 %v3435, %v3600
    %v3639 = vmul.f32 %v3439, %v3600
    %v3640 = vmul.f32 %v3443, %v3600
    %v3641 = vmul.f32 %v3450, %v3604
    %v3642 = vmul.f32 %v3454, %v3604
    %v3643 = vmul.f32 %v3458, %v3604
    %v3644 = vmul.f32 %v3462, %v3604
    %v3645 = vmul.f32 %v3469, %v3608
    %v3646 = vmul.f32 %v3473, %v3608
    %v3647 = vmul.f32 %v3477, %v3608
    %v3648 = vmul.f32 %v3481, %v3608
    %v3649 = vmul.f32 %v3488, %v3612
    %v3650 = vmul.f32 %v3492, %v3612
    %v3651 = vmul.f32 %v3496, %v3612
    %v3652 = vmul.f32 %v3500, %v3612
    %v3653 = vmul.f32 %v3507, %v3616
    %v3654 = vmul.f32 %v3511, %v3616
    %v3655 = vmul.f32 %v3515, %v3616
    %v3656 = vmul.f32 %v3519, %v3616
    %v3657 = vmul.f32 %v3526, %v3620
    %v3658 = vmul.f32 %v3530, %v3620
    %v3659 = vmul.f32 %v3534, %v3620
    %v3660 = vmul.f32 %v3538, %v3620
    %v3661 = vlaneseq
    %v3662 = vshrl.u32 %v3661, 7
    %v3663 = vsub.s32 0, %v3662
    %v3664 = vrot.slane %v3386, %v3663
    %3666 = vbcast.lane.b32.xlu0 %v3664, 256
    %v3667 = vpop.permute.xlu0 %3666
    %s3669 = sor.u32 256, 8
    %3670 = vbcast.lane.b32.xlu0 %v3664, %s3669
    %v3671 = vpop.permute.xlu0 %3670
    %s3673 = sor.u32 256, 16
    %3674 = vbcast.lane.b32.xlu0 %v3664, %s3673
    %v3675 = vpop.permute.xlu0 %3674
    %s3677 = sor.u32 256, 24
    %3678 = vbcast.lane.b32.xlu0 %v3664, %s3677
    %v3679 = vpop.permute.xlu0 %3678
    %v3680 = vlaneseq
    %v3681 = vshrl.u32 %v3680, 7
    %v3682 = vsub.s32 1, %v3681
    %v3683 = vrot.slane %v3386, %v3682
    %3685 = vbcast.lane.b32.xlu0 %v3683, 256
    %v3686 = vpop.permute.xlu0 %3685
    %s3688 = sor.u32 256, 8
    %3689 = vbcast.lane.b32.xlu0 %v3683, %s3688
    %v3690 = vpop.permute.xlu0 %3689
    %s3692 = sor.u32 256, 16
    %3693 = vbcast.lane.b32.xlu0 %v3683, %s3692
    %v3694 = vpop.permute.xlu0 %3693
    %s3696 = sor.u32 256, 24
    %3697 = vbcast.lane.b32.xlu0 %v3683, %s3696
    %v3698 = vpop.permute.xlu0 %3697
    %v3699 = vlaneseq
    %v3700 = vshrl.u32 %v3699, 7
    %v3701 = vsub.s32 2, %v3700
    %v3702 = vrot.slane %v3386, %v3701
    %3704 = vbcast.lane.b32.xlu0 %v3702, 256
    %v3705 = vpop.permute.xlu0 %3704
    %s3707 = sor.u32 256, 8
    %3708 = vbcast.lane.b32.xlu0 %v3702, %s3707
    %v3709 = vpop.permute.xlu0 %3708
    %s3711 = sor.u32 256, 16
    %3712 = vbcast.lane.b32.xlu0 %v3702, %s3711
    %v3713 = vpop.permute.xlu0 %3712
    %s3715 = sor.u32 256, 24
    %3716 = vbcast.lane.b32.xlu0 %v3702, %s3715
    %v3717 = vpop.permute.xlu0 %3716
    %v3718 = vlaneseq
    %v3719 = vshrl.u32 %v3718, 7
    %v3720 = vsub.s32 3, %v3719
    %v3721 = vrot.slane %v3386, %v3720
    %3723 = vbcast.lane.b32.xlu0 %v3721, 256
    %v3724 = vpop.permute.xlu0 %3723
    %s3726 = sor.u32 256, 8
    %3727 = vbcast.lane.b32.xlu0 %v3721, %s3726
    %v3728 = vpop.permute.xlu0 %3727
    %s3730 = sor.u32 256, 16
    %3731 = vbcast.lane.b32.xlu0 %v3721, %s3730
    %v3732 = vpop.permute.xlu0 %3731
    %s3734 = sor.u32 256, 24
    %3735 = vbcast.lane.b32.xlu0 %v3721, %s3734
    %v3736 = vpop.permute.xlu0 %3735
    %v3737 = vlaneseq
    %v3738 = vshrl.u32 %v3737, 7
    %v3739 = vsub.s32 4, %v3738
    %v3740 = vrot.slane %v3386, %v3739
    %3742 = vbcast.lane.b32.xlu0 %v3740, 256
    %v3743 = vpop.permute.xlu0 %3742
    %s3745 = sor.u32 256, 8
    %3746 = vbcast.lane.b32.xlu0 %v3740, %s3745
    %v3747 = vpop.permute.xlu0 %3746
    %s3749 = sor.u32 256, 16
    %3750 = vbcast.lane.b32.xlu0 %v3740, %s3749
    %v3751 = vpop.permute.xlu0 %3750
    %s3753 = sor.u32 256, 24
    %3754 = vbcast.lane.b32.xlu0 %v3740, %s3753
    %v3755 = vpop.permute.xlu0 %3754
    %v3756 = vlaneseq
    %v3757 = vshrl.u32 %v3756, 7
    %v3758 = vsub.s32 5, %v3757
    %v3759 = vrot.slane %v3386, %v3758
    %3761 = vbcast.lane.b32.xlu0 %v3759, 256
    %v3762 = vpop.permute.xlu0 %3761
    %s3764 = sor.u32 256, 8
    %3765 = vbcast.lane.b32.xlu0 %v3759, %s3764
    %v3766 = vpop.permute.xlu0 %3765
    %s3768 = sor.u32 256, 16
    %3769 = vbcast.lane.b32.xlu0 %v3759, %s3768
    %v3770 = vpop.permute.xlu0 %3769
    %s3772 = sor.u32 256, 24
    %3773 = vbcast.lane.b32.xlu0 %v3759, %s3772
    %v3774 = vpop.permute.xlu0 %3773
    %v3775 = vlaneseq
    %v3776 = vshrl.u32 %v3775, 7
    %v3777 = vsub.s32 6, %v3776
    %v3778 = vrot.slane %v3386, %v3777
    %3780 = vbcast.lane.b32.xlu0 %v3778, 256
    %v3781 = vpop.permute.xlu0 %3780
    %s3783 = sor.u32 256, 8
    %3784 = vbcast.lane.b32.xlu0 %v3778, %s3783
    %v3785 = vpop.permute.xlu0 %3784
    %s3787 = sor.u32 256, 16
    %3788 = vbcast.lane.b32.xlu0 %v3778, %s3787
    %v3789 = vpop.permute.xlu0 %3788
    %s3791 = sor.u32 256, 24
    %3792 = vbcast.lane.b32.xlu0 %v3778, %s3791
    %v3793 = vpop.permute.xlu0 %3792
    %v3794 = vlaneseq
    %v3795 = vshrl.u32 %v3794, 7
    %v3796 = vsub.s32 7, %v3795
    %v3797 = vrot.slane %v3386, %v3796
    %3799 = vbcast.lane.b32.xlu0 %v3797, 256
    %v3800 = vpop.permute.xlu0 %3799
    %s3802 = sor.u32 256, 8
    %3803 = vbcast.lane.b32.xlu0 %v3797, %s3802
    %v3804 = vpop.permute.xlu0 %3803
    %s3806 = sor.u32 256, 16
    %3807 = vbcast.lane.b32.xlu0 %v3797, %s3806
    %v3808 = vpop.permute.xlu0 %3807
    %s3810 = sor.u32 256, 24
    %3811 = vbcast.lane.b32.xlu0 %v3797, %s3810
    %v3812 = vpop.permute.xlu0 %3811
    %v3813 = vsub.f32 %v3629, %v3667
    %v3814 = vsub.f32 %v3630, %v3671
    %v3815 = vsub.f32 %v3631, %v3675
    %v3816 = vsub.f32 %v3632, %v3679
    %v3817 = vsub.f32 %v3633, %v3686
    %v3818 = vsub.f32 %v3634, %v3690
    %v3819 = vsub.f32 %v3635, %v3694
    %v3820 = vsub.f32 %v3636, %v3698
    %v3821 = vsub.f32 %v3637, %v3705
    %v3822 = vsub.f32 %v3638, %v3709
    %v3823 = vsub.f32 %v3639, %v3713
    %v3824 = vsub.f32 %v3640, %v3717
    %v3825 = vsub.f32 %v3641, %v3724
    %v3826 = vsub.f32 %v3642, %v3728
    %v3827 = vsub.f32 %v3643, %v3732
    %v3828 = vsub.f32 %v3644, %v3736
    %v3829 = vsub.f32 %v3645, %v3743
    %v3830 = vsub.f32 %v3646, %v3747
    %v3831 = vsub.f32 %v3647, %v3751
    %v3832 = vsub.f32 %v3648, %v3755
    %v3833 = vsub.f32 %v3649, %v3762
    %v3834 = vsub.f32 %v3650, %v3766
    %v3835 = vsub.f32 %v3651, %v3770
    %v3836 = vsub.f32 %v3652, %v3774
    %v3837 = vsub.f32 %v3653, %v3781
    %v3838 = vsub.f32 %v3654, %v3785
    %v3839 = vsub.f32 %v3655, %v3789
    %v3840 = vsub.f32 %v3656, %v3793
    %v3841 = vsub.f32 %v3657, %v3800
    %v3842 = vsub.f32 %v3658, %v3804
    %v3843 = vsub.f32 %v3659, %v3808
    %v3844 = vsub.f32 %v3660, %v3812
    %v3845 = vmul.f32 %v3813, 1.442695
    %v3846 = vpow.pop %v3845
    %v3847 = vmul.f32 %v3814, 1.442695
    %v3848 = vpow.pop %v3847
    %v3849 = vmul.f32 %v3815, 1.442695
    %v3850 = vpow.pop %v3849
    %v3851 = vmul.f32 %v3816, 1.442695
    %v3852 = vpow.pop %v3851
    %v3853 = vmul.f32 %v3817, 1.442695
    %v3854 = vpow.pop %v3853
    %v3855 = vmul.f32 %v3818, 1.442695
    %v3856 = vpow.pop %v3855
    %v3857 = vmul.f32 %v3819, 1.442695
    %v3858 = vpow.pop %v3857
    %v3859 = vmul.f32 %v3820, 1.442695
    %v3860 = vpow.pop %v3859
    %v3861 = vmul.f32 %v3821, 1.442695
    %v3862 = vpow.pop %v3861
    %v3863 = vmul.f32 %v3822, 1.442695
    %v3864 = vpow.pop %v3863
    %v3865 = vmul.f32 %v3823, 1.442695
    %v3866 = vpow.pop %v3865
    %v3867 = vmul.f32 %v3824, 1.442695
    %v3868 = vpow.pop %v3867
    %v3869 = vmul.f32 %v3825, 1.442695
    %v3870 = vpow.pop %v3869
    %v3871 = vmul.f32 %v3826, 1.442695
    %v3872 = vpow.pop %v3871
    %v3873 = vmul.f32 %v3827, 1.442695
    %v3874 = vpow.pop %v3873
    %v3875 = vmul.f32 %v3828, 1.442695
    %v3876 = vpow.pop %v3875
    %v3877 = vmul.f32 %v3829, 1.442695
    %v3878 = vpow.pop %v3877
    %v3879 = vmul.f32 %v3830, 1.442695
    %v3880 = vpow.pop %v3879
    %v3881 = vmul.f32 %v3831, 1.442695
    %v3882 = vpow.pop %v3881
    %v3883 = vmul.f32 %v3832, 1.442695
    %v3884 = vpow.pop %v3883
    %v3885 = vmul.f32 %v3833, 1.442695
    %v3886 = vpow.pop %v3885
    %v3887 = vmul.f32 %v3834, 1.442695
    %v3888 = vpow.pop %v3887
    %v3889 = vmul.f32 %v3835, 1.442695
    %v3890 = vpow.pop %v3889
    %v3891 = vmul.f32 %v3836, 1.442695
    %v3892 = vpow.pop %v3891
    %v3893 = vmul.f32 %v3837, 1.442695
    %v3894 = vpow.pop %v3893
    %v3895 = vmul.f32 %v3838, 1.442695
    %v3896 = vpow.pop %v3895
    %v3897 = vmul.f32 %v3839, 1.442695
    %v3898 = vpow.pop %v3897
    %v3899 = vmul.f32 %v3840, 1.442695
    %v3900 = vpow.pop %v3899
    %v3901 = vmul.f32 %v3841, 1.442695
    %v3902 = vpow.pop %v3901
    %v3903 = vmul.f32 %v3842, 1.442695
    %v3904 = vpow.pop %v3903
    %v3905 = vmul.f32 %v3843, 1.442695
    %v3906 = vpow.pop %v3905
    %v3907 = vmul.f32 %v3844, 1.442695
    %v3908 = vpow.pop %v3907
    %v3909 = vlaneseq
    %v3910 = vshrl.u32 %v3909, 7
    %v3911 = vsub.s32 0, %v3910
    %v3912 = vrot.slane %v3373, %v3911
    %3914 = vbcast.lane.b32.xlu0 %v3912, 256
    %v3915 = vpop.permute.xlu0 %3914
    %s3917 = sor.u32 256, 8
    %3918 = vbcast.lane.b32.xlu0 %v3912, %s3917
    %v3919 = vpop.permute.xlu0 %3918
    %s3921 = sor.u32 256, 16
    %3922 = vbcast.lane.b32.xlu0 %v3912, %s3921
    %v3923 = vpop.permute.xlu0 %3922
    %s3925 = sor.u32 256, 24
    %3926 = vbcast.lane.b32.xlu0 %v3912, %s3925
    %v3927 = vpop.permute.xlu0 %3926
    %v3928 = vlaneseq
    %v3929 = vshrl.u32 %v3928, 7
    %v3930 = vsub.s32 1, %v3929
    %v3931 = vrot.slane %v3373, %v3930
    %3933 = vbcast.lane.b32.xlu0 %v3931, 256
    %v3934 = vpop.permute.xlu0 %3933
    %s3936 = sor.u32 256, 8
    %3937 = vbcast.lane.b32.xlu0 %v3931, %s3936
    %v3938 = vpop.permute.xlu0 %3937
    %s3940 = sor.u32 256, 16
    %3941 = vbcast.lane.b32.xlu0 %v3931, %s3940
    %v3942 = vpop.permute.xlu0 %3941
    %s3944 = sor.u32 256, 24
    %3945 = vbcast.lane.b32.xlu0 %v3931, %s3944
    %v3946 = vpop.permute.xlu0 %3945
    %v3947 = vlaneseq
    %v3948 = vshrl.u32 %v3947, 7
    %v3949 = vsub.s32 2, %v3948
    %v3950 = vrot.slane %v3373, %v3949
    %3952 = vbcast.lane.b32.xlu0 %v3950, 256
    %v3953 = vpop.permute.xlu0 %3952
    %s3955 = sor.u32 256, 8
    %3956 = vbcast.lane.b32.xlu0 %v3950, %s3955
    %v3957 = vpop.permute.xlu0 %3956
    %s3959 = sor.u32 256, 16
    %3960 = vbcast.lane.b32.xlu0 %v3950, %s3959
    %v3961 = vpop.permute.xlu0 %3960
    %s3963 = sor.u32 256, 24
    %3964 = vbcast.lane.b32.xlu0 %v3950, %s3963
    %v3965 = vpop.permute.xlu0 %3964
    %v3966 = vlaneseq
    %v3967 = vshrl.u32 %v3966, 7
    %v3968 = vsub.s32 3, %v3967
    %v3969 = vrot.slane %v3373, %v3968
    %3971 = vbcast.lane.b32.xlu0 %v3969, 256
    %v3972 = vpop.permute.xlu0 %3971
    %s3974 = sor.u32 256, 8
    %3975 = vbcast.lane.b32.xlu0 %v3969, %s3974
    %v3976 = vpop.permute.xlu0 %3975
    %s3978 = sor.u32 256, 16
    %3979 = vbcast.lane.b32.xlu0 %v3969, %s3978
    %v3980 = vpop.permute.xlu0 %3979
    %s3982 = sor.u32 256, 24
    %3983 = vbcast.lane.b32.xlu0 %v3969, %s3982
    %v3984 = vpop.permute.xlu0 %3983
    %v3985 = vlaneseq
    %v3986 = vshrl.u32 %v3985, 7
    %v3987 = vsub.s32 4, %v3986
    %v3988 = vrot.slane %v3373, %v3987
    %3990 = vbcast.lane.b32.xlu0 %v3988, 256
    %v3991 = vpop.permute.xlu0 %3990
    %s3993 = sor.u32 256, 8
    %3994 = vbcast.lane.b32.xlu0 %v3988, %s3993
    %v3995 = vpop.permute.xlu0 %3994
    %s3997 = sor.u32 256, 16
    %3998 = vbcast.lane.b32.xlu0 %v3988, %s3997
    %v3999 = vpop.permute.xlu0 %3998
    %s4001 = sor.u32 256, 24
    %4002 = vbcast.lane.b32.xlu0 %v3988, %s4001
    %v4003 = vpop.permute.xlu0 %4002
    %v4004 = vlaneseq
    %v4005 = vshrl.u32 %v4004, 7
    %v4006 = vsub.s32 5, %v4005
    %v4007 = vrot.slane %v3373, %v4006
    %4009 = vbcast.lane.b32.xlu0 %v4007, 256
    %v4010 = vpop.permute.xlu0 %4009
    %s4012 = sor.u32 256, 8
    %4013 = vbcast.lane.b32.xlu0 %v4007, %s4012
    %v4014 = vpop.permute.xlu0 %4013
    %s4016 = sor.u32 256, 16
    %4017 = vbcast.lane.b32.xlu0 %v4007, %s4016
    %v4018 = vpop.permute.xlu0 %4017
    %s4020 = sor.u32 256, 24
    %4021 = vbcast.lane.b32.xlu0 %v4007, %s4020
    %v4022 = vpop.permute.xlu0 %4021
    %v4023 = vlaneseq
    %v4024 = vshrl.u32 %v4023, 7
    %v4025 = vsub.s32 6, %v4024
    %v4026 = vrot.slane %v3373, %v4025
    %4028 = vbcast.lane.b32.xlu0 %v4026, 256
    %v4029 = vpop.permute.xlu0 %4028
    %s4031 = sor.u32 256, 8
    %4032 = vbcast.lane.b32.xlu0 %v4026, %s4031
    %v4033 = vpop.permute.xlu0 %4032
    %s4035 = sor.u32 256, 16
    %4036 = vbcast.lane.b32.xlu0 %v4026, %s4035
    %v4037 = vpop.permute.xlu0 %4036
    %s4039 = sor.u32 256, 24
    %4040 = vbcast.lane.b32.xlu0 %v4026, %s4039
    %v4041 = vpop.permute.xlu0 %4040
    %v4042 = vlaneseq
    %v4043 = vshrl.u32 %v4042, 7
    %v4044 = vsub.s32 7, %v4043
    %v4045 = vrot.slane %v3373, %v4044
    %4047 = vbcast.lane.b32.xlu0 %v4045, 256
    %v4048 = vpop.permute.xlu0 %4047
    %s4050 = sor.u32 256, 8
    %4051 = vbcast.lane.b32.xlu0 %v4045, %s4050
    %v4052 = vpop.permute.xlu0 %4051
    %s4054 = sor.u32 256, 16
    %4055 = vbcast.lane.b32.xlu0 %v4045, %s4054
    %v4056 = vpop.permute.xlu0 %4055
    %s4058 = sor.u32 256, 24
    %4059 = vbcast.lane.b32.xlu0 %v4045, %s4058
    %v4060 = vpop.permute.xlu0 %4059
    %v4061 = vsel %vm887, %v3915, 1.0
    %v4062 = vsel %vm887, %v3919, 1.0
    %v4063 = vsel %vm887, %v3923, 1.0
    %v4064 = vsel %vm887, %v3927, 1.0
    %v4065 = vsel %vm887, %v3934, 1.0
    %v4066 = vsel %vm887, %v3938, 1.0
    %v4067 = vsel %vm887, %v3942, 1.0
    %v4068 = vsel %vm887, %v3946, 1.0
    %v4069 = vsel %vm887, %v3953, 1.0
    %v4070 = vsel %vm887, %v3957, 1.0
    %v4071 = vsel %vm887, %v3961, 1.0
    %v4072 = vsel %vm887, %v3965, 1.0
    %v4073 = vsel %vm887, %v3972, 1.0
    %v4074 = vsel %vm887, %v3976, 1.0
    %v4075 = vsel %vm887, %v3980, 1.0
    %v4076 = vsel %vm887, %v3984, 1.0
    %v4077 = vsel %vm887, %v3991, 1.0
    %v4078 = vsel %vm887, %v3995, 1.0
    %v4079 = vsel %vm887, %v3999, 1.0
    %v4080 = vsel %vm887, %v4003, 1.0
    %v4081 = vsel %vm887, %v4010, 1.0
    %v4082 = vsel %vm887, %v4014, 1.0
    %v4083 = vsel %vm887, %v4018, 1.0
    %v4084 = vsel %vm887, %v4022, 1.0
    %v4085 = vsel %vm887, %v4029, 1.0
    %v4086 = vsel %vm887, %v4033, 1.0
    %v4087 = vsel %vm887, %v4037, 1.0
    %v4088 = vsel %vm887, %v4041, 1.0
    %v4089 = vsel %vm887, %v4048, 1.0
    %v4090 = vsel %vm887, %v4052, 1.0
    %v4091 = vsel %vm887, %v4056, 1.0
    %v4092 = vsel %vm887, %v4060, 1.0
    %v4094 = vsel %vm119, %v3846, 0
    %v4097 = vsel %vm119, %v3848, 0
    %v4100 = vsel %vm119, %v3850, 0
    %v4103 = vsel %vm119, %v3852, 0
    %4105 = vmatprep.subr.mxu0 0.0
    %4106 = vmatpush1.msra.mxu0 0.0
    %4107 = vmatprep.subr.mxu0 0.0
    %4108 = vmatpush1.msra.mxu0 0.0
    %4109 = vmatprep.subr.mxu0 0.0
    %4110 = vmatpush1.msra.mxu0 0.0
    %4111 = vmatprep.subr.mxu0 0.0
    %4112 = vmatpush1.msra.mxu0 0.0
    %4113 = vmatprep.subr.mxu0 0.0
    %4114 = vmatpush1.msra.mxu0 0.0
    %4115 = vmatprep.subr.mxu0 0.0
    %4116 = vmatpush1.msra.mxu0 0.0
    %4117 = vmatprep.subr.mxu0 0.0
    %4118 = vmatpush1.msra.mxu0 0.0
    %4119 = vmatprep.subr.mxu0 0.0
    %4120 = vmatpush1.msra.mxu0 0.0
    %4121 = vmatprep.subr.mxu0 0.0
    %4122 = vmatpush1.msra.mxu0 0.0
    %4123 = vmatprep.subr.mxu0 0.0
    %4124 = vmatpush1.msra.mxu0 0.0
    %4125 = vmatprep.subr.mxu0 0.0
    %4126 = vmatpush1.msra.mxu0 0.0
    %4127 = vmatprep.subr.mxu0 0.0
    %4128 = vmatpush1.msra.mxu0 0.0
    %4129 = vmatprep.subr.mxu0 0.0
    %4130 = vmatpush1.msra.mxu0 %v4064
    %4131 = vmatprep.subr.mxu0 0.0
    %4132 = vmatpush1.msra.mxu0 %v4063
    %4133 = vmatprep.subr.mxu0 0.0
    %4134 = vmatpush1.msra.mxu0 %v4062
    %4135 = vmatprep.subr.mxu0 0.0
    %4136 = vmatpush1.msra.mxu0 %v4061
    %4137 = vmatprep.subr.mxu0 0.0
    %4138 = vmatpush2.msra.mxu0 0.0
    %4139 = vmatprep.subr.mxu0 0.0
    %4140 = vmatpush2.msra.mxu0 0.0
    %4141 = vmatprep.subr.mxu0 0.0
    %4142 = vmatpush2.msra.mxu0 0.0
    %4143 = vmatprep.subr.mxu0 0.0
    %4144 = vmatpush2.msra.mxu0 0.0
    %4145 = vmatprep.subr.mxu0 0.0
    %4146 = vmatpush2.msra.mxu0 0.0
    %4147 = vmatprep.subr.mxu0 0.0
    %4148 = vmatpush2.msra.mxu0 0.0
    %4149 = vmatprep.subr.mxu0 0.0
    %4150 = vmatpush2.msra.mxu0 0.0
    %4151 = vmatprep.subr.mxu0 0.0
    %4152 = vmatpush2.msra.mxu0 0.0
    %4153 = vmatprep.subr.mxu0 0.0
    %4154 = vmatpush2.msra.mxu0 0.0
    %4155 = vmatprep.subr.mxu0 0.0
    %4156 = vmatpush2.msra.mxu0 0.0
    %4157 = vmatprep.subr.mxu0 0.0
    %4158 = vmatpush2.msra.mxu0 0.0
    %4159 = vmatprep.subr.mxu0 0.0
    %4160 = vmatpush2.msra.mxu0 0.0
    %4161 = vmatprep.subr.mxu0 0.0
    %4162 = vmatpush2.msra.mxu0 0.0
    %4163 = vmatprep.subr.mxu0 0.0
    %4164 = vmatpush2.msra.mxu0 0.0
    %4165 = vmatprep.subr.mxu0 0.0
    %4166 = vmatpush2.msra.mxu0 0.0
    %4167 = vmatprep.subr.mxu0 0.0
    %4168 = vmatpush2.msra.mxu0 0.0
    %4169 = vmatprep.mubr.f32.mxu0 0.0
    %4170 = vmatmul.mubr.f32.gmra.mxu0 %v4094
    %v4171 = vpop.f32.mrf.mxu0
    %v4172 = vadd.f32 0.0, %v4171
    %v4173 = vpop.f32.mrf.mxu0
    %4174 = vmatprep.mubr.f32.mxu0 0.0
    %4175 = vmatmul.mubr.f32.gmra.mxu0 %v4097
    %v4176 = vpop.f32.mrf.mxu0
    %v4177 = vadd.f32 0.0, %v4176
    %v4178 = vpop.f32.mrf.mxu0
    %4179 = vmatprep.mubr.f32.mxu0 0.0
    %4180 = vmatmul.mubr.f32.gmra.mxu0 %v4100
    %v4181 = vpop.f32.mrf.mxu0
    %v4182 = vadd.f32 0.0, %v4181
    %v4183 = vpop.f32.mrf.mxu0
    %4184 = vmatprep.mubr.f32.mxu0 0.0
    %4185 = vmatmul.mubr.f32.gmra.mxu0 %v4103
    %v4186 = vpop.f32.mrf.mxu0
    %v4187 = vadd.f32 0.0, %v4186
    %v4188 = vpop.f32.mrf.mxu0
    %4189 = vdwg.mxu0
    %v4191 = vsel %vm119, %v3854, 0
    %v4194 = vsel %vm119, %v3856, 0
    %v4197 = vsel %vm119, %v3858, 0
    %v4200 = vsel %vm119, %v3860, 0
    %4202 = vmatprep.subr.mxu0 0.0
    %4203 = vmatpush1.msra.mxu0 0.0
    %4204 = vmatprep.subr.mxu0 0.0
    %4205 = vmatpush1.msra.mxu0 0.0
    %4206 = vmatprep.subr.mxu0 0.0
    %4207 = vmatpush1.msra.mxu0 0.0
    %4208 = vmatprep.subr.mxu0 0.0
    %4209 = vmatpush1.msra.mxu0 0.0
    %4210 = vmatprep.subr.mxu0 0.0
    %4211 = vmatpush1.msra.mxu0 0.0
    %4212 = vmatprep.subr.mxu0 0.0
    %4213 = vmatpush1.msra.mxu0 0.0
    %4214 = vmatprep.subr.mxu0 0.0
    %4215 = vmatpush1.msra.mxu0 0.0
    %4216 = vmatprep.subr.mxu0 0.0
    %4217 = vmatpush1.msra.mxu0 0.0
    %4218 = vmatprep.subr.mxu0 0.0
    %4219 = vmatpush1.msra.mxu0 0.0
    %4220 = vmatprep.subr.mxu0 0.0
    %4221 = vmatpush1.msra.mxu0 0.0
    %4222 = vmatprep.subr.mxu0 0.0
    %4223 = vmatpush1.msra.mxu0 0.0
    %4224 = vmatprep.subr.mxu0 0.0
    %4225 = vmatpush1.msra.mxu0 0.0
    %4226 = vmatprep.subr.mxu0 0.0
    %4227 = vmatpush1.msra.mxu0 %v4068
    %4228 = vmatprep.subr.mxu0 0.0
    %4229 = vmatpush1.msra.mxu0 %v4067
    %4230 = vmatprep.subr.mxu0 0.0
    %4231 = vmatpush1.msra.mxu0 %v4066
    %4232 = vmatprep.subr.mxu0 0.0
    %4233 = vmatpush1.msra.mxu0 %v4065
    %4234 = vmatprep.subr.mxu0 0.0
    %4235 = vmatpush2.msra.mxu0 0.0
    %4236 = vmatprep.subr.mxu0 0.0
    %4237 = vmatpush2.msra.mxu0 0.0
    %4238 = vmatprep.subr.mxu0 0.0
    %4239 = vmatpush2.msra.mxu0 0.0
    %4240 = vmatprep.subr.mxu0 0.0
    %4241 = vmatpush2.msra.mxu0 0.0
    %4242 = vmatprep.subr.mxu0 0.0
    %4243 = vmatpush2.msra.mxu0 0.0
    %4244 = vmatprep.subr.mxu0 0.0
    %4245 = vmatpush2.msra.mxu0 0.0
    %4246 = vmatprep.subr.mxu0 0.0
    %4247 = vmatpush2.msra.mxu0 0.0
    %4248 = vmatprep.subr.mxu0 0.0
    %4249 = vmatpush2.msra.mxu0 0.0
    %4250 = vmatprep.subr.mxu0 0.0
    %4251 = vmatpush2.msra.mxu0 0.0
    %4252 = vmatprep.subr.mxu0 0.0
    %4253 = vmatpush2.msra.mxu0 0.0
    %4254 = vmatprep.subr.mxu0 0.0
    %4255 = vmatpush2.msra.mxu0 0.0
    %4256 = vmatprep.subr.mxu0 0.0
    %4257 = vmatpush2.msra.mxu0 0.0
    %4258 = vmatprep.subr.mxu0 0.0
    %4259 = vmatpush2.msra.mxu0 0.0
    %4260 = vmatprep.subr.mxu0 0.0
    %4261 = vmatpush2.msra.mxu0 0.0
    %4262 = vmatprep.subr.mxu0 0.0
    %4263 = vmatpush2.msra.mxu0 0.0
    %4264 = vmatprep.subr.mxu0 0.0
    %4265 = vmatpush2.msra.mxu0 0.0
    %4266 = vmatprep.mubr.f32.mxu0 0.0
    %4267 = vmatmul.mubr.f32.gmra.mxu0 %v4191
    %v4268 = vpop.f32.mrf.mxu0
    %v4269 = vadd.f32 0.0, %v4268
    %v4270 = vpop.f32.mrf.mxu0
    %4271 = vmatprep.mubr.f32.mxu0 0.0
    %4272 = vmatmul.mubr.f32.gmra.mxu0 %v4194
    %v4273 = vpop.f32.mrf.mxu0
    %v4274 = vadd.f32 0.0, %v4273
    %v4275 = vpop.f32.mrf.mxu0
    %4276 = vmatprep.mubr.f32.mxu0 0.0
    %4277 = vmatmul.mubr.f32.gmra.mxu0 %v4197
    %v4278 = vpop.f32.mrf.mxu0
    %v4279 = vadd.f32 0.0, %v4278
    %v4280 = vpop.f32.mrf.mxu0
    %4281 = vmatprep.mubr.f32.mxu0 0.0
    %4282 = vmatmul.mubr.f32.gmra.mxu0 %v4200
    %v4283 = vpop.f32.mrf.mxu0
    %v4284 = vadd.f32 0.0, %v4283
    %v4285 = vpop.f32.mrf.mxu0
    %4286 = vdwg.mxu0
    %v4288 = vsel %vm119, %v3862, 0
    %v4291 = vsel %vm119, %v3864, 0
    %v4294 = vsel %vm119, %v3866, 0
    %v4297 = vsel %vm119, %v3868, 0
    %4299 = vmatprep.subr.mxu0 0.0
    %4300 = vmatpush1.msra.mxu0 0.0
    %4301 = vmatprep.subr.mxu0 0.0
    %4302 = vmatpush1.msra.mxu0 0.0
    %4303 = vmatprep.subr.mxu0 0.0
    %4304 = vmatpush1.msra.mxu0 0.0
    %4305 = vmatprep.subr.mxu0 0.0
    %4306 = vmatpush1.msra.mxu0 0.0
    %4307 = vmatprep.subr.mxu0 0.0
    %4308 = vmatpush1.msra.mxu0 0.0
    %4309 = vmatprep.subr.mxu0 0.0
    %4310 = vmatpush1.msra.mxu0 0.0
    %4311 = vmatprep.subr.mxu0 0.0
    %4312 = vmatpush1.msra.mxu0 0.0
    %4313 = vmatprep.subr.mxu0 0.0
    %4314 = vmatpush1.msra.mxu0 0.0
    %4315 = vmatprep.subr.mxu0 0.0
    %4316 = vmatpush1.msra.mxu0 0.0
    %4317 = vmatprep.subr.mxu0 0.0
    %4318 = vmatpush1.msra.mxu0 0.0
    %4319 = vmatprep.subr.mxu0 0.0
    %4320 = vmatpush1.msra.mxu0 0.0
    %4321 = vmatprep.subr.mxu0 0.0
    %4322 = vmatpush1.msra.mxu0 0.0
    %4323 = vmatprep.subr.mxu0 0.0
    %4324 = vmatpush1.msra.mxu0 %v4072
    %4325 = vmatprep.subr.mxu0 0.0
    %4326 = vmatpush1.msra.mxu0 %v4071
    %4327 = vmatprep.subr.mxu0 0.0
    %4328 = vmatpush1.msra.mxu0 %v4070
    %4329 = vmatprep.subr.mxu0 0.0
    %4330 = vmatpush1.msra.mxu0 %v4069
    %4331 = vmatprep.subr.mxu0 0.0
    %4332 = vmatpush2.msra.mxu0 0.0
    %4333 = vmatprep.subr.mxu0 0.0
    %4334 = vmatpush2.msra.mxu0 0.0
    %4335 = vmatprep.subr.mxu0 0.0
    %4336 = vmatpush2.msra.mxu0 0.0
    %4337 = vmatprep.subr.mxu0 0.0
    %4338 = vmatpush2.msra.mxu0 0.0
    %4339 = vmatprep.subr.mxu0 0.0
    %4340 = vmatpush2.msra.mxu0 0.0
    %4341 = vmatprep.subr.mxu0 0.0
    %4342 = vmatpush2.msra.mxu0 0.0
    %4343 = vmatprep.subr.mxu0 0.0
    %4344 = vmatpush2.msra.mxu0 0.0
    %4345 = vmatprep.subr.mxu0 0.0
    %4346 = vmatpush2.msra.mxu0 0.0
    %4347 = vmatprep.subr.mxu0 0.0
    %4348 = vmatpush2.msra.mxu0 0.0
    %4349 = vmatprep.subr.mxu0 0.0
    %4350 = vmatpush2.msra.mxu0 0.0
    %4351 = vmatprep.subr.mxu0 0.0
    %4352 = vmatpush2.msra.mxu0 0.0
    %4353 = vmatprep.subr.mxu0 0.0
    %4354 = vmatpush2.msra.mxu0 0.0
    %4355 = vmatprep.subr.mxu0 0.0
    %4356 = vmatpush2.msra.mxu0 0.0
    %4357 = vmatprep.subr.mxu0 0.0
    %4358 = vmatpush2.msra.mxu0 0.0
    %4359 = vmatprep.subr.mxu0 0.0
    %4360 = vmatpush2.msra.mxu0 0.0
    %4361 = vmatprep.subr.mxu0 0.0
    %4362 = vmatpush2.msra.mxu0 0.0
    %4363 = vmatprep.mubr.f32.mxu0 0.0
    %4364 = vmatmul.mubr.f32.gmra.mxu0 %v4288
    %v4365 = vpop.f32.mrf.mxu0
    %v4366 = vadd.f32 0.0, %v4365
    %v4367 = vpop.f32.mrf.mxu0
    %4368 = vmatprep.mubr.f32.mxu0 0.0
    %4369 = vmatmul.mubr.f32.gmra.mxu0 %v4291
    %v4370 = vpop.f32.mrf.mxu0
    %v4371 = vadd.f32 0.0, %v4370
    %v4372 = vpop.f32.mrf.mxu0
    %4373 = vmatprep.mubr.f32.mxu0 0.0
    %4374 = vmatmul.mubr.f32.gmra.mxu0 %v4294
    %v4375 = vpop.f32.mrf.mxu0
    %v4376 = vadd.f32 0.0, %v4375
    %v4377 = vpop.f32.mrf.mxu0
    %4378 = vmatprep.mubr.f32.mxu0 0.0
    %4379 = vmatmul.mubr.f32.gmra.mxu0 %v4297
    %v4380 = vpop.f32.mrf.mxu0
    %v4381 = vadd.f32 0.0, %v4380
    %v4382 = vpop.f32.mrf.mxu0
    %4383 = vdwg.mxu0
    %v4385 = vsel %vm119, %v3870, 0
    %v4388 = vsel %vm119, %v3872, 0
    %v4391 = vsel %vm119, %v3874, 0
    %v4394 = vsel %vm119, %v3876, 0
    %4396 = vmatprep.subr.mxu0 0.0
    %4397 = vmatpush1.msra.mxu0 0.0
    %4398 = vmatprep.subr.mxu0 0.0
    %4399 = vmatpush1.msra.mxu0 0.0
    %4400 = vmatprep.subr.mxu0 0.0
    %4401 = vmatpush1.msra.mxu0 0.0
    %4402 = vmatprep.subr.mxu0 0.0
    %4403 = vmatpush1.msra.mxu0 0.0
    %4404 = vmatprep.subr.mxu0 0.0
    %4405 = vmatpush1.msra.mxu0 0.0
    %4406 = vmatprep.subr.mxu0 0.0
    %4407 = vmatpush1.msra.mxu0 0.0
    %4408 = vmatprep.subr.mxu0 0.0
    %4409 = vmatpush1.msra.mxu0 0.0
    %4410 = vmatprep.subr.mxu0 0.0
    %4411 = vmatpush1.msra.mxu0 0.0
    %4412 = vmatprep.subr.mxu0 0.0
    %4413 = vmatpush1.msra.mxu0 0.0
    %4414 = vmatprep.subr.mxu0 0.0
    %4415 = vmatpush1.msra.mxu0 0.0
    %4416 = vmatprep.subr.mxu0 0.0
    %4417 = vmatpush1.msra.mxu0 0.0
    %4418 = vmatprep.subr.mxu0 0.0
    %4419 = vmatpush1.msra.mxu0 0.0
    %4420 = vmatprep.subr.mxu0 0.0
    %4421 = vmatpush1.msra.mxu0 %v4076
    %4422 = vmatprep.subr.mxu0 0.0
    %4423 = vmatpush1.msra.mxu0 %v4075
    %4424 = vmatprep.subr.mxu0 0.0
    %4425 = vmatpush1.msra.mxu0 %v4074
    %4426 = vmatprep.subr.mxu0 0.0
    %4427 = vmatpush1.msra.mxu0 %v4073
    %4428 = vmatprep.subr.mxu0 0.0
    %4429 = vmatpush2.msra.mxu0 0.0
    %4430 = vmatprep.subr.mxu0 0.0
    %4431 = vmatpush2.msra.mxu0 0.0
    %4432 = vmatprep.subr.mxu0 0.0
    %4433 = vmatpush2.msra.mxu0 0.0
    %4434 = vmatprep.subr.mxu0 0.0
    %4435 = vmatpush2.msra.mxu0 0.0
    %4436 = vmatprep.subr.mxu0 0.0
    %4437 = vmatpush2.msra.mxu0 0.0
    %4438 = vmatprep.subr.mxu0 0.0
    %4439 = vmatpush2.msra.mxu0 0.0
    %4440 = vmatprep.subr.mxu0 0.0
    %4441 = vmatpush2.msra.mxu0 0.0
    %4442 = vmatprep.subr.mxu0 0.0
    %4443 = vmatpush2.msra.mxu0 0.0
    %4444 = vmatprep.subr.mxu0 0.0
    %4445 = vmatpush2.msra.mxu0 0.0
    %4446 = vmatprep.subr.mxu0 0.0
    %4447 = vmatpush2.msra.mxu0 0.0
    %4448 = vmatprep.subr.mxu0 0.0
    %4449 = vmatpush2.msra.mxu0 0.0
    %4450 = vmatprep.subr.mxu0 0.0
    %4451 = vmatpush2.msra.mxu0 0.0
    %4452 = vmatprep.subr.mxu0 0.0
    %4453 = vmatpush2.msra.mxu0 0.0
    %4454 = vmatprep.subr.mxu0 0.0
    %4455 = vmatpush2.msra.mxu0 0.0
    %4456 = vmatprep.subr.mxu0 0.0
    %4457 = vmatpush2.msra.mxu0 0.0
    %4458 = vmatprep.subr.mxu0 0.0
    %4459 = vmatpush2.msra.mxu0 0.0
    %4460 = vmatprep.mubr.f32.mxu0 0.0
    %4461 = vmatmul.mubr.f32.gmra.mxu0 %v4385
    %v4462 = vpop.f32.mrf.mxu0
    %v4463 = vadd.f32 0.0, %v4462
    %v4464 = vpop.f32.mrf.mxu0
    %4465 = vmatprep.mubr.f32.mxu0 0.0
    %4466 = vmatmul.mubr.f32.gmra.mxu0 %v4388
    %v4467 = vpop.f32.mrf.mxu0
    %v4468 = vadd.f32 0.0, %v4467
    %v4469 = vpop.f32.mrf.mxu0
    %4470 = vmatprep.mubr.f32.mxu0 0.0
    %4471 = vmatmul.mubr.f32.gmra.mxu0 %v4391
    %v4472 = vpop.f32.mrf.mxu0
    %v4473 = vadd.f32 0.0, %v4472
    %v4474 = vpop.f32.mrf.mxu0
    %4475 = vmatprep.mubr.f32.mxu0 0.0
    %4476 = vmatmul.mubr.f32.gmra.mxu0 %v4394
    %v4477 = vpop.f32.mrf.mxu0
    %v4478 = vadd.f32 0.0, %v4477
    %v4479 = vpop.f32.mrf.mxu0
    %4480 = vdwg.mxu0
    %v4482 = vsel %vm119, %v3878, 0
    %v4485 = vsel %vm119, %v3880, 0
    %v4488 = vsel %vm119, %v3882, 0
    %v4491 = vsel %vm119, %v3884, 0
    %4493 = vmatprep.subr.mxu0 0.0
    %4494 = vmatpush1.msra.mxu0 0.0
    %4495 = vmatprep.subr.mxu0 0.0
    %4496 = vmatpush1.msra.mxu0 0.0
    %4497 = vmatprep.subr.mxu0 0.0
    %4498 = vmatpush1.msra.mxu0 0.0
    %4499 = vmatprep.subr.mxu0 0.0
    %4500 = vmatpush1.msra.mxu0 0.0
    %4501 = vmatprep.subr.mxu0 0.0
    %4502 = vmatpush1.msra.mxu0 0.0
    %4503 = vmatprep.subr.mxu0 0.0
    %4504 = vmatpush1.msra.mxu0 0.0
    %4505 = vmatprep.subr.mxu0 0.0
    %4506 = vmatpush1.msra.mxu0 0.0
    %4507 = vmatprep.subr.mxu0 0.0
    %4508 = vmatpush1.msra.mxu0 0.0
    %4509 = vmatprep.subr.mxu0 0.0
    %4510 = vmatpush1.msra.mxu0 0.0
    %4511 = vmatprep.subr.mxu0 0.0
    %4512 = vmatpush1.msra.mxu0 0.0
    %4513 = vmatprep.subr.mxu0 0.0
    %4514 = vmatpush1.msra.mxu0 0.0
    %4515 = vmatprep.subr.mxu0 0.0
    %4516 = vmatpush1.msra.mxu0 0.0
    %4517 = vmatprep.subr.mxu0 0.0
    %4518 = vmatpush1.msra.mxu0 %v4080
    %4519 = vmatprep.subr.mxu0 0.0
    %4520 = vmatpush1.msra.mxu0 %v4079
    %4521 = vmatprep.subr.mxu0 0.0
    %4522 = vmatpush1.msra.mxu0 %v4078
    %4523 = vmatprep.subr.mxu0 0.0
    %4524 = vmatpush1.msra.mxu0 %v4077
    %4525 = vmatprep.subr.mxu0 0.0
    %4526 = vmatpush2.msra.mxu0 0.0
    %4527 = vmatprep.subr.mxu0 0.0
    %4528 = vmatpush2.msra.mxu0 0.0
    %4529 = vmatprep.subr.mxu0 0.0
    %4530 = vmatpush2.msra.mxu0 0.0
    %4531 = vmatprep.subr.mxu0 0.0
    %4532 = vmatpush2.msra.mxu0 0.0
    %4533 = vmatprep.subr.mxu0 0.0
    %4534 = vmatpush2.msra.mxu0 0.0
    %4535 = vmatprep.subr.mxu0 0.0
    %4536 = vmatpush2.msra.mxu0 0.0
    %4537 = vmatprep.subr.mxu0 0.0
    %4538 = vmatpush2.msra.mxu0 0.0
    %4539 = vmatprep.subr.mxu0 0.0
    %4540 = vmatpush2.msra.mxu0 0.0
    %4541 = vmatprep.subr.mxu0 0.0
    %4542 = vmatpush2.msra.mxu0 0.0
    %4543 = vmatprep.subr.mxu0 0.0
    %4544 = vmatpush2.msra.mxu0 0.0
    %4545 = vmatprep.subr.mxu0 0.0
    %4546 = vmatpush2.msra.mxu0 0.0
    %4547 = vmatprep.subr.mxu0 0.0
    %4548 = vmatpush2.msra.mxu0 0.0
    %4549 = vmatprep.subr.mxu0 0.0
    %4550 = vmatpush2.msra.mxu0 0.0
    %4551 = vmatprep.subr.mxu0 0.0
    %4552 = vmatpush2.msra.mxu0 0.0
    %4553 = vmatprep.subr.mxu0 0.0
    %4554 = vmatpush2.msra.mxu0 0.0
    %4555 = vmatprep.subr.mxu0 0.0
    %4556 = vmatpush2.msra.mxu0 0.0
    %4557 = vmatprep.mubr.f32.mxu0 0.0
    %4558 = vmatmul.mubr.f32.gmra.mxu0 %v4482
    %v4559 = vpop.f32.mrf.mxu0
    %v4560 = vadd.f32 0.0, %v4559
    %v4561 = vpop.f32.mrf.mxu0
    %4562 = vmatprep.mubr.f32.mxu0 0.0
    %4563 = vmatmul.mubr.f32.gmra.mxu0 %v4485
    %v4564 = vpop.f32.mrf.mxu0
    %v4565 = vadd.f32 0.0, %v4564
    %v4566 = vpop.f32.mrf.mxu0
    %4567 = vmatprep.mubr.f32.mxu0 0.0
    %4568 = vmatmul.mubr.f32.gmra.mxu0 %v4488
    %v4569 = vpop.f32.mrf.mxu0
    %v4570 = vadd.f32 0.0, %v4569
    %v4571 = vpop.f32.mrf.mxu0
    %4572 = vmatprep.mubr.f32.mxu0 0.0
    %4573 = vmatmul.mubr.f32.gmra.mxu0 %v4491
    %v4574 = vpop.f32.mrf.mxu0
    %v4575 = vadd.f32 0.0, %v4574
    %v4576 = vpop.f32.mrf.mxu0
    %4577 = vdwg.mxu0
    %v4579 = vsel %vm119, %v3886, 0
    %v4582 = vsel %vm119, %v3888, 0
    %v4585 = vsel %vm119, %v3890, 0
    %v4588 = vsel %vm119, %v3892, 0
    %4590 = vmatprep.subr.mxu0 0.0
    %4591 = vmatpush1.msra.mxu0 0.0
    %4592 = vmatprep.subr.mxu0 0.0
    %4593 = vmatpush1.msra.mxu0 0.0
    %4594 = vmatprep.subr.mxu0 0.0
    %4595 = vmatpush1.msra.mxu0 0.0
    %4596 = vmatprep.subr.mxu0 0.0
    %4597 = vmatpush1.msra.mxu0 0.0
    %4598 = vmatprep.subr.mxu0 0.0
    %4599 = vmatpush1.msra.mxu0 0.0
    %4600 = vmatprep.subr.mxu0 0.0
    %4601 = vmatpush1.msra.mxu0 0.0
    %4602 = vmatprep.subr.mxu0 0.0
    %4603 = vmatpush1.msra.mxu0 0.0
    %4604 = vmatprep.subr.mxu0 0.0
    %4605 = vmatpush1.msra.mxu0 0.0
    %4606 = vmatprep.subr.mxu0 0.0
    %4607 = vmatpush1.msra.mxu0 0.0
    %4608 = vmatprep.subr.mxu0 0.0
    %4609 = vmatpush1.msra.mxu0 0.0
    %4610 = vmatprep.subr.mxu0 0.0
    %4611 = vmatpush1.msra.mxu0 0.0
    %4612 = vmatprep.subr.mxu0 0.0
    %4613 = vmatpush1.msra.mxu0 0.0
    %4614 = vmatprep.subr.mxu0 0.0
    %4615 = vmatpush1.msra.mxu0 %v4084
    %4616 = vmatprep.subr.mxu0 0.0
    %4617 = vmatpush1.msra.mxu0 %v4083
    %4618 = vmatprep.subr.mxu0 0.0
    %4619 = vmatpush1.msra.mxu0 %v4082
    %4620 = vmatprep.subr.mxu0 0.0
    %4621 = vmatpush1.msra.mxu0 %v4081
    %4622 = vmatprep.subr.mxu0 0.0
    %4623 = vmatpush2.msra.mxu0 0.0
    %4624 = vmatprep.subr.mxu0 0.0
    %4625 = vmatpush2.msra.mxu0 0.0
    %4626 = vmatprep.subr.mxu0 0.0
    %4627 = vmatpush2.msra.mxu0 0.0
    %4628 = vmatprep.subr.mxu0 0.0
    %4629 = vmatpush2.msra.mxu0 0.0
    %4630 = vmatprep.subr.mxu0 0.0
    %4631 = vmatpush2.msra.mxu0 0.0
    %4632 = vmatprep.subr.mxu0 0.0
    %4633 = vmatpush2.msra.mxu0 0.0
    %4634 = vmatprep.subr.mxu0 0.0
    %4635 = vmatpush2.msra.mxu0 0.0
    %4636 = vmatprep.subr.mxu0 0.0
    %4637 = vmatpush2.msra.mxu0 0.0
    %4638 = vmatprep.subr.mxu0 0.0
    %4639 = vmatpush2.msra.mxu0 0.0
    %4640 = vmatprep.subr.mxu0 0.0
    %4641 = vmatpush2.msra.mxu0 0.0
    %4642 = vmatprep.subr.mxu0 0.0
    %4643 = vmatpush2.msra.mxu0 0.0
    %4644 = vmatprep.subr.mxu0 0.0
    %4645 = vmatpush2.msra.mxu0 0.0
    %4646 = vmatprep.subr.mxu0 0.0
    %4647 = vmatpush2.msra.mxu0 0.0
    %4648 = vmatprep.subr.mxu0 0.0
    %4649 = vmatpush2.msra.mxu0 0.0
    %4650 = vmatprep.subr.mxu0 0.0
    %4651 = vmatpush2.msra.mxu0 0.0
    %4652 = vmatprep.subr.mxu0 0.0
    %4653 = vmatpush2.msra.mxu0 0.0
    %4654 = vmatprep.mubr.f32.mxu0 0.0
    %4655 = vmatmul.mubr.f32.gmra.mxu0 %v4579
    %v4656 = vpop.f32.mrf.mxu0
    %v4657 = vadd.f32 0.0, %v4656
    %v4658 = vpop.f32.mrf.mxu0
    %4659 = vmatprep.mubr.f32.mxu0 0.0
    %4660 = vmatmul.mubr.f32.gmra.mxu0 %v4582
    %v4661 = vpop.f32.mrf.mxu0
    %v4662 = vadd.f32 0.0, %v4661
    %v4663 = vpop.f32.mrf.mxu0
    %4664 = vmatprep.mubr.f32.mxu0 0.0
    %4665 = vmatmul.mubr.f32.gmra.mxu0 %v4585
    %v4666 = vpop.f32.mrf.mxu0
    %v4667 = vadd.f32 0.0, %v4666
    %v4668 = vpop.f32.mrf.mxu0
    %4669 = vmatprep.mubr.f32.mxu0 0.0
    %4670 = vmatmul.mubr.f32.gmra.mxu0 %v4588
    %v4671 = vpop.f32.mrf.mxu0
    %v4672 = vadd.f32 0.0, %v4671
    %v4673 = vpop.f32.mrf.mxu0
    %4674 = vdwg.mxu0
    %v4676 = vsel %vm119, %v3894, 0
    %v4679 = vsel %vm119, %v3896, 0
    %v4682 = vsel %vm119, %v3898, 0
    %v4685 = vsel %vm119, %v3900, 0
    %4687 = vmatprep.subr.mxu0 0.0
    %4688 = vmatpush1.msra.mxu0 0.0
    %4689 = vmatprep.subr.mxu0 0.0
    %4690 = vmatpush1.msra.mxu0 0.0
    %4691 = vmatprep.subr.mxu0 0.0
    %4692 = vmatpush1.msra.mxu0 0.0
    %4693 = vmatprep.subr.mxu0 0.0
    %4694 = vmatpush1.msra.mxu0 0.0
    %4695 = vmatprep.subr.mxu0 0.0
    %4696 = vmatpush1.msra.mxu0 0.0
    %4697 = vmatprep.subr.mxu0 0.0
    %4698 = vmatpush1.msra.mxu0 0.0
    %4699 = vmatprep.subr.mxu0 0.0
    %4700 = vmatpush1.msra.mxu0 0.0
    %4701 = vmatprep.subr.mxu0 0.0
    %4702 = vmatpush1.msra.mxu0 0.0
    %4703 = vmatprep.subr.mxu0 0.0
    %4704 = vmatpush1.msra.mxu0 0.0
    %4705 = vmatprep.subr.mxu0 0.0
    %4706 = vmatpush1.msra.mxu0 0.0
    %4707 = vmatprep.subr.mxu0 0.0
    %4708 = vmatpush1.msra.mxu0 0.0
    %4709 = vmatprep.subr.mxu0 0.0
    %4710 = vmatpush1.msra.mxu0 0.0
    %4711 = vmatprep.subr.mxu0 0.0
    %4712 = vmatpush1.msra.mxu0 %v4088
    %4713 = vmatprep.subr.mxu0 0.0
    %4714 = vmatpush1.msra.mxu0 %v4087
    %4715 = vmatprep.subr.mxu0 0.0
    %4716 = vmatpush1.msra.mxu0 %v4086
    %4717 = vmatprep.subr.mxu0 0.0
    %4718 = vmatpush1.msra.mxu0 %v4085
    %4719 = vmatprep.subr.mxu0 0.0
    %4720 = vmatpush2.msra.mxu0 0.0
    %4721 = vmatprep.subr.mxu0 0.0
    %4722 = vmatpush2.msra.mxu0 0.0
    %4723 = vmatprep.subr.mxu0 0.0
    %4724 = vmatpush2.msra.mxu0 0.0
    %4725 = vmatprep.subr.mxu0 0.0
    %4726 = vmatpush2.msra.mxu0 0.0
    %4727 = vmatprep.subr.mxu0 0.0
    %4728 = vmatpush2.msra.mxu0 0.0
    %4729 = vmatprep.subr.mxu0 0.0
    %4730 = vmatpush2.msra.mxu0 0.0
    %4731 = vmatprep.subr.mxu0 0.0
    %4732 = vmatpush2.msra.mxu0 0.0
    %4733 = vmatprep.subr.mxu0 0.0
    %4734 = vmatpush2.msra.mxu0 0.0
    %4735 = vmatprep.subr.mxu0 0.0
    %4736 = vmatpush2.msra.mxu0 0.0
    %4737 = vmatprep.subr.mxu0 0.0
    %4738 = vmatpush2.msra.mxu0 0.0
    %4739 = vmatprep.subr.mxu0 0.0
    %4740 = vmatpush2.msra.mxu0 0.0
    %4741 = vmatprep.subr.mxu0 0.0
    %4742 = vmatpush2.msra.mxu0 0.0
    %4743 = vmatprep.subr.mxu0 0.0
    %4744 = vmatpush2.msra.mxu0 0.0
    %4745 = vmatprep.subr.mxu0 0.0
    %4746 = vmatpush2.msra.mxu0 0.0
    %4747 = vmatprep.subr.mxu0 0.0
    %4748 = vmatpush2.msra.mxu0 0.0
    %4749 = vmatprep.subr.mxu0 0.0
    %4750 = vmatpush2.msra.mxu0 0.0
    %4751 = vmatprep.mubr.f32.mxu0 0.0
    %4752 = vmatmul.mubr.f32.gmra.mxu0 %v4676
    %v4753 = vpop.f32.mrf.mxu0
    %v4754 = vadd.f32 0.0, %v4753
    %v4755 = vpop.f32.mrf.mxu0
    %4756 = vmatprep.mubr.f32.mxu0 0.0
    %4757 = vmatmul.mubr.f32.gmra.mxu0 %v4679
    %v4758 = vpop.f32.mrf.mxu0
    %v4759 = vadd.f32 0.0, %v4758
    %v4760 = vpop.f32.mrf.mxu0
    %4761 = vmatprep.mubr.f32.mxu0 0.0
    %4762 = vmatmul.mubr.f32.gmra.mxu0 %v4682
    %v4763 = vpop.f32.mrf.mxu0
    %v4764 = vadd.f32 0.0, %v4763
    %v4765 = vpop.f32.mrf.mxu0
    %4766 = vmatprep.mubr.f32.mxu0 0.0
    %4767 = vmatmul.mubr.f32.gmra.mxu0 %v4685
    %v4768 = vpop.f32.mrf.mxu0
    %v4769 = vadd.f32 0.0, %v4768
    %v4770 = vpop.f32.mrf.mxu0
    %4771 = vdwg.mxu0
    %v4773 = vsel %vm119, %v3902, 0
    %v4776 = vsel %vm119, %v3904, 0
    %v4779 = vsel %vm119, %v3906, 0
    %v4782 = vsel %vm119, %v3908, 0
    %4784 = vmatprep.subr.mxu0 0.0
    %4785 = vmatpush1.msra.mxu0 0.0
    %4786 = vmatprep.subr.mxu0 0.0
    %4787 = vmatpush1.msra.mxu0 0.0
    %4788 = vmatprep.subr.mxu0 0.0
    %4789 = vmatpush1.msra.mxu0 0.0
    %4790 = vmatprep.subr.mxu0 0.0
    %4791 = vmatpush1.msra.mxu0 0.0
    %4792 = vmatprep.subr.mxu0 0.0
    %4793 = vmatpush1.msra.mxu0 0.0
    %4794 = vmatprep.subr.mxu0 0.0
    %4795 = vmatpush1.msra.mxu0 0.0
    %4796 = vmatprep.subr.mxu0 0.0
    %4797 = vmatpush1.msra.mxu0 0.0
    %4798 = vmatprep.subr.mxu0 0.0
    %4799 = vmatpush1.msra.mxu0 0.0
    %4800 = vmatprep.subr.mxu0 0.0
    %4801 = vmatpush1.msra.mxu0 0.0
    %4802 = vmatprep.subr.mxu0 0.0
    %4803 = vmatpush1.msra.mxu0 0.0
    %4804 = vmatprep.subr.mxu0 0.0
    %4805 = vmatpush1.msra.mxu0 0.0
    %4806 = vmatprep.subr.mxu0 0.0
    %4807 = vmatpush1.msra.mxu0 0.0
    %4808 = vmatprep.subr.mxu0 0.0
    %4809 = vmatpush1.msra.mxu0 %v4092
    %4810 = vmatprep.subr.mxu0 0.0
    %4811 = vmatpush1.msra.mxu0 %v4091
    %4812 = vmatprep.subr.mxu0 0.0
    %4813 = vmatpush1.msra.mxu0 %v4090
    %4814 = vmatprep.subr.mxu0 0.0
    %4815 = vmatpush1.msra.mxu0 %v4089
    %4816 = vmatprep.subr.mxu0 0.0
    %4817 = vmatpush2.msra.mxu0 0.0
    %4818 = vmatprep.subr.mxu0 0.0
    %4819 = vmatpush2.msra.mxu0 0.0
    %4820 = vmatprep.subr.mxu0 0.0
    %4821 = vmatpush2.msra.mxu0 0.0
    %4822 = vmatprep.subr.mxu0 0.0
    %4823 = vmatpush2.msra.mxu0 0.0
    %4824 = vmatprep.subr.mxu0 0.0
    %4825 = vmatpush2.msra.mxu0 0.0
    %4826 = vmatprep.subr.mxu0 0.0
    %4827 = vmatpush2.msra.mxu0 0.0
    %4828 = vmatprep.subr.mxu0 0.0
    %4829 = vmatpush2.msra.mxu0 0.0
    %4830 = vmatprep.subr.mxu0 0.0
    %4831 = vmatpush2.msra.mxu0 0.0
    %4832 = vmatprep.subr.mxu0 0.0
    %4833 = vmatpush2.msra.mxu0 0.0
    %4834 = vmatprep.subr.mxu0 0.0
    %4835 = vmatpush2.msra.mxu0 0.0
    %4836 = vmatprep.subr.mxu0 0.0
    %4837 = vmatpush2.msra.mxu0 0.0
    %4838 = vmatprep.subr.mxu0 0.0
    %4839 = vmatpush2.msra.mxu0 0.0
    %4840 = vmatprep.subr.mxu0 0.0
    %4841 = vmatpush2.msra.mxu0 0.0
    %4842 = vmatprep.subr.mxu0 0.0
    %4843 = vmatpush2.msra.mxu0 0.0
    %4844 = vmatprep.subr.mxu0 0.0
    %4845 = vmatpush2.msra.mxu0 0.0
    %4846 = vmatprep.subr.mxu0 0.0
    %4847 = vmatpush2.msra.mxu0 0.0
    %4848 = vmatprep.mubr.f32.mxu0 0.0
    %4849 = vmatmul.mubr.f32.gmra.mxu0 %v4773
    %v4850 = vpop.f32.mrf.mxu0
    %v4851 = vadd.f32 0.0, %v4850
    %v4852 = vpop.f32.mrf.mxu0
    %4853 = vmatprep.mubr.f32.mxu0 0.0
    %4854 = vmatmul.mubr.f32.gmra.mxu0 %v4776
    %v4855 = vpop.f32.mrf.mxu0
    %v4856 = vadd.f32 0.0, %v4855
    %v4857 = vpop.f32.mrf.mxu0
    %4858 = vmatprep.mubr.f32.mxu0 0.0
    %4859 = vmatmul.mubr.f32.gmra.mxu0 %v4779
    %v4860 = vpop.f32.mrf.mxu0
    %v4861 = vadd.f32 0.0, %v4860
    %v4862 = vpop.f32.mrf.mxu0
    %4863 = vmatprep.mubr.f32.mxu0 0.0
    %4864 = vmatmul.mubr.f32.gmra.mxu0 %v4782
    %v4865 = vpop.f32.mrf.mxu0
    %v4866 = vadd.f32 0.0, %v4865
    %v4867 = vpop.f32.mrf.mxu0
    %4868 = vdwg.mxu0
    %4901 = vrot.lane.b32.xlu0 %v4172, 127
    %v4902 = vpop.permute.xlu0 %4901
    %4903 = vrot.lane.b32.xlu0 %v4177, 127
    %v4904 = vpop.permute.xlu0 %4903
    %4905 = vrot.lane.b32.xlu0 %v4182, 127
    %v4906 = vpop.permute.xlu0 %4905
    %4907 = vrot.lane.b32.xlu0 %v4187, 127
    %v4908 = vpop.permute.xlu0 %4907
    %4909 = vrot.lane.b32.xlu0 %v4269, 127
    %v4910 = vpop.permute.xlu0 %4909
    %4911 = vrot.lane.b32.xlu0 %v4274, 127
    %v4912 = vpop.permute.xlu0 %4911
    %4913 = vrot.lane.b32.xlu0 %v4279, 127
    %v4914 = vpop.permute.xlu0 %4913
    %4915 = vrot.lane.b32.xlu0 %v4284, 127
    %v4916 = vpop.permute.xlu0 %4915
    %4917 = vrot.lane.b32.xlu0 %v4366, 127
    %v4918 = vpop.permute.xlu0 %4917
    %4919 = vrot.lane.b32.xlu0 %v4371, 127
    %v4920 = vpop.permute.xlu0 %4919
    %4921 = vrot.lane.b32.xlu0 %v4376, 127
    %v4922 = vpop.permute.xlu0 %4921
    %4923 = vrot.lane.b32.xlu0 %v4381, 127
    %v4924 = vpop.permute.xlu0 %4923
    %4925 = vrot.lane.b32.xlu0 %v4463, 127
    %v4926 = vpop.permute.xlu0 %4925
    %4927 = vrot.lane.b32.xlu0 %v4468, 127
    %v4928 = vpop.permute.xlu0 %4927
    %4929 = vrot.lane.b32.xlu0 %v4473, 127
    %v4930 = vpop.permute.xlu0 %4929
    %4931 = vrot.lane.b32.xlu0 %v4478, 127
    %v4932 = vpop.permute.xlu0 %4931
    %4933 = vrot.lane.b32.xlu0 %v4560, 127
    %v4934 = vpop.permute.xlu0 %4933
    %4935 = vrot.lane.b32.xlu0 %v4565, 127
    %v4936 = vpop.permute.xlu0 %4935
    %4937 = vrot.lane.b32.xlu0 %v4570, 127
    %v4938 = vpop.permute.xlu0 %4937
    %4939 = vrot.lane.b32.xlu0 %v4575, 127
    %v4940 = vpop.permute.xlu0 %4939
    %4941 = vrot.lane.b32.xlu0 %v4657, 127
    %v4942 = vpop.permute.xlu0 %4941
    %4943 = vrot.lane.b32.xlu0 %v4662, 127
    %v4944 = vpop.permute.xlu0 %4943
    %4945 = vrot.lane.b32.xlu0 %v4667, 127
    %v4946 = vpop.permute.xlu0 %4945
    %4947 = vrot.lane.b32.xlu0 %v4672, 127
    %v4948 = vpop.permute.xlu0 %4947
    %4949 = vrot.lane.b32.xlu0 %v4754, 127
    %v4950 = vpop.permute.xlu0 %4949
    %4951 = vrot.lane.b32.xlu0 %v4759, 127
    %v4952 = vpop.permute.xlu0 %4951
    %4953 = vrot.lane.b32.xlu0 %v4764, 127
    %v4954 = vpop.permute.xlu0 %4953
    %4955 = vrot.lane.b32.xlu0 %v4769, 127
    %v4956 = vpop.permute.xlu0 %4955
    %4957 = vrot.lane.b32.xlu0 %v4851, 127
    %v4958 = vpop.permute.xlu0 %4957
    %4959 = vrot.lane.b32.xlu0 %v4856, 127
    %v4960 = vpop.permute.xlu0 %4959
    %4961 = vrot.lane.b32.xlu0 %v4861, 127
    %v4962 = vpop.permute.xlu0 %4961
    %4963 = vrot.lane.b32.xlu0 %v4866, 127
    %v4964 = vpop.permute.xlu0 %4963
    %v4997 = vrcp.pop %v4902
    %v4998 = vmul.f32 %v4172, %v4997
    %v4999 = vrcp.pop %v4904
    %v5000 = vmul.f32 %v4177, %v4999
    %v5001 = vrcp.pop %v4906
    %v5002 = vmul.f32 %v4182, %v5001
    %v5003 = vrcp.pop %v4908
    %v5004 = vmul.f32 %v4187, %v5003
    %v5005 = vrcp.pop %v4910
    %v5006 = vmul.f32 %v4269, %v5005
    %v5007 = vrcp.pop %v4912
    %v5008 = vmul.f32 %v4274, %v5007
    %v5009 = vrcp.pop %v4914
    %v5010 = vmul.f32 %v4279, %v5009
    %v5011 = vrcp.pop %v4916
    %v5012 = vmul.f32 %v4284, %v5011
    %v5013 = vrcp.pop %v4918
    %v5014 = vmul.f32 %v4366, %v5013
    %v5015 = vrcp.pop %v4920
    %v5016 = vmul.f32 %v4371, %v5015
    %v5017 = vrcp.pop %v4922
    %v5018 = vmul.f32 %v4376, %v5017
    %v5019 = vrcp.pop %v4924
    %v5020 = vmul.f32 %v4381, %v5019
    %v5021 = vrcp.pop %v4926
    %v5022 = vmul.f32 %v4463, %v5021
    %v5023 = vrcp.pop %v4928
    %v5024 = vmul.f32 %v4468, %v5023
    %v5025 = vrcp.pop %v4930
    %v5026 = vmul.f32 %v4473, %v5025
    %v5027 = vrcp.pop %v4932
    %v5028 = vmul.f32 %v4478, %v5027
    %v5029 = vrcp.pop %v4934
    %v5030 = vmul.f32 %v4560, %v5029
    %v5031 = vrcp.pop %v4936
    %v5032 = vmul.f32 %v4565, %v5031
    %v5033 = vrcp.pop %v4938
    %v5034 = vmul.f32 %v4570, %v5033
    %v5035 = vrcp.pop %v4940
    %v5036 = vmul.f32 %v4575, %v5035
    %v5037 = vrcp.pop %v4942
    %v5038 = vmul.f32 %v4657, %v5037
    %v5039 = vrcp.pop %v4944
    %v5040 = vmul.f32 %v4662, %v5039
    %v5041 = vrcp.pop %v4946
    %v5042 = vmul.f32 %v4667, %v5041
    %v5043 = vrcp.pop %v4948
    %v5044 = vmul.f32 %v4672, %v5043
    %v5045 = vrcp.pop %v4950
    %v5046 = vmul.f32 %v4754, %v5045
    %v5047 = vrcp.pop %v4952
    %v5048 = vmul.f32 %v4759, %v5047
    %v5049 = vrcp.pop %v4954
    %v5050 = vmul.f32 %v4764, %v5049
    %v5051 = vrcp.pop %v4956
    %v5052 = vmul.f32 %v4769, %v5051
    %v5053 = vrcp.pop %v4958
    %v5054 = vmul.f32 %v4851, %v5053
    %v5055 = vrcp.pop %v4960
    %v5056 = vmul.f32 %v4856, %v5055
    %v5057 = vrcp.pop %v4962
    %v5058 = vmul.f32 %v4861, %v5057
    %v5059 = vrcp.pop %v4964
    %v5060 = vmul.f32 %v4866, %v5059
    %v5062 = vlaneseq
    %v5063 = vshrl.u32 %v5062, 7
    %v5064 = vsub.s32 0, %v5063
    %v5065 = vrot.slane %v3235, %v5064
    %5067 = vbcast.lane.b32.xlu0 %v5065, 256
    %v5068 = vpop.permute.xlu0 %5067
    %s5070 = sor.u32 256, 8
    %5071 = vbcast.lane.b32.xlu0 %v5065, %s5070
    %v5072 = vpop.permute.xlu0 %5071
    %s5074 = sor.u32 256, 16
    %5075 = vbcast.lane.b32.xlu0 %v5065, %s5074
    %v5076 = vpop.permute.xlu0 %5075
    %s5078 = sor.u32 256, 24
    %5079 = vbcast.lane.b32.xlu0 %v5065, %s5078
    %v5080 = vpop.permute.xlu0 %5079
    %v5081 = vlaneseq
    %v5082 = vshrl.u32 %v5081, 7
    %v5083 = vsub.s32 1, %v5082
    %v5084 = vrot.slane %v3235, %v5083
    %5086 = vbcast.lane.b32.xlu0 %v5084, 256
    %v5087 = vpop.permute.xlu0 %5086
    %s5089 = sor.u32 256, 8
    %5090 = vbcast.lane.b32.xlu0 %v5084, %s5089
    %v5091 = vpop.permute.xlu0 %5090
    %s5093 = sor.u32 256, 16
    %5094 = vbcast.lane.b32.xlu0 %v5084, %s5093
    %v5095 = vpop.permute.xlu0 %5094
    %s5097 = sor.u32 256, 24
    %5098 = vbcast.lane.b32.xlu0 %v5084, %s5097
    %v5099 = vpop.permute.xlu0 %5098
    %v5100 = vlaneseq
    %v5101 = vshrl.u32 %v5100, 7
    %v5102 = vsub.s32 2, %v5101
    %v5103 = vrot.slane %v3235, %v5102
    %5105 = vbcast.lane.b32.xlu0 %v5103, 256
    %v5106 = vpop.permute.xlu0 %5105
    %s5108 = sor.u32 256, 8
    %5109 = vbcast.lane.b32.xlu0 %v5103, %s5108
    %v5110 = vpop.permute.xlu0 %5109
    %s5112 = sor.u32 256, 16
    %5113 = vbcast.lane.b32.xlu0 %v5103, %s5112
    %v5114 = vpop.permute.xlu0 %5113
    %s5116 = sor.u32 256, 24
    %5117 = vbcast.lane.b32.xlu0 %v5103, %s5116
    %v5118 = vpop.permute.xlu0 %5117
    %v5119 = vlaneseq
    %v5120 = vshrl.u32 %v5119, 7
    %v5121 = vsub.s32 3, %v5120
    %v5122 = vrot.slane %v3235, %v5121
    %5124 = vbcast.lane.b32.xlu0 %v5122, 256
    %v5125 = vpop.permute.xlu0 %5124
    %s5127 = sor.u32 256, 8
    %5128 = vbcast.lane.b32.xlu0 %v5122, %s5127
    %v5129 = vpop.permute.xlu0 %5128
    %s5131 = sor.u32 256, 16
    %5132 = vbcast.lane.b32.xlu0 %v5122, %s5131
    %v5133 = vpop.permute.xlu0 %5132
    %s5135 = sor.u32 256, 24
    %5136 = vbcast.lane.b32.xlu0 %v5122, %s5135
    %v5137 = vpop.permute.xlu0 %5136
    %v5138 = vlaneseq
    %v5139 = vshrl.u32 %v5138, 7
    %v5140 = vsub.s32 4, %v5139
    %v5141 = vrot.slane %v3235, %v5140
    %5143 = vbcast.lane.b32.xlu0 %v5141, 256
    %v5144 = vpop.permute.xlu0 %5143
    %s5146 = sor.u32 256, 8
    %5147 = vbcast.lane.b32.xlu0 %v5141, %s5146
    %v5148 = vpop.permute.xlu0 %5147
    %s5150 = sor.u32 256, 16
    %5151 = vbcast.lane.b32.xlu0 %v5141, %s5150
    %v5152 = vpop.permute.xlu0 %5151
    %s5154 = sor.u32 256, 24
    %5155 = vbcast.lane.b32.xlu0 %v5141, %s5154
    %v5156 = vpop.permute.xlu0 %5155
    %v5157 = vlaneseq
    %v5158 = vshrl.u32 %v5157, 7
    %v5159 = vsub.s32 5, %v5158
    %v5160 = vrot.slane %v3235, %v5159
    %5162 = vbcast.lane.b32.xlu0 %v5160, 256
    %v5163 = vpop.permute.xlu0 %5162
    %s5165 = sor.u32 256, 8
    %5166 = vbcast.lane.b32.xlu0 %v5160, %s5165
    %v5167 = vpop.permute.xlu0 %5166
    %s5169 = sor.u32 256, 16
    %5170 = vbcast.lane.b32.xlu0 %v5160, %s5169
    %v5171 = vpop.permute.xlu0 %5170
    %s5173 = sor.u32 256, 24
    %5174 = vbcast.lane.b32.xlu0 %v5160, %s5173
    %v5175 = vpop.permute.xlu0 %5174
    %v5176 = vlaneseq
    %v5177 = vshrl.u32 %v5176, 7
    %v5178 = vsub.s32 6, %v5177
    %v5179 = vrot.slane %v3235, %v5178
    %5181 = vbcast.lane.b32.xlu0 %v5179, 256
    %v5182 = vpop.permute.xlu0 %5181
    %s5184 = sor.u32 256, 8
    %5185 = vbcast.lane.b32.xlu0 %v5179, %s5184
    %v5186 = vpop.permute.xlu0 %5185
    %s5188 = sor.u32 256, 16
    %5189 = vbcast.lane.b32.xlu0 %v5179, %s5188
    %v5190 = vpop.permute.xlu0 %5189
    %s5192 = sor.u32 256, 24
    %5193 = vbcast.lane.b32.xlu0 %v5179, %s5192
    %v5194 = vpop.permute.xlu0 %5193
    %v5195 = vlaneseq
    %v5196 = vshrl.u32 %v5195, 7
    %v5197 = vsub.s32 7, %v5196
    %v5198 = vrot.slane %v3235, %v5197
    %5200 = vbcast.lane.b32.xlu0 %v5198, 256
    %v5201 = vpop.permute.xlu0 %5200
    %s5203 = sor.u32 256, 8
    %5204 = vbcast.lane.b32.xlu0 %v5198, %s5203
    %v5205 = vpop.permute.xlu0 %5204
    %s5207 = sor.u32 256, 16
    %5208 = vbcast.lane.b32.xlu0 %v5198, %s5207
    %v5209 = vpop.permute.xlu0 %5208
    %s5211 = sor.u32 256, 24
    %5212 = vbcast.lane.b32.xlu0 %v5198, %s5211
    %v5213 = vpop.permute.xlu0 %5212
    %v5246 = vadd.f32 %v4998, %v5068
    %v5247 = vadd.f32 %v5000, %v5072
    %v5248 = vadd.f32 %v5002, %v5076
    %v5249 = vadd.f32 %v5004, %v5080
    %v5250 = vadd.f32 %v5006, %v5087
    %v5251 = vadd.f32 %v5008, %v5091
    %v5252 = vadd.f32 %v5010, %v5095
    %v5253 = vadd.f32 %v5012, %v5099
    %v5254 = vadd.f32 %v5014, %v5106
    %v5255 = vadd.f32 %v5016, %v5110
    %v5256 = vadd.f32 %v5018, %v5114
    %v5257 = vadd.f32 %v5020, %v5118
    %v5258 = vadd.f32 %v5022, %v5125
    %v5259 = vadd.f32 %v5024, %v5129
    %v5260 = vadd.f32 %v5026, %v5133
    %v5261 = vadd.f32 %v5028, %v5137
    %v5262 = vadd.f32 %v5030, %v5144
    %v5263 = vadd.f32 %v5032, %v5148
    %v5264 = vadd.f32 %v5034, %v5152
    %v5265 = vadd.f32 %v5036, %v5156
    %v5266 = vadd.f32 %v5038, %v5163
    %v5267 = vadd.f32 %v5040, %v5167
    %v5268 = vadd.f32 %v5042, %v5171
    %v5269 = vadd.f32 %v5044, %v5175
    %v5270 = vadd.f32 %v5046, %v5182
    %v5271 = vadd.f32 %v5048, %v5186
    %v5272 = vadd.f32 %v5050, %v5190
    %v5273 = vadd.f32 %v5052, %v5194
    %v5274 = vadd.f32 %v5054, %v5201
    %v5275 = vadd.f32 %v5056, %v5205
    %v5276 = vadd.f32 %v5058, %v5209
    %v5277 = vadd.f32 %v5060, %v5213
    %v5278 = vpack.c.bf16 %v5247, %v5246
    %v5279 = vpack.c.bf16 %v5249, %v5248
    %v5280 = vpack.c.bf16 %v5251, %v5250
    %v5281 = vpack.c.bf16 %v5253, %v5252
    %v5282 = vpack.c.bf16 %v5255, %v5254
    %v5283 = vpack.c.bf16 %v5257, %v5256
    %v5284 = vpack.c.bf16 %v5259, %v5258
    %v5285 = vpack.c.bf16 %v5261, %v5260
    %v5286 = vpack.c.bf16 %v5263, %v5262
    %v5287 = vpack.c.bf16 %v5265, %v5264
    %v5288 = vpack.c.bf16 %v5267, %v5266
    %v5289 = vpack.c.bf16 %v5269, %v5268
    %v5290 = vpack.c.bf16 %v5271, %v5270
    %v5291 = vpack.c.bf16 %v5273, %v5272
    %v5292 = vpack.c.bf16 %v5275, %v5274
    %v5293 = vpack.c.bf16 %v5277, %v5276
    %v5294 = vld [vmem:[%s9] sm:$0xff]
    %v5295 = vld [vmem:[%s9 + $0x8] sm:$0xff]
    %v5296 = vld [vmem:[%s9 + $0x10] sm:$0xff]
    %v5297 = vld [vmem:[%s9 + $0x18] sm:$0xff]
    %v5298 = vld [vmem:[%s9 + $0x20] sm:$0xff]
    %v5299 = vld [vmem:[%s9 + $0x28] sm:$0xff]
    %v5300 = vld [vmem:[%s9 + $0x30] sm:$0xff]
    %v5301 = vld [vmem:[%s9 + $0x38] sm:$0xff]
    %v5302 = vld [vmem:[%s10] sm:$0xf]
    %v5304 = vlaneseq
    %v5305 = vshrl.u32 %v5304, 7
    %v5306 = vsub.s32 0, %v5305
    %v5307 = vrot.slane %v5302, %v5306
    %v5308 = vlaneseq
    %v5309 = vshrl.u32 %v5308, 7
    %v5310 = vsub.s32 1, %v5309
    %v5311 = vrot.slane %v5302, %v5310
    %v5312 = vlaneseq
    %v5313 = vshrl.u32 %v5312, 7
    %v5314 = vsub.s32 2, %v5313
    %v5315 = vrot.slane %v5302, %v5314
    %v5316 = vlaneseq
    %v5317 = vshrl.u32 %v5316, 7
    %v5318 = vsub.s32 3, %v5317
    %v5319 = vrot.slane %v5302, %v5318
    %v5340 = vunpack.c.l.b16 %v5278
    %v5341 = vunpack.c.h.b16 %v5278
    %v5342 = vunpack.c.l.b16 %v5279
    %v5343 = vunpack.c.h.b16 %v5279
    %v5344 = vunpack.c.l.b16 %v5280
    %v5345 = vunpack.c.h.b16 %v5280
    %v5346 = vunpack.c.l.b16 %v5281
    %v5347 = vunpack.c.h.b16 %v5281
    %v5348 = vunpack.c.l.b16 %v5282
    %v5349 = vunpack.c.h.b16 %v5282
    %v5350 = vunpack.c.l.b16 %v5283
    %v5351 = vunpack.c.h.b16 %v5283
    %v5352 = vunpack.c.l.b16 %v5284
    %v5353 = vunpack.c.h.b16 %v5284
    %v5354 = vunpack.c.l.b16 %v5285
    %v5355 = vunpack.c.h.b16 %v5285
    %v5356 = vunpack.c.l.b16 %v5286
    %v5357 = vunpack.c.h.b16 %v5286
    %v5358 = vunpack.c.l.b16 %v5287
    %v5359 = vunpack.c.h.b16 %v5287
    %v5360 = vunpack.c.l.b16 %v5288
    %v5361 = vunpack.c.h.b16 %v5288
    %v5362 = vunpack.c.l.b16 %v5289
    %v5363 = vunpack.c.h.b16 %v5289
    %v5364 = vunpack.c.l.b16 %v5290
    %v5365 = vunpack.c.h.b16 %v5290
    %v5366 = vunpack.c.l.b16 %v5291
    %v5367 = vunpack.c.h.b16 %v5291
    %v5368 = vunpack.c.l.b16 %v5292
    %v5369 = vunpack.c.h.b16 %v5292
    %v5370 = vunpack.c.l.b16 %v5293
    %v5371 = vunpack.c.h.b16 %v5293
    %5372 = vset.pattern.permute.xlu0 0
    %5373 = vperm.xlu0 %5372, %v5340
    %v5374 = vpop.permute.xlu0 %5373
    %5375 = vset.pattern.permute.xlu0 0
    %5376 = vperm.xlu0 %5375, %v5341
    %v5377 = vpop.permute.xlu0 %5376
    %5378 = vset.pattern.permute.xlu0 0
    %5379 = vperm.xlu0 %5378, %v5342
    %v5380 = vpop.permute.xlu0 %5379
    %5381 = vset.pattern.permute.xlu0 0
    %5382 = vperm.xlu0 %5381, %v5343
    %v5383 = vpop.permute.xlu0 %5382
    %5384 = vset.pattern.permute.xlu0 0
    %5385 = vperm.xlu0 %5384, %v5344
    %v5386 = vpop.permute.xlu0 %5385
    %5387 = vset.pattern.permute.xlu0 0
    %5388 = vperm.xlu0 %5387, %v5345
    %v5389 = vpop.permute.xlu0 %5388
    %5390 = vset.pattern.permute.xlu0 0
    %5391 = vperm.xlu0 %5390, %v5346
    %v5392 = vpop.permute.xlu0 %5391
    %5393 = vset.pattern.permute.xlu0 0
    %5394 = vperm.xlu0 %5393, %v5347
    %v5395 = vpop.permute.xlu0 %5394
    %5396 = vset.pattern.permute.xlu0 0
    %5397 = vperm.xlu0 %5396, %v5348
    %v5398 = vpop.permute.xlu0 %5397
    %5399 = vset.pattern.permute.xlu0 0
    %5400 = vperm.xlu0 %5399, %v5349
    %v5401 = vpop.permute.xlu0 %5400
    %5402 = vset.pattern.permute.xlu0 0
    %5403 = vperm.xlu0 %5402, %v5350
    %v5404 = vpop.permute.xlu0 %5403
    %5405 = vset.pattern.permute.xlu0 0
    %5406 = vperm.xlu0 %5405, %v5351
    %v5407 = vpop.permute.xlu0 %5406
    %5408 = vset.pattern.permute.xlu0 0
    %5409 = vperm.xlu0 %5408, %v5352
    %v5410 = vpop.permute.xlu0 %5409
    %5411 = vset.pattern.permute.xlu0 0
    %5412 = vperm.xlu0 %5411, %v5353
    %v5413 = vpop.permute.xlu0 %5412
    %5414 = vset.pattern.permute.xlu0 0
    %5415 = vperm.xlu0 %5414, %v5354
    %v5416 = vpop.permute.xlu0 %5415
    %5417 = vset.pattern.permute.xlu0 0
    %5418 = vperm.xlu0 %5417, %v5355
    %v5419 = vpop.permute.xlu0 %5418
    %5420 = vset.pattern.permute.xlu0 0
    %5421 = vperm.xlu0 %5420, %v5356
    %v5422 = vpop.permute.xlu0 %5421
    %5423 = vset.pattern.permute.xlu0 0
    %5424 = vperm.xlu0 %5423, %v5357
    %v5425 = vpop.permute.xlu0 %5424
    %5426 = vset.pattern.permute.xlu0 0
    %5427 = vperm.xlu0 %5426, %v5358
    %v5428 = vpop.permute.xlu0 %5427
    %5429 = vset.pattern.permute.xlu0 0
    %5430 = vperm.xlu0 %5429, %v5359
    %v5431 = vpop.permute.xlu0 %5430
    %5432 = vset.pattern.permute.xlu0 0
    %5433 = vperm.xlu0 %5432, %v5360
    %v5434 = vpop.permute.xlu0 %5433
    %5435 = vset.pattern.permute.xlu0 0
    %5436 = vperm.xlu0 %5435, %v5361
    %v5437 = vpop.permute.xlu0 %5436
    %5438 = vset.pattern.permute.xlu0 0
    %5439 = vperm.xlu0 %5438, %v5362
    %v5440 = vpop.permute.xlu0 %5439
    %5441 = vset.pattern.permute.xlu0 0
    %5442 = vperm.xlu0 %5441, %v5363
    %v5443 = vpop.permute.xlu0 %5442
    %5444 = vset.pattern.permute.xlu0 0
    %5445 = vperm.xlu0 %5444, %v5364
    %v5446 = vpop.permute.xlu0 %5445
    %5447 = vset.pattern.permute.xlu0 0
    %5448 = vperm.xlu0 %5447, %v5365
    %v5449 = vpop.permute.xlu0 %5448
    %5450 = vset.pattern.permute.xlu0 0
    %5451 = vperm.xlu0 %5450, %v5366
    %v5452 = vpop.permute.xlu0 %5451
    %5453 = vset.pattern.permute.xlu0 0
    %5454 = vperm.xlu0 %5453, %v5367
    %v5455 = vpop.permute.xlu0 %5454
    %5456 = vset.pattern.permute.xlu0 0
    %5457 = vperm.xlu0 %5456, %v5368
    %v5458 = vpop.permute.xlu0 %5457
    %5459 = vset.pattern.permute.xlu0 0
    %5460 = vperm.xlu0 %5459, %v5369
    %v5461 = vpop.permute.xlu0 %5460
    %5462 = vset.pattern.permute.xlu0 0
    %5463 = vperm.xlu0 %5462, %v5370
    %v5464 = vpop.permute.xlu0 %5463
    %5465 = vset.pattern.permute.xlu0 0
    %5466 = vperm.xlu0 %5465, %v5371
    %v5467 = vpop.permute.xlu0 %5466
    %v5468 = vlaneseq
    %v5469 = vshrl.u32 %v5468, 7
    %v5470 = vsub.s32 %v2296, %v5469
    %v5471 = vrot.slane %v5374, %v5470
    %v5472 = vlaneseq
    %v5473 = vshrl.u32 %v5472, 7
    %v5474 = vsub.s32 %v2301, %v5473
    %v5475 = vrot.slane %v5377, %v5474
    %v5476 = vsel %vm2306, %v5475, %v5471
    %v5477 = vlaneseq
    %v5478 = vshrl.u32 %v5477, 7
    %v5479 = vsub.s32 %v2308, %v5478
    %v5480 = vrot.slane %v5380, %v5479
    %v5481 = vsel %vm2313, %v5480, %v5476
    %v5482 = vlaneseq
    %v5483 = vshrl.u32 %v5482, 7
    %v5484 = vsub.s32 %v2315, %v5483
    %v5485 = vrot.slane %v5383, %v5484
    %v5486 = vsel %vm2320, %v5485, %v5481
    %v5487 = vlaneseq
    %v5488 = vshrl.u32 %v5487, 7
    %v5489 = vsub.s32 %v2296, %v5488
    %v5490 = vrot.slane %v5386, %v5489
    %v5491 = vlaneseq
    %v5492 = vshrl.u32 %v5491, 7
    %v5493 = vsub.s32 %v2301, %v5492
    %v5494 = vrot.slane %v5389, %v5493
    %v5495 = vsel %vm2306, %v5494, %v5490
    %v5496 = vlaneseq
    %v5497 = vshrl.u32 %v5496, 7
    %v5498 = vsub.s32 %v2308, %v5497
    %v5499 = vrot.slane %v5392, %v5498
    %v5500 = vsel %vm2313, %v5499, %v5495
    %v5501 = vlaneseq
    %v5502 = vshrl.u32 %v5501, 7
    %v5503 = vsub.s32 %v2315, %v5502
    %v5504 = vrot.slane %v5395, %v5503
    %v5505 = vsel %vm2320, %v5504, %v5500
    %v5506 = vlaneseq
    %v5507 = vshrl.u32 %v5506, 7
    %v5508 = vsub.s32 %v2296, %v5507
    %v5509 = vrot.slane %v5398, %v5508
    %v5510 = vlaneseq
    %v5511 = vshrl.u32 %v5510, 7
    %v5512 = vsub.s32 %v2301, %v5511
    %v5513 = vrot.slane %v5401, %v5512
    %v5514 = vsel %vm2306, %v5513, %v5509
    %v5515 = vlaneseq
    %v5516 = vshrl.u32 %v5515, 7
    %v5517 = vsub.s32 %v2308, %v5516
    %v5518 = vrot.slane %v5404, %v5517
    %v5519 = vsel %vm2313, %v5518, %v5514
    %v5520 = vlaneseq
    %v5521 = vshrl.u32 %v5520, 7
    %v5522 = vsub.s32 %v2315, %v5521
    %v5523 = vrot.slane %v5407, %v5522
    %v5524 = vsel %vm2320, %v5523, %v5519
    %v5525 = vlaneseq
    %v5526 = vshrl.u32 %v5525, 7
    %v5527 = vsub.s32 %v2296, %v5526
    %v5528 = vrot.slane %v5410, %v5527
    %v5529 = vlaneseq
    %v5530 = vshrl.u32 %v5529, 7
    %v5531 = vsub.s32 %v2301, %v5530
    %v5532 = vrot.slane %v5413, %v5531
    %v5533 = vsel %vm2306, %v5532, %v5528
    %v5534 = vlaneseq
    %v5535 = vshrl.u32 %v5534, 7
    %v5536 = vsub.s32 %v2308, %v5535
    %v5537 = vrot.slane %v5416, %v5536
    %v5538 = vsel %vm2313, %v5537, %v5533
    %v5539 = vlaneseq
    %v5540 = vshrl.u32 %v5539, 7
    %v5541 = vsub.s32 %v2315, %v5540
    %v5542 = vrot.slane %v5419, %v5541
    %v5543 = vsel %vm2320, %v5542, %v5538
    %v5544 = vlaneseq
    %v5545 = vshrl.u32 %v5544, 7
    %v5546 = vsub.s32 %v2296, %v5545
    %v5547 = vrot.slane %v5422, %v5546
    %v5548 = vlaneseq
    %v5549 = vshrl.u32 %v5548, 7
    %v5550 = vsub.s32 %v2301, %v5549
    %v5551 = vrot.slane %v5425, %v5550
    %v5552 = vsel %vm2306, %v5551, %v5547
    %v5553 = vlaneseq
    %v5554 = vshrl.u32 %v5553, 7
    %v5555 = vsub.s32 %v2308, %v5554
    %v5556 = vrot.slane %v5428, %v5555
    %v5557 = vsel %vm2313, %v5556, %v5552
    %v5558 = vlaneseq
    %v5559 = vshrl.u32 %v5558, 7
    %v5560 = vsub.s32 %v2315, %v5559
    %v5561 = vrot.slane %v5431, %v5560
    %v5562 = vsel %vm2320, %v5561, %v5557
    %v5563 = vlaneseq
    %v5564 = vshrl.u32 %v5563, 7
    %v5565 = vsub.s32 %v2296, %v5564
    %v5566 = vrot.slane %v5434, %v5565
    %v5567 = vlaneseq
    %v5568 = vshrl.u32 %v5567, 7
    %v5569 = vsub.s32 %v2301, %v5568
    %v5570 = vrot.slane %v5437, %v5569
    %v5571 = vsel %vm2306, %v5570, %v5566
    %v5572 = vlaneseq
    %v5573 = vshrl.u32 %v5572, 7
    %v5574 = vsub.s32 %v2308, %v5573
    %v5575 = vrot.slane %v5440, %v5574
    %v5576 = vsel %vm2313, %v5575, %v5571
    %v5577 = vlaneseq
    %v5578 = vshrl.u32 %v5577, 7
    %v5579 = vsub.s32 %v2315, %v5578
    %v5580 = vrot.slane %v5443, %v5579
    %v5581 = vsel %vm2320, %v5580, %v5576
    %v5582 = vlaneseq
    %v5583 = vshrl.u32 %v5582, 7
    %v5584 = vsub.s32 %v2296, %v5583
    %v5585 = vrot.slane %v5446, %v5584
    %v5586 = vlaneseq
    %v5587 = vshrl.u32 %v5586, 7
    %v5588 = vsub.s32 %v2301, %v5587
    %v5589 = vrot.slane %v5449, %v5588
    %v5590 = vsel %vm2306, %v5589, %v5585
    %v5591 = vlaneseq
    %v5592 = vshrl.u32 %v5591, 7
    %v5593 = vsub.s32 %v2308, %v5592
    %v5594 = vrot.slane %v5452, %v5593
    %v5595 = vsel %vm2313, %v5594, %v5590
    %v5596 = vlaneseq
    %v5597 = vshrl.u32 %v5596, 7
    %v5598 = vsub.s32 %v2315, %v5597
    %v5599 = vrot.slane %v5455, %v5598
    %v5600 = vsel %vm2320, %v5599, %v5595
    %v5601 = vlaneseq
    %v5602 = vshrl.u32 %v5601, 7
    %v5603 = vsub.s32 %v2296, %v5602
    %v5604 = vrot.slane %v5458, %v5603
    %v5605 = vlaneseq
    %v5606 = vshrl.u32 %v5605, 7
    %v5607 = vsub.s32 %v2301, %v5606
    %v5608 = vrot.slane %v5461, %v5607
    %v5609 = vsel %vm2306, %v5608, %v5604
    %v5610 = vlaneseq
    %v5611 = vshrl.u32 %v5610, 7
    %v5612 = vsub.s32 %v2308, %v5611
    %v5613 = vrot.slane %v5464, %v5612
    %v5614 = vsel %vm2313, %v5613, %v5609
    %v5615 = vlaneseq
    %v5616 = vshrl.u32 %v5615, 7
    %v5617 = vsub.s32 %v2315, %v5616
    %v5618 = vrot.slane %v5467, %v5617
    %v5619 = vsel %vm2320, %v5618, %v5614
    %v5620 = vsel %vm2455, %v5505, %v5486
    %v5621 = vsel %vm2457, %v5524, %v5620
    %v5622 = vsel %vm2459, %v5543, %v5621
    %v5623 = vsel %vm2461, %v5562, %v5622
    %v5624 = vsel %vm2463, %v5581, %v5623
    %v5625 = vsel %vm2465, %v5600, %v5624
    %v5626 = vsel %vm2467, %v5619, %v5625
    %v5627 = vpack.c.b16 %v5626, %v5626
    %v5636 = vunpack.c.l.b16 %v5294
    %v5637 = vunpack.c.h.b16 %v5294
    %v5638 = vunpack.c.l.b16 %v5295
    %v5639 = vunpack.c.h.b16 %v5295
    %v5640 = vunpack.c.l.b16 %v5296
    %v5641 = vunpack.c.h.b16 %v5296
    %v5642 = vunpack.c.l.b16 %v5297
    %v5643 = vunpack.c.h.b16 %v5297
    %v5644 = vunpack.c.l.b16 %v5298
    %v5645 = vunpack.c.h.b16 %v5298
    %v5646 = vunpack.c.l.b16 %v5299
    %v5647 = vunpack.c.h.b16 %v5299
    %v5648 = vunpack.c.l.b16 %v5300
    %v5649 = vunpack.c.h.b16 %v5300
    %v5650 = vunpack.c.l.b16 %v5301
    %v5651 = vunpack.c.h.b16 %v5301
    %v5652 = vpack.c.b16 %v5640, %v5636
    %v5653 = vpack.c.b16 %v5641, %v5637
    %v5654 = vpack.c.b16 %v5642, %v5638
    %v5655 = vpack.c.b16 %v5643, %v5639
    %v5656 = vpack.c.b16 %v5648, %v5644
    %v5657 = vpack.c.b16 %v5649, %v5645
    %v5658 = vpack.c.b16 %v5650, %v5646
    %v5659 = vpack.c.b16 %v5651, %v5647
    %v5669 = vsel %vm119, %v5627, 0
    %5671 = vmatprep.subr.bf16.mxu0 0
    %5672 = vmatpush1.bf16.msra.mxu0 0
    %5673 = vmatprep.subr.bf16.mxu0 0
    %5674 = vmatpush1.bf16.msra.mxu0 0
    %5675 = vmatprep.subr.bf16.mxu0 0
    %5676 = vmatpush1.bf16.msra.mxu0 0
    %5677 = vmatprep.subr.bf16.mxu0 0
    %5678 = vmatpush1.bf16.msra.mxu0 0
    %5679 = vmatprep.subr.bf16.mxu0 0
    %5680 = vmatpush1.bf16.msra.mxu0 0
    %5681 = vmatprep.subr.bf16.mxu0 0
    %5682 = vmatpush1.bf16.msra.mxu0 0
    %5683 = vmatprep.subr.bf16.mxu0 %v5657
    %5684 = vmatpush1.bf16.msra.mxu0 %v5656
    %5685 = vmatprep.subr.bf16.mxu0 %v5653
    %5686 = vmatpush1.bf16.msra.mxu0 %v5652
    %5687 = vmatprep.subr.bf16.mxu0 0
    %5688 = vmatpush2.bf16.msra.mxu0 0
    %5689 = vmatprep.subr.bf16.mxu0 0
    %5690 = vmatpush2.bf16.msra.mxu0 0
    %5691 = vmatprep.subr.bf16.mxu0 0
    %5692 = vmatpush2.bf16.msra.mxu0 0
    %5693 = vmatprep.subr.bf16.mxu0 0
    %5694 = vmatpush2.bf16.msra.mxu0 0
    %5695 = vmatprep.subr.bf16.mxu0 0
    %5696 = vmatpush2.bf16.msra.mxu0 0
    %5697 = vmatprep.subr.bf16.mxu0 0
    %5698 = vmatpush2.bf16.msra.mxu0 0
    %5699 = vmatprep.subr.bf16.mxu0 0
    %5700 = vmatpush2.bf16.msra.mxu0 0
    %5701 = vmatprep.subr.bf16.mxu0 0
    %5702 = vmatpush2.bf16.msra.mxu0 0
    %5703 = vmatprep.mubr.bf16.mxu0 0
    %5704 = vmatmul.mubr.bf16.gmra.mxu0 %v5669
    %v5705 = vpop.f32.mrf.mxu0
    %v5706 = vadd.f32 %v5307, %v5705
    %v5707 = vpop.f32.mrf.mxu0
    %v5708 = vadd.f32 %v5311, %v5707
    %v5709 = vpop.f32.mrf.mxu0
    %v5710 = vpop.f32.mrf.mxu0
    %5711 = vdwg.mxu0
    %5712 = vmatprep.subr.bf16.mxu0 0
    %5713 = vmatpush1.bf16.msra.mxu0 0
    %5714 = vmatprep.subr.bf16.mxu0 0
    %5715 = vmatpush1.bf16.msra.mxu0 0
    %5716 = vmatprep.subr.bf16.mxu0 0
    %5717 = vmatpush1.bf16.msra.mxu0 0
    %5718 = vmatprep.subr.bf16.mxu0 0
    %5719 = vmatpush1.bf16.msra.mxu0 0
    %5720 = vmatprep.subr.bf16.mxu0 0
    %5721 = vmatpush1.bf16.msra.mxu0 0
    %5722 = vmatprep.subr.bf16.mxu0 0
    %5723 = vmatpush1.bf16.msra.mxu0 0
    %5724 = vmatprep.subr.bf16.mxu0 %v5659
    %5725 = vmatpush1.bf16.msra.mxu0 %v5658
    %5726 = vmatprep.subr.bf16.mxu0 %v5655
    %5727 = vmatpush1.bf16.msra.mxu0 %v5654
    %5728 = vmatprep.subr.bf16.mxu0 0
    %5729 = vmatpush2.bf16.msra.mxu0 0
    %5730 = vmatprep.subr.bf16.mxu0 0
    %5731 = vmatpush2.bf16.msra.mxu0 0
    %5732 = vmatprep.subr.bf16.mxu0 0
    %5733 = vmatpush2.bf16.msra.mxu0 0
    %5734 = vmatprep.subr.bf16.mxu0 0
    %5735 = vmatpush2.bf16.msra.mxu0 0
    %5736 = vmatprep.subr.bf16.mxu0 0
    %5737 = vmatpush2.bf16.msra.mxu0 0
    %5738 = vmatprep.subr.bf16.mxu0 0
    %5739 = vmatpush2.bf16.msra.mxu0 0
    %5740 = vmatprep.subr.bf16.mxu0 0
    %5741 = vmatpush2.bf16.msra.mxu0 0
    %5742 = vmatprep.subr.bf16.mxu0 0
    %5743 = vmatpush2.bf16.msra.mxu0 0
    %5744 = vmatprep.mubr.bf16.mxu0 0
    %5745 = vmatmul.mubr.bf16.gmra.mxu0 %v5669
    %v5746 = vpop.f32.mrf.mxu0
    %v5747 = vadd.f32 %v5315, %v5746
    %v5748 = vpop.f32.mrf.mxu0
    %v5749 = vadd.f32 %v5319, %v5748
    %v5750 = vpop.f32.mrf.mxu0
    %v5751 = vpop.f32.mrf.mxu0
    %5752 = vdwg.mxu0
    %v5753 = vmax.f32 %v5706, 0.0
    %v5754 = vmax.f32 %v5708, 0.0
    %v5755 = vmax.f32 %v5747, 0.0
    %v5756 = vmax.f32 %v5749, 0.0
    %v5757 = vpack.c.bf16 %v5753, %v5753
    %v5758 = vpack.c.bf16 %v5754, %v5754
    %v5759 = vpack.c.bf16 %v5755, %v5755
    %v5760 = vpack.c.bf16 %v5756, %v5756
    %v5761 = vld [vmem:[#allocation2] sm:$0xff]
    %v5762 = vld [vmem:[#allocation2 + $0x8] sm:$0xff]
    %v5763 = vld [vmem:[#allocation2 + $0x10] sm:$0xff]
    %v5764 = vld [vmem:[#allocation2 + $0x18] sm:$0xff]
    %v5765 = vld [vmem:[#allocation2 + $0x20] sm:$0xff]
    %v5766 = vld [vmem:[#allocation2 + $0x28] sm:$0xff]
    %v5767 = vld [vmem:[#allocation2 + $0x30] sm:$0xff]
    %v5768 = vld [vmem:[#allocation2 + $0x38] sm:$0xff]
    %v5769 = vld [vmem:[#allocation2 + $0x40] sm:$0xff]
    %v5770 = vld [vmem:[#allocation2 + $0x48] sm:$0xff]
    %v5771 = vld [vmem:[#allocation2 + $0x50] sm:$0xff]
    %v5772 = vld [vmem:[#allocation2 + $0x58] sm:$0xff]
    %v5773 = vld [vmem:[#allocation2 + $0x60] sm:$0xff]
    %v5774 = vld [vmem:[#allocation2 + $0x68] sm:$0xff]
    %v5775 = vld [vmem:[#allocation2 + $0x70] sm:$0xff]
    %v5776 = vld [vmem:[#allocation2 + $0x78] sm:$0xff]
    %v5777 = vld [vmem:[#allocation2 + $0x80] sm:$0xff]
    %v5778 = vld [vmem:[#allocation2 + $0x88] sm:$0xff]
    %v5779 = vld [vmem:[#allocation2 + $0x90] sm:$0xff]
    %v5780 = vld [vmem:[#allocation2 + $0x98] sm:$0xff]
    %v5781 = vld [vmem:[#allocation2 + $0xa0] sm:$0xff]
    %v5782 = vld [vmem:[#allocation2 + $0xa8] sm:$0xff]
    %v5783 = vld [vmem:[#allocation2 + $0xb0] sm:$0xff]
    %v5784 = vld [vmem:[#allocation2 + $0xb8] sm:$0xff]
    %v5785 = vld [vmem:[#allocation2 + $0xc0] sm:$0xff]
    %v5786 = vld [vmem:[#allocation2 + $0xc8] sm:$0xff]
    %v5787 = vld [vmem:[#allocation2 + $0xd0] sm:$0xff]
    %v5788 = vld [vmem:[#allocation2 + $0xd8] sm:$0xff]
    %v5789 = vld [vmem:[#allocation2 + $0xe0] sm:$0xff]
    %v5790 = vld [vmem:[#allocation2 + $0xe8] sm:$0xff]
    %v5791 = vld [vmem:[#allocation2 + $0xf0] sm:$0xff]
    %v5792 = vld [vmem:[#allocation2 + $0xf8] sm:$0xff]
    %v5793 = vld [vmem:[#allocation2 + $0x100] sm:$0xff]
    %v5794 = vld [vmem:[#allocation2 + $0x108] sm:$0xff]
    %v5795 = vld [vmem:[#allocation2 + $0x110] sm:$0xff]
    %v5796 = vld [vmem:[#allocation2 + $0x118] sm:$0xff]
    %v5797 = vld [vmem:[#allocation2 + $0x120] sm:$0xff]
    %v5798 = vld [vmem:[#allocation2 + $0x128] sm:$0xff]
    %v5799 = vld [vmem:[#allocation2 + $0x130] sm:$0xff]
    %v5800 = vld [vmem:[#allocation2 + $0x138] sm:$0xff]
    %v5801 = vld [vmem:[#allocation2 + $0x140] sm:$0xff]
    %v5802 = vld [vmem:[#allocation2 + $0x148] sm:$0xff]
    %v5803 = vld [vmem:[#allocation2 + $0x150] sm:$0xff]
    %v5804 = vld [vmem:[#allocation2 + $0x158] sm:$0xff]
    %v5805 = vld [vmem:[#allocation2 + $0x160] sm:$0xff]
    %v5806 = vld [vmem:[#allocation2 + $0x168] sm:$0xff]
    %v5807 = vld [vmem:[#allocation2 + $0x170] sm:$0xff]
    %v5808 = vld [vmem:[#allocation2 + $0x178] sm:$0xff]
    %v5809 = vld [vmem:[#allocation2 + $0x180] sm:$0xff]
    %v5810 = vld [vmem:[#allocation2 + $0x188] sm:$0xff]
    %v5811 = vld [vmem:[#allocation2 + $0x190] sm:$0xff]
    %v5812 = vld [vmem:[#allocation2 + $0x198] sm:$0xff]
    %v5813 = vld [vmem:[#allocation2 + $0x1a0] sm:$0xff]
    %v5814 = vld [vmem:[#allocation2 + $0x1a8] sm:$0xff]
    %v5815 = vld [vmem:[#allocation2 + $0x1b0] sm:$0xff]
    %v5816 = vld [vmem:[#allocation2 + $0x1b8] sm:$0xff]
    %v5817 = vld [vmem:[#allocation2 + $0x1c0] sm:$0xff]
    %v5818 = vld [vmem:[#allocation2 + $0x1c8] sm:$0xff]
    %v5819 = vld [vmem:[#allocation2 + $0x1d0] sm:$0xff]
    %v5820 = vld [vmem:[#allocation2 + $0x1d8] sm:$0xff]
    %v5821 = vld [vmem:[#allocation2 + $0x1e0] sm:$0xff]
    %v5822 = vld [vmem:[#allocation2 + $0x1e8] sm:$0xff]
    %v5823 = vld [vmem:[#allocation2 + $0x1f0] sm:$0xff]
    %v5824 = vld [vmem:[#allocation2 + $0x1f8] sm:$0xff]
    %v5825 = vld [vmem:[%s12] sm:$0x3]
    %v5827 = vlaneseq
    %v5828 = vshrl.u32 %v5827, 7
    %v5829 = vsub.s32 0, %v5828
    %v5830 = vrot.slane %v5825, %v5829
    %v5831 = vlaneseq
    %v5832 = vshrl.u32 %v5831, 7
    %v5833 = vsub.s32 1, %v5832
    %v5834 = vrot.slane %v5825, %v5833
    %v5901 = vunpack.c.l.b16 %v5761
    %v5902 = vunpack.c.h.b16 %v5761
    %v5903 = vunpack.c.l.b16 %v5762
    %v5904 = vunpack.c.h.b16 %v5762
    %v5905 = vunpack.c.l.b16 %v5763
    %v5906 = vunpack.c.h.b16 %v5763
    %v5907 = vunpack.c.l.b16 %v5764
    %v5908 = vunpack.c.h.b16 %v5764
    %v5909 = vunpack.c.l.b16 %v5765
    %v5910 = vunpack.c.h.b16 %v5765
    %v5911 = vunpack.c.l.b16 %v5766
    %v5912 = vunpack.c.h.b16 %v5766
    %v5913 = vunpack.c.l.b16 %v5767
    %v5914 = vunpack.c.h.b16 %v5767
    %v5915 = vunpack.c.l.b16 %v5768
    %v5916 = vunpack.c.h.b16 %v5768
    %v5917 = vunpack.c.l.b16 %v5769
    %v5918 = vunpack.c.h.b16 %v5769
    %v5919 = vunpack.c.l.b16 %v5770
    %v5920 = vunpack.c.h.b16 %v5770
    %v5921 = vunpack.c.l.b16 %v5771
    %v5922 = vunpack.c.h.b16 %v5771
    %v5923 = vunpack.c.l.b16 %v5772
    %v5924 = vunpack.c.h.b16 %v5772
    %v5925 = vunpack.c.l.b16 %v5773
    %v5926 = vunpack.c.h.b16 %v5773
    %v5927 = vunpack.c.l.b16 %v5774
    %v5928 = vunpack.c.h.b16 %v5774
    %v5929 = vunpack.c.l.b16 %v5775
    %v5930 = vunpack.c.h.b16 %v5775
    %v5931 = vunpack.c.l.b16 %v5776
    %v5932 = vunpack.c.h.b16 %v5776
    %v5933 = vunpack.c.l.b16 %v5777
    %v5934 = vunpack.c.h.b16 %v5777
    %v5935 = vunpack.c.l.b16 %v5778
    %v5936 = vunpack.c.h.b16 %v5778
    %v5937 = vunpack.c.l.b16 %v5779
    %v5938 = vunpack.c.h.b16 %v5779
    %v5939 = vunpack.c.l.b16 %v5780
    %v5940 = vunpack.c.h.b16 %v5780
    %v5941 = vunpack.c.l.b16 %v5781
    %v5942 = vunpack.c.h.b16 %v5781
    %v5943 = vunpack.c.l.b16 %v5782
    %v5944 = vunpack.c.h.b16 %v5782
    %v5945 = vunpack.c.l.b16 %v5783
    %v5946 = vunpack.c.h.b16 %v5783
    %v5947 = vunpack.c.l.b16 %v5784
    %v5948 = vunpack.c.h.b16 %v5784
    %v5949 = vunpack.c.l.b16 %v5785
    %v5950 = vunpack.c.h.b16 %v5785
    %v5951 = vunpack.c.l.b16 %v5786
    %v5952 = vunpack.c.h.b16 %v5786
    %v5953 = vunpack.c.l.b16 %v5787
    %v5954 = vunpack.c.h.b16 %v5787
    %v5955 = vunpack.c.l.b16 %v5788
    %v5956 = vunpack.c.h.b16 %v5788
    %v5957 = vunpack.c.l.b16 %v5789
    %v5958 = vunpack.c.h.b16 %v5789
    %v5959 = vunpack.c.l.b16 %v5790
    %v5960 = vunpack.c.h.b16 %v5790
    %v5961 = vunpack.c.l.b16 %v5791
    %v5962 = vunpack.c.h.b16 %v5791
    %v5963 = vunpack.c.l.b16 %v5792
    %v5964 = vunpack.c.h.b16 %v5792
    %v5965 = vunpack.c.l.b16 %v5793
    %v5966 = vunpack.c.h.b16 %v5793
    %v5967 = vunpack.c.l.b16 %v5794
    %v5968 = vunpack.c.h.b16 %v5794
    %v5969 = vunpack.c.l.b16 %v5795
    %v5970 = vunpack.c.h.b16 %v5795
    %v5971 = vunpack.c.l.b16 %v5796
    %v5972 = vunpack.c.h.b16 %v5796
    %v5973 = vunpack.c.l.b16 %v5797
    %v5974 = vunpack.c.h.b16 %v5797
    %v5975 = vunpack.c.l.b16 %v5798
    %v5976 = vunpack.c.h.b16 %v5798
    %v5977 = vunpack.c.l.b16 %v5799
    %v5978 = vunpack.c.h.b16 %v5799
    %v5979 = vunpack.c.l.b16 %v5800
    %v5980 = vunpack.c.h.b16 %v5800
    %v5981 = vunpack.c.l.b16 %v5801
    %v5982 = vunpack.c.h.b16 %v5801
    %v5983 = vunpack.c.l.b16 %v5802
    %v5984 = vunpack.c.h.b16 %v5802
    %v5985 = vunpack.c.l.b16 %v5803
    %v5986 = vunpack.c.h.b16 %v5803
    %v5987 = vunpack.c.l.b16 %v5804
    %v5988 = vunpack.c.h.b16 %v5804
    %v5989 = vunpack.c.l.b16 %v5805
    %v5990 = vunpack.c.h.b16 %v5805
    %v5991 = vunpack.c.l.b16 %v5806
    %v5992 = vunpack.c.h.b16 %v5806
    %v5993 = vunpack.c.l.b16 %v5807
    %v5994 = vunpack.c.h.b16 %v5807
    %v5995 = vunpack.c.l.b16 %v5808
    %v5996 = vunpack.c.h.b16 %v5808
    %v5997 = vunpack.c.l.b16 %v5809
    %v5998 = vunpack.c.h.b16 %v5809
    %v5999 = vunpack.c.l.b16 %v5810
    %v6000 = vunpack.c.h.b16 %v5810
    %v6001 = vunpack.c.l.b16 %v5811
    %v6002 = vunpack.c.h.b16 %v5811
    %v6003 = vunpack.c.l.b16 %v5812
    %v6004 = vunpack.c.h.b16 %v5812
    %v6005 = vunpack.c.l.b16 %v5813
    %v6006 = vunpack.c.h.b16 %v5813
    %v6007 = vunpack.c.l.b16 %v5814
    %v6008 = vunpack.c.h.b16 %v5814
    %v6009 = vunpack.c.l.b16 %v5815
    %v6010 = vunpack.c.h.b16 %v5815
    %v6011 = vunpack.c.l.b16 %v5816
    %v6012 = vunpack.c.h.b16 %v5816
    %v6013 = vunpack.c.l.b16 %v5817
    %v6014 = vunpack.c.h.b16 %v5817
    %v6015 = vunpack.c.l.b16 %v5818
    %v6016 = vunpack.c.h.b16 %v5818
    %v6017 = vunpack.c.l.b16 %v5819
    %v6018 = vunpack.c.h.b16 %v5819
    %v6019 = vunpack.c.l.b16 %v5820
    %v6020 = vunpack.c.h.b16 %v5820
    %v6021 = vunpack.c.l.b16 %v5821
    %v6022 = vunpack.c.h.b16 %v5821
    %v6023 = vunpack.c.l.b16 %v5822
    %v6024 = vunpack.c.h.b16 %v5822
    %v6025 = vunpack.c.l.b16 %v5823
    %v6026 = vunpack.c.h.b16 %v5823
    %v6027 = vunpack.c.l.b16 %v5824
    %v6028 = vunpack.c.h.b16 %v5824
    %v6029 = vpack.c.b16 %v5903, %v5901
    %v6030 = vpack.c.b16 %v5904, %v5902
    %v6031 = vpack.c.b16 %v5907, %v5905
    %v6032 = vpack.c.b16 %v5908, %v5906
    %v6033 = vpack.c.b16 %v5911, %v5909
    %v6034 = vpack.c.b16 %v5912, %v5910
    %v6035 = vpack.c.b16 %v5915, %v5913
    %v6036 = vpack.c.b16 %v5916, %v5914
    %v6037 = vpack.c.b16 %v5919, %v5917
    %v6038 = vpack.c.b16 %v5920, %v5918
    %v6039 = vpack.c.b16 %v5923, %v5921
    %v6040 = vpack.c.b16 %v5924, %v5922
    %v6041 = vpack.c.b16 %v5927, %v5925
    %v6042 = vpack.c.b16 %v5928, %v5926
    %v6043 = vpack.c.b16 %v5931, %v5929
    %v6044 = vpack.c.b16 %v5932, %v5930
    %v6045 = vpack.c.b16 %v5935, %v5933
    %v6046 = vpack.c.b16 %v5936, %v5934
    %v6047 = vpack.c.b16 %v5939, %v5937
    %v6048 = vpack.c.b16 %v5940, %v5938
    %v6049 = vpack.c.b16 %v5943, %v5941
    %v6050 = vpack.c.b16 %v5944, %v5942
    %v6051 = vpack.c.b16 %v5947, %v5945
    %v6052 = vpack.c.b16 %v5948, %v5946
    %v6053 = vpack.c.b16 %v5951, %v5949
    %v6054 = vpack.c.b16 %v5952, %v5950
    %v6055 = vpack.c.b16 %v5955, %v5953
    %v6056 = vpack.c.b16 %v5956, %v5954
    %v6057 = vpack.c.b16 %v5959, %v5957
    %v6058 = vpack.c.b16 %v5960, %v5958
    %v6059 = vpack.c.b16 %v5963, %v5961
    %v6060 = vpack.c.b16 %v5964, %v5962
    %v6061 = vpack.c.b16 %v5967, %v5965
    %v6062 = vpack.c.b16 %v5968, %v5966
    %v6063 = vpack.c.b16 %v5971, %v5969
    %v6064 = vpack.c.b16 %v5972, %v5970
    %v6065 = vpack.c.b16 %v5975, %v5973
    %v6066 = vpack.c.b16 %v5976, %v5974
    %v6067 = vpack.c.b16 %v5979, %v5977
    %v6068 = vpack.c.b16 %v5980, %v5978
    %v6069 = vpack.c.b16 %v5983, %v5981
    %v6070 = vpack.c.b16 %v5984, %v5982
    %v6071 = vpack.c.b16 %v5987, %v5985
    %v6072 = vpack.c.b16 %v5988, %v5986
    %v6073 = vpack.c.b16 %v5991, %v5989
    %v6074 = vpack.c.b16 %v5992, %v5990
    %v6075 = vpack.c.b16 %v5995, %v5993
    %v6076 = vpack.c.b16 %v5996, %v5994
    %v6077 = vpack.c.b16 %v5999, %v5997
    %v6078 = vpack.c.b16 %v6000, %v5998
    %v6079 = vpack.c.b16 %v6003, %v6001
    %v6080 = vpack.c.b16 %v6004, %v6002
    %v6081 = vpack.c.b16 %v6007, %v6005
    %v6082 = vpack.c.b16 %v6008, %v6006
    %v6083 = vpack.c.b16 %v6011, %v6009
    %v6084 = vpack.c.b16 %v6012, %v6010
    %v6085 = vpack.c.b16 %v6015, %v6013
    %v6086 = vpack.c.b16 %v6016, %v6014
    %v6087 = vpack.c.b16 %v6019, %v6017
    %v6088 = vpack.c.b16 %v6020, %v6018
    %v6089 = vpack.c.b16 %v6023, %v6021
    %v6090 = vpack.c.b16 %v6024, %v6022
    %v6091 = vpack.c.b16 %v6027, %v6025
    %v6092 = vpack.c.b16 %v6028, %v6026
    %6157 = vmatprep.subr.bf16.mxu0 %v6044
    %6158 = vmatpush1.bf16.msra.mxu0 %v6043
    %6159 = vmatprep.subr.bf16.mxu0 %v6042
    %6160 = vmatpush1.bf16.msra.mxu0 %v6041
    %6161 = vmatprep.subr.bf16.mxu0 %v6040
    %6162 = vmatpush1.bf16.msra.mxu0 %v6039
    %6163 = vmatprep.subr.bf16.mxu0 %v6038
    %6164 = vmatpush1.bf16.msra.mxu0 %v6037
    %6165 = vmatprep.subr.bf16.mxu0 %v6036
    %6166 = vmatpush1.bf16.msra.mxu0 %v6035
    %6167 = vmatprep.subr.bf16.mxu0 %v6034
    %6168 = vmatpush1.bf16.msra.mxu0 %v6033
    %6169 = vmatprep.subr.bf16.mxu0 %v6032
    %6170 = vmatpush1.bf16.msra.mxu0 %v6031
    %6171 = vmatprep.subr.bf16.mxu0 %v6030
    %6172 = vmatpush1.bf16.msra.mxu0 %v6029
    %6173 = vmatprep.subr.bf16.mxu0 %v6060
    %6174 = vmatpush2.bf16.msra.mxu0 %v6059
    %6175 = vmatprep.subr.bf16.mxu0 %v6058
    %6176 = vmatpush2.bf16.msra.mxu0 %v6057
    %6177 = vmatprep.subr.bf16.mxu0 %v6056
    %6178 = vmatpush2.bf16.msra.mxu0 %v6055
    %6179 = vmatprep.subr.bf16.mxu0 %v6054
    %6180 = vmatpush2.bf16.msra.mxu0 %v6053
    %6181 = vmatprep.subr.bf16.mxu0 %v6052
    %6182 = vmatpush2.bf16.msra.mxu0 %v6051
    %6183 = vmatprep.subr.bf16.mxu0 %v6050
    %6184 = vmatpush2.bf16.msra.mxu0 %v6049
    %6185 = vmatprep.subr.bf16.mxu0 %v6048
    %6186 = vmatpush2.bf16.msra.mxu0 %v6047
    %6187 = vmatprep.subr.bf16.mxu0 %v6046
    %6188 = vmatpush2.bf16.msra.mxu0 %v6045
    %6189 = vmatprep.mubr.bf16.mxu0 %v5758
    %6190 = vmatmul.mubr.bf16.gmra.mxu0 %v5757
    %v6191 = vpop.f32.mrf.mxu0
    %v6192 = vadd.f32 %v5830, %v6191
    %v6193 = vpop.f32.mrf.mxu0
    %v6194 = vadd.f32 %v5834, %v6193
    %v6195 = vpop.f32.mrf.mxu0
    %v6196 = vpop.f32.mrf.mxu0
    %6197 = vdwg.mxu0
    %6198 = vmatprep.subr.bf16.mxu0 %v6076
    %6199 = vmatpush1.bf16.msra.mxu0 %v6075
    %6200 = vmatprep.subr.bf16.mxu0 %v6074
    %6201 = vmatpush1.bf16.msra.mxu0 %v6073
    %6202 = vmatprep.subr.bf16.mxu0 %v6072
    %6203 = vmatpush1.bf16.msra.mxu0 %v6071
    %6204 = vmatprep.subr.bf16.mxu0 %v6070
    %6205 = vmatpush1.bf16.msra.mxu0 %v6069
    %6206 = vmatprep.subr.bf16.mxu0 %v6068
    %6207 = vmatpush1.bf16.msra.mxu0 %v6067
    %6208 = vmatprep.subr.bf16.mxu0 %v6066
    %6209 = vmatpush1.bf16.msra.mxu0 %v6065
    %6210 = vmatprep.subr.bf16.mxu0 %v6064
    %6211 = vmatpush1.bf16.msra.mxu0 %v6063
    %6212 = vmatprep.subr.bf16.mxu0 %v6062
    %6213 = vmatpush1.bf16.msra.mxu0 %v6061
    %6214 = vmatprep.subr.bf16.mxu0 %v6092
    %6215 = vmatpush2.bf16.msra.mxu0 %v6091
    %6216 = vmatprep.subr.bf16.mxu0 %v6090
    %6217 = vmatpush2.bf16.msra.mxu0 %v6089
    %6218 = vmatprep.subr.bf16.mxu0 %v6088
    %6219 = vmatpush2.bf16.msra.mxu0 %v6087
    %6220 = vmatprep.subr.bf16.mxu0 %v6086
    %6221 = vmatpush2.bf16.msra.mxu0 %v6085
    %6222 = vmatprep.subr.bf16.mxu0 %v6084
    %6223 = vmatpush2.bf16.msra.mxu0 %v6083
    %6224 = vmatprep.subr.bf16.mxu0 %v6082
    %6225 = vmatpush2.bf16.msra.mxu0 %v6081
    %6226 = vmatprep.subr.bf16.mxu0 %v6080
    %6227 = vmatpush2.bf16.msra.mxu0 %v6079
    %6228 = vmatprep.subr.bf16.mxu0 %v6078
    %6229 = vmatpush2.bf16.msra.mxu0 %v6077
    %6230 = vmatprep.mubr.bf16.mxu0 %v5760
    %6231 = vmatmul.mubr.bf16.gmra.mxu0 %v5759
    %v6232 = vpop.f32.mrf.mxu0
    %v6233 = vadd.f32 %v6192, %v6232
    %v6234 = vpop.f32.mrf.mxu0
    %v6235 = vadd.f32 %v6194, %v6234
    %v6236 = vpop.f32.mrf.mxu0
    %v6237 = vpop.f32.mrf.mxu0
    %6238 = vdwg.mxu0
    %v6239 = vmax.f32 %v6233, 0.0
    %v6240 = vmax.f32 %v6235, 0.0
    %6241 = vst [vmem:[#allocation5] sm:$0xff] %v6239
    %6242 = vst [vmem:[#allocation5 + $0x8] sm:$0xff] %v6240
    // Predicated region
    $region58: #{tf_forward.1} parent=1 // pred_check
      _
    $region59: #{tf_forward.1} parent=1 // pred_check_branch
      %6244 = sbr.rel (0) target = $region61
    $region60: #{tf_forward.1} parent=1 // pred_region
      %s6246 = ssub.s32 256, 256
      %6247 = vsyncadd [#allocation4], %s6246
      %s6249 = sshll.u32 [#allocation5], 4
      %s6250 = int_to_ptr.vmem [resolvable:$true] %s6249
      %6252 = dma.vmem_to_hbm [thread:$0]  %s6250, 256, %s13, [#allocation4]
    $region61: #{tf_forward.1} parent=1 // pred_fallthru
      _
    // Predicated region
    $region62: #{tf_forward.1} parent=1 // pred_check
      _
    $region63: #{tf_forward.1} parent=1 // pred_check_branch
      %6254 = sbr.rel (0) target = $region65
    $region64: #{tf_forward.1} parent=1 // pred_region
      %6255 = dma.done [#allocation4], 256
    $region65: #{tf_forward.1} parent=1 // pred_fallthru
      _
    %6256 = vsyncpa [#allocation3], 1
    %6257 = vsyncpa [#allocation4], 1

</llo_original>
